<compile_context>
chip_gen: v7x
topology: tpu7x:2x2x1
jax: 0.10.0
libtpu: 0.0.40
codegen_flags: <defaults>
</compile_context>

<pallas_src>
import jax
import jax.numpy as jnp
from jax import lax
from jax.experimental import pallas as pl
from jax.experimental.pallas import tpu as pltpu

K = 3          # conv kernel size everywhere in this module
H0 = W0 = 16   # input spatial size used by the toy forward below


# ----------------------------------------------------------------------------
# Fused Pallas kernel: the whole 6-layer autoencoder in one pallas_call.
# Each layer = one lane-dense MXU GEMM (bf16 operands, f32 accumulation)
# + f32 bias + ReLU / Sigmoid.  Intermediates never leave the core.
# ----------------------------------------------------------------------------
def _fused_ae_kernel(x_ref,
                     t1_ref, b1_ref, t2_ref, b2_ref, t3_ref, b3_ref,
                     t4_ref, b4_ref, t5_ref, b5_ref, t6_ref, b6_ref,
                     o_ref):
    def dense(h, t_ref, b_ref):
        acc = jnp.dot(h.astype(jnp.bfloat16), t_ref[...],
                      preferred_element_type=jnp.float32)
        return acc + b_ref[...]                      # (bn, D) + (1, D), f32

    h = x_ref[...]                                   # (bn, 16*16*1) f32
    h = jnp.maximum(dense(h, t1_ref, b1_ref), 0.0)   # enc1 -> (bn, 8*8*16)
    h = jnp.maximum(dense(h, t2_ref, b2_ref), 0.0)   # enc2 -> (bn, 4*4*32)
    h = jnp.maximum(dense(h, t3_ref, b3_ref), 0.0)   # enc3 -> (bn, 2*2*64)
    h = jnp.maximum(dense(h, t4_ref, b4_ref), 0.0)   # dec1 -> (bn, 4*4*32)
    h = jnp.maximum(dense(h, t5_ref, b5_ref), 0.0)   # dec2 -> (bn, 8*8*16)
    h = jax.nn.sigmoid(dense(h, t6_ref, b6_ref))     # dec3 -> (bn, 16*16*1)
    o_ref[...] = h.astype(o_ref.dtype)


# ----------------------------------------------------------------------------
# One-time weight folding: Conv2d / ConvTranspose2d -> dense GEMM matrices
# acting on NHWC-flattened activations (h, w, c order).  Runs outside the
# per-call hot path (weight repacking, like any inference weight prep).
# ----------------------------------------------------------------------------
def _conv_gemm(w, h_in, w_in):
    """Conv2d(stride=2, padding=1); w: (Cout, Cin, 3, 3) PyTorch layout."""
    c_out, c_in = int(w.shape[0]), int(w.shape[1])
    basis = jnp.eye(h_in * w_in * c_in, dtype=jnp.float32).reshape(-1, h_in, w_in, c_in)
    rhs = jnp.transpose(w, (2, 3, 1, 0)).astype(jnp.float32)               # HWIO
    y = lax.conv_general_dilated(basis, rhs, window_strides=(2, 2),
                                 padding=[(1, 1), (1, 1)],
                                 dimension_numbers=("NHWC", "HWIO", "NHWC"),
                                 precision=lax.Precision.HIGHEST)
    h_out, w_out = int(y.shape[1]), int(y.shape[2])
    return y.reshape(h_in * w_in * c_in, h_out * w_out * c_out), h_out, w_out


def _convt_gemm(w, h_in, w_in):
    """ConvTranspose2d(stride=2, padding=1, output_padding=1); w: (Cin, Cout, 3, 3).
    Equivalent direct conv: lhs dilated by 2, padding (k-1-p, k-1-p+op) = (1, 2),
    spatially-flipped kernel with in/out channels swapped."""
    c_in, c_out = int(w.shape[0]), int(w.shape[1])
    basis = jnp.eye(h_in * w_in * c_in, dtype=jnp.float32).reshape(-1, h_in, w_in, c_in)
    rhs = jnp.transpose(w[:, :, ::-1, ::-1], (2, 3, 0, 1)).astype(jnp.float32)  # HWIO
    y = lax.conv_general_dilated(basis, rhs, window_strides=(1, 1),
                                 padding=[(1, 2), (1, 2)], lhs_dilation=(2, 2),
                                 dimension_numbers=("NHWC", "HWIO", "NHWC"),
                                 precision=lax.Precision.HIGHEST)
    h_out, w_out = int(y.shape[1]), int(y.shape[2])
    return y.reshape(h_in * w_in * c_in, h_out * w_out * c_out), h_out, w_out


def prepare_params(params):
    """Fold every layer into (bf16 GEMM matrix, f32 spatially-tiled bias row)."""
    ts, bs = [], []
    h, w = H0, W0
    spec = [("enc1", _conv_gemm), ("enc2", _conv_gemm), ("enc3", _conv_gemm),
            ("dec1", _convt_gemm), ("dec2", _convt_gemm), ("dec3", _convt_gemm)]
    for name, fold in spec:
        t, h, w = fold(params[f"{name}_w"], h, w)
        b = params[f"{name}_b"]
        ts.append(t.astype(jnp.bfloat16))                       # bf16 MXU operand
        # Activation layout is (h, w, c)-flattened -> bias repeats per position.
        bs.append(jnp.tile(b, h * w).reshape(1, -1).astype(jnp.float32))
    return {"ts": ts, "bs": bs}


# ----------------------------------------------------------------------------
# Parameters (deterministic synthetic init, PyTorch layouts)
# ----------------------------------------------------------------------------
def init_params(key):
    def conv_w(k, cout, cin):
        fan_in = cin * K * K
        return jax.random.normal(k, (cout, cin, K, K), jnp.float32) * (1.0 / fan_in) ** 0.5

    def convt_w(k, cin, cout):
        fan_in = cin * K * K
        return jax.random.normal(k, (cin, cout, K, K), jnp.float32) * (1.0 / fan_in) ** 0.5

    ks = jax.random.split(key, 12)
    return {
        "enc1_w": conv_w(ks[0], 16, 1),   "enc1_b": 0.01 * jax.random.normal(ks[1], (16,), jnp.float32),
        "enc2_w": conv_w(ks[2], 32, 16),  "enc2_b": 0.01 * jax.random.normal(ks[3], (32,), jnp.float32),
        "enc3_w": conv_w(ks[4], 64, 32),  "enc3_b": 0.01 * jax.random.normal(ks[5], (64,), jnp.float32),
        "dec1_w": convt_w(ks[6], 64, 32), "dec1_b": 0.01 * jax.random.normal(ks[7], (32,), jnp.float32),
        "dec2_w": convt_w(ks[8], 32, 16), "dec2_b": 0.01 * jax.random.normal(ks[9], (16,), jnp.float32),
        "dec3_w": convt_w(ks[10], 16, 1), "dec3_b": 0.01 * jax.random.normal(ks[11], (1,), jnp.float32),
    }


# ----------------------------------------------------------------------------
# Forward: NCHW in -> NCHW out (PyTorch semantics).  Per-call work is just
# two reshapes + one fused pallas_call.
# ----------------------------------------------------------------------------
@jax.jit
def autoencoder_forward(prepared, x_nchw):
    ts, bs = prepared["ts"], prepared["bs"]
    N = x_nchw.shape[0]
    d_in = ts[0].shape[0]        # 16*16*1
    d_out = ts[-1].shape[1]      # 16*16*1
    # Cin == Cout == 1 at the boundary, so NCHW<->(N, H*W*C) is a pure reshape.
    x = x_nchw.reshape(N, d_in).astype(jnp.float32)

    # Batch tiling: one step at N=2; shards across TensorCores when N grows.
    bn = N if N <= 128 else 128
    assert N % bn == 0, "batch must be a multiple of the 128-row tile"
    grid = (N // bn,)

    in_specs = [pl.BlockSpec((bn, d_in), lambda i: (i, 0))]
    args = [x]
    for t, b in zip(ts, bs):
        in_specs.append(pl.BlockSpec(t.shape, lambda i: (0, 0)))   # weights stay resident
        in_specs.append(pl.BlockSpec(b.shape, lambda i: (0, 0)))
        args += [t, b]

    out = pl.pallas_call(
        _fused_ae_kernel,
        out_shape=jax.ShapeDtypeStruct((N, d_out), jnp.float32),
        grid=grid,
        in_specs=in_specs,
        out_specs=pl.BlockSpec((bn, d_out), lambda i: (i, 0)),
        compiler_params=pltpu.CompilerParams(
            dimension_semantics=("parallel",),
            vmem_limit_bytes=32 * 1024 * 1024,
        ),
    )(*args)
    return out.reshape(N, 1, H0, W0)


if __name__ == "__main__":
    key = jax.random.PRNGKey(0)
    pkey, xkey = jax.random.split(key)
    params = init_params(pkey)
    prepared = prepare_params(params)            # one-time weight folding
    x = jax.random.normal(xkey, (2, 1, 16, 16), jnp.float32)   # NCHW, 1 channel

    out = autoencoder_forward(prepared, x)
    out = jax.block_until_ready(out)

    assert out.shape == (2, 1, 16, 16), out.shape
    assert bool(jnp.all(jnp.isfinite(out)))
    assert bool(jnp.all((out >= 0.0) & (out <= 1.0)))  # sigmoid output range
    print("KERNEL_OK")
</pallas_src>

<mosaic_0001>
module attributes {stable_mosaic.version = 11 : i64} {
  func.func @_fused_ae_kernel(%arg0: i32, %arg1: memref<2x256xf32, #tpu.memory_space<vmem>>, %arg2: memref<256x1024xbf16, #tpu.memory_space<vmem>>, %arg3: memref<1x1024xf32, #tpu.memory_space<vmem>>, %arg4: memref<1024x512xbf16, #tpu.memory_space<vmem>>, %arg5: memref<1x512xf32, #tpu.memory_space<vmem>>, %arg6: memref<512x256xbf16, #tpu.memory_space<vmem>>, %arg7: memref<1x256xf32, #tpu.memory_space<vmem>>, %arg8: memref<256x512xbf16, #tpu.memory_space<vmem>>, %arg9: memref<1x512xf32, #tpu.memory_space<vmem>>, %arg10: memref<512x1024xbf16, #tpu.memory_space<vmem>>, %arg11: memref<1x1024xf32, #tpu.memory_space<vmem>>, %arg12: memref<1024x256xbf16, #tpu.memory_space<vmem>>, %arg13: memref<1x256xf32, #tpu.memory_space<vmem>>, %arg14: memref<2x256xf32, #tpu.memory_space<vmem>>) attributes {dimension_semantics = [#tpu.dimension_semantics<parallel>], iteration_bounds = array<i64: 1>, scalar_prefetch = 0 : i64, scratch_operands = 0 : i64, tpu.core_type = #tpu.core_type<tc>, window_params = [{transform_indices = @transform_0, window_bounds = array<i64: 2, 256>}, {pipeline_mode = #tpu.pipeline_mode<synchronous>, transform_indices = @transform_1, window_bounds = array<i64: 256, 1024>}, {pipeline_mode = #tpu.pipeline_mode<synchronous>, transform_indices = @transform_2, window_bounds = array<i64: 1, 1024>}, {pipeline_mode = #tpu.pipeline_mode<synchronous>, transform_indices = @transform_3, window_bounds = array<i64: 1024, 512>}, {pipeline_mode = #tpu.pipeline_mode<synchronous>, transform_indices = @transform_4, window_bounds = array<i64: 1, 512>}, {pipeline_mode = #tpu.pipeline_mode<synchronous>, transform_indices = @transform_5, window_bounds = array<i64: 512, 256>}, {pipeline_mode = #tpu.pipeline_mode<synchronous>, transform_indices = @transform_6, window_bounds = array<i64: 1, 256>}, {pipeline_mode = #tpu.pipeline_mode<synchronous>, transform_indices = @transform_7, window_bounds = array<i64: 256, 512>}, {pipeline_mode = #tpu.pipeline_mode<synchronous>, transform_indices = @transform_8, window_bounds = array<i64: 1, 512>}, {pipeline_mode = #tpu.pipeline_mode<synchronous>, transform_indices = @transform_9, window_bounds = array<i64: 512, 1024>}, {pipeline_mode = #tpu.pipeline_mode<synchronous>, transform_indices = @transform_10, window_bounds = array<i64: 1, 1024>}, {pipeline_mode = #tpu.pipeline_mode<synchronous>, transform_indices = @transform_11, window_bounds = array<i64: 1024, 256>}, {pipeline_mode = #tpu.pipeline_mode<synchronous>, transform_indices = @transform_12, window_bounds = array<i64: 1, 256>}, {transform_indices = @transform_13, window_bounds = array<i64: 2, 256>}]} {
    %c0 = arith.constant 0 : index
    %c0_0 = arith.constant 0 : index
    %0 = vector.load %arg1[%c0, %c0_0] : memref<2x256xf32, #tpu.memory_space<vmem>>, vector<2x256xf32>
    %1 = arith.truncf %0 : vector<2x256xf32> to vector<2x256xbf16>
    %c0_1 = arith.constant 0 : index
    %c0_2 = arith.constant 0 : index
    %2 = vector.load %arg2[%c0_1, %c0_2] : memref<256x1024xbf16, #tpu.memory_space<vmem>>, vector<256x1024xbf16>
    %cst = arith.constant dense<0.000000e+00> : vector<2x1024xf32>
    %3 = tpu.matmul %1, %2, %cst {dimension_numbers = #tpu.dot_dimension_numbers<[1], [0], [0], [1], [0, 0, 1, 1], [], []>} : vector<2x256xbf16>, vector<256x1024xbf16>, vector<2x1024xf32> -> vector<2x1024xf32>
    %c0_3 = arith.constant 0 : index
    %c0_4 = arith.constant 0 : index
    %4 = vector.load %arg3[%c0_3, %c0_4] : memref<1x1024xf32, #tpu.memory_space<vmem>>, vector<1x1024xf32>
    %5 = vector.broadcast %4 : vector<1x1024xf32> to vector<2x1024xf32>
    %6 = arith.addf %3, %5 : vector<2x1024xf32>
    %cst_5 = arith.constant 0.000000e+00 : f32
    %7 = vector.broadcast %cst_5 : f32 to vector<2x1024xf32>
    %8 = arith.maximumf %6, %7 : vector<2x1024xf32>
    %9 = arith.truncf %8 : vector<2x1024xf32> to vector<2x1024xbf16>
    %c0_6 = arith.constant 0 : index
    %c0_7 = arith.constant 0 : index
    %10 = vector.load %arg4[%c0_6, %c0_7] : memref<1024x512xbf16, #tpu.memory_space<vmem>>, vector<1024x512xbf16>
    %cst_8 = arith.constant dense<0.000000e+00> : vector<2x512xf32>
    %11 = tpu.matmul %9, %10, %cst_8 {dimension_numbers = #tpu.dot_dimension_numbers<[1], [0], [0], [1], [0, 0, 1, 1], [], []>} : vector<2x1024xbf16>, vector<1024x512xbf16>, vector<2x512xf32> -> vector<2x512xf32>
    %c0_9 = arith.constant 0 : index
    %c0_10 = arith.constant 0 : index
    %12 = vector.load %arg5[%c0_9, %c0_10] : memref<1x512xf32, #tpu.memory_space<vmem>>, vector<1x512xf32>
    %13 = vector.broadcast %12 : vector<1x512xf32> to vector<2x512xf32>
    %14 = arith.addf %11, %13 : vector<2x512xf32>
    %cst_11 = arith.constant 0.000000e+00 : f32
    %15 = vector.broadcast %cst_11 : f32 to vector<2x512xf32>
    %16 = arith.maximumf %14, %15 : vector<2x512xf32>
    %17 = arith.truncf %16 : vector<2x512xf32> to vector<2x512xbf16>
    %c0_12 = arith.constant 0 : index
    %c0_13 = arith.constant 0 : index
    %18 = vector.load %arg6[%c0_12, %c0_13] : memref<512x256xbf16, #tpu.memory_space<vmem>>, vector<512x256xbf16>
    %cst_14 = arith.constant dense<0.000000e+00> : vector<2x256xf32>
    %19 = tpu.matmul %17, %18, %cst_14 {dimension_numbers = #tpu.dot_dimension_numbers<[1], [0], [0], [1], [0, 0, 1, 1], [], []>} : vector<2x512xbf16>, vector<512x256xbf16>, vector<2x256xf32> -> vector<2x256xf32>
    %c0_15 = arith.constant 0 : index
    %c0_16 = arith.constant 0 : index
    %20 = vector.load %arg7[%c0_15, %c0_16] : memref<1x256xf32, #tpu.memory_space<vmem>>, vector<1x256xf32>
    %21 = vector.broadcast %20 : vector<1x256xf32> to vector<2x256xf32>
    %22 = arith.addf %19, %21 : vector<2x256xf32>
    %cst_17 = arith.constant 0.000000e+00 : f32
    %23 = vector.broadcast %cst_17 : f32 to vector<2x256xf32>
    %24 = arith.maximumf %22, %23 : vector<2x256xf32>
    %25 = arith.truncf %24 : vector<2x256xf32> to vector<2x256xbf16>
    %c0_18 = arith.constant 0 : index
    %c0_19 = arith.constant 0 : index
    %26 = vector.load %arg8[%c0_18, %c0_19] : memref<256x512xbf16, #tpu.memory_space<vmem>>, vector<256x512xbf16>
    %cst_20 = arith.constant dense<0.000000e+00> : vector<2x512xf32>
    %27 = tpu.matmul %25, %26, %cst_20 {dimension_numbers = #tpu.dot_dimension_numbers<[1], [0], [0], [1], [0, 0, 1, 1], [], []>} : vector<2x256xbf16>, vector<256x512xbf16>, vector<2x512xf32> -> vector<2x512xf32>
    %c0_21 = arith.constant 0 : index
    %c0_22 = arith.constant 0 : index
    %28 = vector.load %arg9[%c0_21, %c0_22] : memref<1x512xf32, #tpu.memory_space<vmem>>, vector<1x512xf32>
    %29 = vector.broadcast %28 : vector<1x512xf32> to vector<2x512xf32>
    %30 = arith.addf %27, %29 : vector<2x512xf32>
    %cst_23 = arith.constant 0.000000e+00 : f32
    %31 = vector.broadcast %cst_23 : f32 to vector<2x512xf32>
    %32 = arith.maximumf %30, %31 : vector<2x512xf32>
    %33 = arith.truncf %32 : vector<2x512xf32> to vector<2x512xbf16>
    %c0_24 = arith.constant 0 : index
    %c0_25 = arith.constant 0 : index
    %34 = vector.load %arg10[%c0_24, %c0_25] : memref<512x1024xbf16, #tpu.memory_space<vmem>>, vector<512x1024xbf16>
    %cst_26 = arith.constant dense<0.000000e+00> : vector<2x1024xf32>
    %35 = tpu.matmul %33, %34, %cst_26 {dimension_numbers = #tpu.dot_dimension_numbers<[1], [0], [0], [1], [0, 0, 1, 1], [], []>} : vector<2x512xbf16>, vector<512x1024xbf16>, vector<2x1024xf32> -> vector<2x1024xf32>
    %c0_27 = arith.constant 0 : index
    %c0_28 = arith.constant 0 : index
    %36 = vector.load %arg11[%c0_27, %c0_28] : memref<1x1024xf32, #tpu.memory_space<vmem>>, vector<1x1024xf32>
    %37 = vector.broadcast %36 : vector<1x1024xf32> to vector<2x1024xf32>
    %38 = arith.addf %35, %37 : vector<2x1024xf32>
    %cst_29 = arith.constant 0.000000e+00 : f32
    %39 = vector.broadcast %cst_29 : f32 to vector<2x1024xf32>
    %40 = arith.maximumf %38, %39 : vector<2x1024xf32>
    %41 = arith.truncf %40 : vector<2x1024xf32> to vector<2x1024xbf16>
    %c0_30 = arith.constant 0 : index
    %c0_31 = arith.constant 0 : index
    %42 = vector.load %arg12[%c0_30, %c0_31] : memref<1024x256xbf16, #tpu.memory_space<vmem>>, vector<1024x256xbf16>
    %cst_32 = arith.constant dense<0.000000e+00> : vector<2x256xf32>
    %43 = tpu.matmul %41, %42, %cst_32 {dimension_numbers = #tpu.dot_dimension_numbers<[1], [0], [0], [1], [0, 0, 1, 1], [], []>} : vector<2x1024xbf16>, vector<1024x256xbf16>, vector<2x256xf32> -> vector<2x256xf32>
    %c0_33 = arith.constant 0 : index
    %c0_34 = arith.constant 0 : index
    %44 = vector.load %arg13[%c0_33, %c0_34] : memref<1x256xf32, #tpu.memory_space<vmem>>, vector<1x256xf32>
    %45 = vector.broadcast %44 : vector<1x256xf32> to vector<2x256xf32>
    %46 = arith.addf %43, %45 : vector<2x256xf32>
    %47 = arith.negf %46 : vector<2x256xf32>
    %48 = math.exp %47 : vector<2x256xf32>
    %cst_35 = arith.constant 1.000000e+00 : f32
    %49 = vector.broadcast %cst_35 : f32 to vector<2x256xf32>
    %50 = arith.addf %49, %48 : vector<2x256xf32>
    %51 = arith.divf %49, %50 : vector<2x256xf32>
    %c0_36 = arith.constant 0 : index
    %c0_37 = arith.constant 0 : index
    %52 = vector.load %arg14[%c0_36, %c0_37] : memref<2x256xf32, #tpu.memory_space<vmem>>, vector<2x256xf32>
    tpu.vector_store %arg14[%c0_36, %c0_37], %51 {strides = array<i32>} : memref<2x256xf32, #tpu.memory_space<vmem>>, vector<2x256xf32>,
    return
  }
  func.func @transform_0(%arg0: i32) -> (i32, i32) {
    %c0_i32 = arith.constant 0 : i32
    %c0_i32_0 = arith.constant 0 : i32
    return %arg0, %c0_i32 : i32, i32
  }
  func.func @transform_1(%arg0: i32) -> (i32, i32) {
    %c0_i32 = arith.constant 0 : i32
    %c0_i32_0 = arith.constant 0 : i32
    %c0_i32_1 = arith.constant 0 : i32
    return %c0_i32, %c0_i32_0 : i32, i32
  }
  func.func @transform_2(%arg0: i32) -> (i32, i32) {
    %c0_i32 = arith.constant 0 : i32
    %c0_i32_0 = arith.constant 0 : i32
    %c0_i32_1 = arith.constant 0 : i32
    return %c0_i32, %c0_i32_0 : i32, i32
  }
  func.func @transform_3(%arg0: i32) -> (i32, i32) {
    %c0_i32 = arith.constant 0 : i32
    %c0_i32_0 = arith.constant 0 : i32
    %c0_i32_1 = arith.constant 0 : i32
    return %c0_i32, %c0_i32_0 : i32, i32
  }
  func.func @transform_4(%arg0: i32) -> (i32, i32) {
    %c0_i32 = arith.constant 0 : i32
    %c0_i32_0 = arith.constant 0 : i32
    %c0_i32_1 = arith.constant 0 : i32
    return %c0_i32, %c0_i32_0 : i32, i32
  }
  func.func @transform_5(%arg0: i32) -> (i32, i32) {
    %c0_i32 = arith.constant 0 : i32
    %c0_i32_0 = arith.constant 0 : i32
    %c0_i32_1 = arith.constant 0 : i32
    return %c0_i32, %c0_i32_0 : i32, i32
  }
  func.func @transform_6(%arg0: i32) -> (i32, i32) {
    %c0_i32 = arith.constant 0 : i32
    %c0_i32_0 = arith.constant 0 : i32
    %c0_i32_1 = arith.constant 0 : i32
    return %c0_i32, %c0_i32_0 : i32, i32
  }
  func.func @transform_7(%arg0: i32) -> (i32, i32) {
    %c0_i32 = arith.constant 0 : i32
    %c0_i32_0 = arith.constant 0 : i32
    %c0_i32_1 = arith.constant 0 : i32
    return %c0_i32, %c0_i32_0 : i32, i32
  }
  func.func @transform_8(%arg0: i32) -> (i32, i32) {
    %c0_i32 = arith.constant 0 : i32
    %c0_i32_0 = arith.constant 0 : i32
    %c0_i32_1 = arith.constant 0 : i32
    return %c0_i32, %c0_i32_0 : i32, i32
  }
  func.func @transform_9(%arg0: i32) -> (i32, i32) {
    %c0_i32 = arith.constant 0 : i32
    %c0_i32_0 = arith.constant 0 : i32
    %c0_i32_1 = arith.constant 0 : i32
    return %c0_i32, %c0_i32_0 : i32, i32
  }
  func.func @transform_10(%arg0: i32) -> (i32, i32) {
    %c0_i32 = arith.constant 0 : i32
    %c0_i32_0 = arith.constant 0 : i32
    %c0_i32_1 = arith.constant 0 : i32
    return %c0_i32, %c0_i32_0 : i32, i32
  }
  func.func @transform_11(%arg0: i32) -> (i32, i32) {
    %c0_i32 = arith.constant 0 : i32
    %c0_i32_0 = arith.constant 0 : i32
    %c0_i32_1 = arith.constant 0 : i32
    return %c0_i32, %c0_i32_0 : i32, i32
  }
  func.func @transform_12(%arg0: i32) -> (i32, i32) {
    %c0_i32 = arith.constant 0 : i32
    %c0_i32_0 = arith.constant 0 : i32
    %c0_i32_1 = arith.constant 0 : i32
    return %c0_i32, %c0_i32_0 : i32, i32
  }
  func.func @transform_13(%arg0: i32) -> (i32, i32) {
    %c0_i32 = arith.constant 0 : i32
    %c0_i32_0 = arith.constant 0 : i32
    return %arg0, %c0_i32 : i32, i32
  }
}

</mosaic_0001>

<llo_original>
// kernel: autoencoder_forward.1
$region0: #{autoencoder_forward.1}
  #allocation0 [shape = 'u32[]', space=smem, size = 0x4, offset = 0x4, fixed_abs, tag = 'smem constant byte address 0x4 - core index']
  #allocation1 [shape = 'u32[144,128]{1,0:T(1,128)}', space=vmem, size = 0x12000, scoped, tag = 'internal scratch']
  %s0 = inlined_call_operand.vmem [shape: f32[2,256], index: 0, kind: input, shape index: {}]
  %s1 = inlined_call_operand.hbm [shape: bf16[256,1024], index: 1, kind: input, shape index: {}]
  %s2 = inlined_call_operand.vmem [shape: f32[1,1024], index: 2, kind: input, shape index: {}]
  %s3 = inlined_call_operand.hbm [shape: bf16[1024,512], index: 3, kind: input, shape index: {}]
  %s4 = inlined_call_operand.vmem [shape: f32[1,512], index: 4, kind: input, shape index: {}]
  %s5 = inlined_call_operand.hbm [shape: bf16[512,256], index: 5, kind: input, shape index: {}]
  %s6 = inlined_call_operand.vmem [shape: f32[1,256], index: 6, kind: input, shape index: {}]
  %s7 = inlined_call_operand.hbm [shape: bf16[256,512], index: 7, kind: input, shape index: {}]
  %s8 = inlined_call_operand.vmem [shape: f32[1,512], index: 8, kind: input, shape index: {}]
  %s9 = inlined_call_operand.hbm [shape: bf16[512,1024], index: 9, kind: input, shape index: {}]
  %s10 = inlined_call_operand.vmem [shape: f32[1,1024], index: 10, kind: input, shape index: {}]
  %s11 = inlined_call_operand.hbm [shape: bf16[1024,256], index: 11, kind: input, shape index: {}]
  %s12 = inlined_call_operand.vmem [shape: f32[1,256], index: 12, kind: input, shape index: {}]
  %s13 = inlined_call_operand.vmem [shape: f32[2,256], index: 13, kind: output, shape index: {}]
  %s14 = sld [smem:[#allocation0]]
  $region86: #{autoencoder_forward.1} parent=0
    _
  %s16 = ssub.s32 1, %s14
  %s17 = scalar_select 0, %s16, %s14
  $region1: #{autoencoder_forward.1} parent=0
    #allocation2 [shape = 'u8[524288]{0}', space=vmem, size = 0x80000, scoped, tag = 'input window, operand 1, single buffered']
    #allocation3 [shape = 's32[1]{0}', space=sflag, size = 0x4, scoped, tag = 'scoped memory for autoencoder_forward.1']
    #allocation4 [shape = 'u8[1048576]{0}', space=vmem, size = 0x100000, scoped, tag = 'input window, operand 3, single buffered']
    #allocation5 [shape = 's32[1]{0}', space=sflag, size = 0x4, scoped, tag = 'scoped memory for autoencoder_forward.1']
    #allocation6 [shape = 'u8[262144]{0}', space=vmem, size = 0x40000, scoped, tag = 'input window, operand 5, single buffered']
    #allocation7 [shape = 'u8[262144]{0}', space=vmem, size = 0x40000, scoped, tag = 'input window, operand 7, single buffered']
    #allocation8 [shape = 's32[1]{0}', space=sflag, size = 0x4, scoped, tag = 'scoped memory for autoencoder_forward.1']
    #allocation9 [shape = 'u8[1048576]{0}', space=vmem, size = 0x100000, scoped, tag = 'input window, operand 9, single buffered']
    #allocation10 [shape = 'u8[524288]{0}', space=vmem, size = 0x80000, scoped, tag = 'input window, operand 11, single buffered']
    #allocation11 [shape = 's32[1]{0}', space=sflag, size = 0x4, scoped, tag = 'scoped memory for autoencoder_forward.1']
    %18 = vsyncpa [#allocation3], 0
    %19 = vsyncpa [#allocation5], 0
    %20 = vsyncpa [#allocation8], 0
    %21 = vsyncpa [#allocation11], 0
    // Predicated region
    $region2: #{autoencoder_forward.1} parent=1 // pred_check
      _
    $region3: #{autoencoder_forward.1} parent=1 // pred_check_branch
      %23 = sbr.rel (0) target = $region5
    $region4: #{autoencoder_forward.1} parent=1 // pred_region
      _
    $region5: #{autoencoder_forward.1} parent=1 // pred_fallthru
      _
    // Predicated region
    $region6: #{autoencoder_forward.1} parent=1 // pred_check
      _
    $region7: #{autoencoder_forward.1} parent=1 // pred_check_branch
      %25 = sbr.rel (0) target = $region9
    $region8: #{autoencoder_forward.1} parent=1 // pred_region
      %s27 = ssub.s32 16384, 16384
      %28 = vsyncadd [#allocation3], %s27
      %s29 = sshll.u32 [#allocation2], 4
      %s30 = int_to_ptr.vmem [resolvable:$true] %s29
      %35 = dma.hbm_to_vmem [thread:$0]  %s1, 16384, %s30, [#allocation3], 512, 512, 32
    $region9: #{autoencoder_forward.1} parent=1 // pred_fallthru
      _
    // Predicated region
    $region10: #{autoencoder_forward.1} parent=1 // pred_check
      _
    $region11: #{autoencoder_forward.1} parent=1 // pred_check_branch
      %37 = sbr.rel (0) target = $region13
    $region12: #{autoencoder_forward.1} parent=1 // pred_region
      _
    $region13: #{autoencoder_forward.1} parent=1 // pred_fallthru
      _
    // Predicated region
    $region14: #{autoencoder_forward.1} parent=1 // pred_check
      _
    $region15: #{autoencoder_forward.1} parent=1 // pred_check_branch
      %39 = sbr.rel (0) target = $region17
    $region16: #{autoencoder_forward.1} parent=1 // pred_region
      %s41 = ssub.s32 32768, 32768
      %42 = vsyncadd [#allocation5], %s41
      %s43 = sshll.u32 [#allocation4], 4
      %s44 = int_to_ptr.vmem [resolvable:$true] %s43
      %49 = dma.hbm_to_vmem [thread:$0]  %s3, 32768, %s44, [#allocation5], 256, 256, 16
    $region17: #{autoencoder_forward.1} parent=1 // pred_fallthru
      _
    // Predicated region
    $region18: #{autoencoder_forward.1} parent=1 // pred_check
      _
    $region19: #{autoencoder_forward.1} parent=1 // pred_check_branch
      %51 = sbr.rel (0) target = $region21
    $region20: #{autoencoder_forward.1} parent=1 // pred_region
      _
    $region21: #{autoencoder_forward.1} parent=1 // pred_fallthru
      _
    // Predicated region
    $region22: #{autoencoder_forward.1} parent=1 // pred_check
      _
    $region23: #{autoencoder_forward.1} parent=1 // pred_check_branch
      %53 = sbr.rel (0) target = $region25
    $region24: #{autoencoder_forward.1} parent=1 // pred_region
      %s55 = ssub.s32 8192, 8192
      %56 = vsyncadd [#allocation5], %s55
      %s57 = sshll.u32 [#allocation6], 4
      %s58 = int_to_ptr.vmem [resolvable:$true] %s57
      %63 = dma.hbm_to_vmem [thread:$0]  %s5, 8192, %s58, [#allocation5], 128, 128, 8
    $region25: #{autoencoder_forward.1} parent=1 // pred_fallthru
      _
    // Predicated region
    $region26: #{autoencoder_forward.1} parent=1 // pred_check
      _
    $region27: #{autoencoder_forward.1} parent=1 // pred_check_branch
      %65 = sbr.rel (0) target = $region29
    $region28: #{autoencoder_forward.1} parent=1 // pred_region
      _
    $region29: #{autoencoder_forward.1} parent=1 // pred_fallthru
      _
    // Predicated region
    $region30: #{autoencoder_forward.1} parent=1 // pred_check
      _
    $region31: #{autoencoder_forward.1} parent=1 // pred_check_branch
      %67 = sbr.rel (0) target = $region33
    $region32: #{autoencoder_forward.1} parent=1 // pred_region
      %s69 = ssub.s32 8192, 8192
      %70 = vsyncadd [#allocation8], %s69
      %s71 = sshll.u32 [#allocation7], 4
      %s72 = int_to_ptr.vmem [resolvable:$true] %s71
      %77 = dma.hbm_to_vmem [thread:$0]  %s7, 8192, %s72, [#allocation8], 256, 256, 16
    $region33: #{autoencoder_forward.1} parent=1 // pred_fallthru
      _
    // Predicated region
    $region34: #{autoencoder_forward.1} parent=1 // pred_check
      _
    $region35: #{autoencoder_forward.1} parent=1 // pred_check_branch
      %79 = sbr.rel (0) target = $region37
    $region36: #{autoencoder_forward.1} parent=1 // pred_region
      _
    $region37: #{autoencoder_forward.1} parent=1 // pred_fallthru
      _
    // Predicated region
    $region38: #{autoencoder_forward.1} parent=1 // pred_check
      _
    $region39: #{autoencoder_forward.1} parent=1 // pred_check_branch
      %81 = sbr.rel (0) target = $region41
    $region40: #{autoencoder_forward.1} parent=1 // pred_region
      %s83 = ssub.s32 32768, 32768
      %84 = vsyncadd [#allocation8], %s83
      %s85 = sshll.u32 [#allocation9], 4
      %s86 = int_to_ptr.vmem [resolvable:$true] %s85
      %91 = dma.hbm_to_vmem [thread:$0]  %s9, 32768, %s86, [#allocation8], 512, 512, 32
    $region41: #{autoencoder_forward.1} parent=1 // pred_fallthru
      _
    // Predicated region
    $region42: #{autoencoder_forward.1} parent=1 // pred_check
      _
    $region43: #{autoencoder_forward.1} parent=1 // pred_check_branch
      %93 = sbr.rel (0) target = $region45
    $region44: #{autoencoder_forward.1} parent=1 // pred_region
      _
    $region45: #{autoencoder_forward.1} parent=1 // pred_fallthru
      _
    // Predicated region
    $region46: #{autoencoder_forward.1} parent=1 // pred_check
      _
    $region47: #{autoencoder_forward.1} parent=1 // pred_check_branch
      %95 = sbr.rel (0) target = $region49
    $region48: #{autoencoder_forward.1} parent=1 // pred_region
      %s97 = ssub.s32 16384, 16384
      %98 = vsyncadd [#allocation11], %s97
      %s99 = sshll.u32 [#allocation10], 4
      %s100 = int_to_ptr.vmem [resolvable:$true] %s99
      %105 = dma.hbm_to_vmem [thread:$0]  %s11, 16384, %s100, [#allocation11], 128, 128, 8
    $region49: #{autoencoder_forward.1} parent=1 // pred_fallthru
      _
    // Predicated region
    $region50: #{autoencoder_forward.1} parent=1 // pred_check
      _
    $region51: #{autoencoder_forward.1} parent=1 // pred_check_branch
      %107 = sbr.rel (0) target = $region53
    $region52: #{autoencoder_forward.1} parent=1 // pred_region
      _
    $region53: #{autoencoder_forward.1} parent=1 // pred_fallthru
      _
    // Predicated region
    $region54: #{autoencoder_forward.1} parent=1 // pred_check
      _
    $region55: #{autoencoder_forward.1} parent=1 // pred_check_branch
      %109 = sbr.rel (0) target = $region57
    $region56: #{autoencoder_forward.1} parent=1 // pred_region
      %110 = dma.done [#allocation3], 16384
    $region57: #{autoencoder_forward.1} parent=1 // pred_fallthru
      _
    // Predicated region
    $region58: #{autoencoder_forward.1} parent=1 // pred_check
      _
    $region59: #{autoencoder_forward.1} parent=1 // pred_check_branch
      %112 = sbr.rel (0) target = $region61
    $region60: #{autoencoder_forward.1} parent=1 // pred_region
      %113 = dma.done [#allocation5], 32768
    $region61: #{autoencoder_forward.1} parent=1 // pred_fallthru
      _
    // Predicated region
    $region62: #{autoencoder_forward.1} parent=1 // pred_check
      _
    $region63: #{autoencoder_forward.1} parent=1 // pred_check_branch
      %115 = sbr.rel (0) target = $region65
    $region64: #{autoencoder_forward.1} parent=1 // pred_region
      %116 = dma.done [#allocation5], 8192
    $region65: #{autoencoder_forward.1} parent=1 // pred_fallthru
      _
    // Predicated region
    $region66: #{autoencoder_forward.1} parent=1 // pred_check
      _
    $region67: #{autoencoder_forward.1} parent=1 // pred_check_branch
      %118 = sbr.rel (0) target = $region69
    $region68: #{autoencoder_forward.1} parent=1 // pred_region
      %119 = dma.done [#allocation8], 8192
    $region69: #{autoencoder_forward.1} parent=1 // pred_fallthru
      _
    // Predicated region
    $region70: #{autoencoder_forward.1} parent=1 // pred_check
      _
    $region71: #{autoencoder_forward.1} parent=1 // pred_check_branch
      %121 = sbr.rel (0) target = $region73
    $region72: #{autoencoder_forward.1} parent=1 // pred_region
      %122 = dma.done [#allocation8], 32768
    $region73: #{autoencoder_forward.1} parent=1 // pred_fallthru
      _
    // Predicated region
    $region74: #{autoencoder_forward.1} parent=1 // pred_check
      _
    $region75: #{autoencoder_forward.1} parent=1 // pred_check_branch
      %124 = sbr.rel (0) target = $region77
    $region76: #{autoencoder_forward.1} parent=1 // pred_region
      %125 = dma.done [#allocation11], 16384
    $region77: #{autoencoder_forward.1} parent=1 // pred_fallthru
      _
    %v126 = vld [vmem:[%s0] sm:$0xf]
    %v129 = vunpack.c.l.s4 1983009808
    %v130 = vunpack.c.0.s8 %v129
    %v131 = vlaneseq
    %v132 = vshrl.u32 %v131, 7
    %v133 = vsub.s32 %v130, %v132
    %v134 = vrot.slane %v126, %v133
    %v135 = vcombine.high %v134, %v134
    %v138 = vpack.c.bf16 %v134, %v134
    %v139 = vpack.c.bf16 %v135, %v135
    %v140 = vld [vmem:[#allocation2] sm:$0xff]
    %v141 = vld [vmem:[#allocation2 + $0x8] sm:$0xff]
    %v142 = vld [vmem:[#allocation2 + $0x10] sm:$0xff]
    %v143 = vld [vmem:[#allocation2 + $0x18] sm:$0xff]
    %v144 = vld [vmem:[#allocation2 + $0x20] sm:$0xff]
    %v145 = vld [vmem:[#allocation2 + $0x28] sm:$0xff]
    %v146 = vld [vmem:[#allocation2 + $0x30] sm:$0xff]
    %v147 = vld [vmem:[#allocation2 + $0x38] sm:$0xff]
    %v148 = vld [vmem:[#allocation2 + $0x40] sm:$0xff]
    %v149 = vld [vmem:[#allocation2 + $0x48] sm:$0xff]
    %v150 = vld [vmem:[#allocation2 + $0x50] sm:$0xff]
    %v151 = vld [vmem:[#allocation2 + $0x58] sm:$0xff]
    %v152 = vld [vmem:[#allocation2 + $0x60] sm:$0xff]
    %v153 = vld [vmem:[#allocation2 + $0x68] sm:$0xff]
    %v154 = vld [vmem:[#allocation2 + $0x70] sm:$0xff]
    %v155 = vld [vmem:[#allocation2 + $0x78] sm:$0xff]
    %v156 = vld [vmem:[#allocation2 + $0x80] sm:$0xff]
    %v157 = vld [vmem:[#allocation2 + $0x88] sm:$0xff]
    %v158 = vld [vmem:[#allocation2 + $0x90] sm:$0xff]
    %v159 = vld [vmem:[#allocation2 + $0x98] sm:$0xff]
    %v160 = vld [vmem:[#allocation2 + $0xa0] sm:$0xff]
    %v161 = vld [vmem:[#allocation2 + $0xa8] sm:$0xff]
    %v162 = vld [vmem:[#allocation2 + $0xb0] sm:$0xff]
    %v163 = vld [vmem:[#allocation2 + $0xb8] sm:$0xff]
    %v164 = vld [vmem:[#allocation2 + $0xc0] sm:$0xff]
    %v165 = vld [vmem:[#allocation2 + $0xc8] sm:$0xff]
    %v166 = vld [vmem:[#allocation2 + $0xd0] sm:$0xff]
    %v167 = vld [vmem:[#allocation2 + $0xd8] sm:$0xff]
    %v168 = vld [vmem:[#allocation2 + $0xe0] sm:$0xff]
    %v169 = vld [vmem:[#allocation2 + $0xe8] sm:$0xff]
    %v170 = vld [vmem:[#allocation2 + $0xf0] sm:$0xff]
    %v171 = vld [vmem:[#allocation2 + $0xf8] sm:$0xff]
    %v172 = vld [vmem:[#allocation2 + $0x100] sm:$0xff]
    %v173 = vld [vmem:[#allocation2 + $0x108] sm:$0xff]
    %v174 = vld [vmem:[#allocation2 + $0x110] sm:$0xff]
    %v175 = vld [vmem:[#allocation2 + $0x118] sm:$0xff]
    %v176 = vld [vmem:[#allocation2 + $0x120] sm:$0xff]
    %v177 = vld [vmem:[#allocation2 + $0x128] sm:$0xff]
    %v178 = vld [vmem:[#allocation2 + $0x130] sm:$0xff]
    %v179 = vld [vmem:[#allocation2 + $0x138] sm:$0xff]
    %v180 = vld [vmem:[#allocation2 + $0x140] sm:$0xff]
    %v181 = vld [vmem:[#allocation2 + $0x148] sm:$0xff]
    %v182 = vld [vmem:[#allocation2 + $0x150] sm:$0xff]
    %v183 = vld [vmem:[#allocation2 + $0x158] sm:$0xff]
    %v184 = vld [vmem:[#allocation2 + $0x160] sm:$0xff]
    %v185 = vld [vmem:[#allocation2 + $0x168] sm:$0xff]
    %v186 = vld [vmem:[#allocation2 + $0x170] sm:$0xff]
    %v187 = vld [vmem:[#allocation2 + $0x178] sm:$0xff]
    %v188 = vld [vmem:[#allocation2 + $0x180] sm:$0xff]
    %v189 = vld [vmem:[#allocation2 + $0x188] sm:$0xff]
    %v190 = vld [vmem:[#allocation2 + $0x190] sm:$0xff]
    %v191 = vld [vmem:[#allocation2 + $0x198] sm:$0xff]
    %v192 = vld [vmem:[#allocation2 + $0x1a0] sm:$0xff]
    %v193 = vld [vmem:[#allocation2 + $0x1a8] sm:$0xff]
    %v194 = vld [vmem:[#allocation2 + $0x1b0] sm:$0xff]
    %v195 = vld [vmem:[#allocation2 + $0x1b8] sm:$0xff]
    %v196 = vld [vmem:[#allocation2 + $0x1c0] sm:$0xff]
    %v197 = vld [vmem:[#allocation2 + $0x1c8] sm:$0xff]
    %v198 = vld [vmem:[#allocation2 + $0x1d0] sm:$0xff]
    %v199 = vld [vmem:[#allocation2 + $0x1d8] sm:$0xff]
    %v200 = vld [vmem:[#allocation2 + $0x1e0] sm:$0xff]
    %v201 = vld [vmem:[#allocation2 + $0x1e8] sm:$0xff]
    %v202 = vld [vmem:[#allocation2 + $0x1f0] sm:$0xff]
    %v203 = vld [vmem:[#allocation2 + $0x1f8] sm:$0xff]
    %v204 = vld [vmem:[#allocation2 + $0x200] sm:$0xff]
    %v205 = vld [vmem:[#allocation2 + $0x208] sm:$0xff]
    %v206 = vld [vmem:[#allocation2 + $0x210] sm:$0xff]
    %v207 = vld [vmem:[#allocation2 + $0x218] sm:$0xff]
    %v208 = vld [vmem:[#allocation2 + $0x220] sm:$0xff]
    %v209 = vld [vmem:[#allocation2 + $0x228] sm:$0xff]
    %v210 = vld [vmem:[#allocation2 + $0x230] sm:$0xff]
    %v211 = vld [vmem:[#allocation2 + $0x238] sm:$0xff]
    %v212 = vld [vmem:[#allocation2 + $0x240] sm:$0xff]
    %v213 = vld [vmem:[#allocation2 + $0x248] sm:$0xff]
    %v214 = vld [vmem:[#allocation2 + $0x250] sm:$0xff]
    %v215 = vld [vmem:[#allocation2 + $0x258] sm:$0xff]
    %v216 = vld [vmem:[#allocation2 + $0x260] sm:$0xff]
    %v217 = vld [vmem:[#allocation2 + $0x268] sm:$0xff]
    %v218 = vld [vmem:[#allocation2 + $0x270] sm:$0xff]
    %v219 = vld [vmem:[#allocation2 + $0x278] sm:$0xff]
    %v220 = vld [vmem:[#allocation2 + $0x280] sm:$0xff]
    %v221 = vld [vmem:[#allocation2 + $0x288] sm:$0xff]
    %v222 = vld [vmem:[#allocation2 + $0x290] sm:$0xff]
    %v223 = vld [vmem:[#allocation2 + $0x298] sm:$0xff]
    %v224 = vld [vmem:[#allocation2 + $0x2a0] sm:$0xff]
    %v225 = vld [vmem:[#allocation2 + $0x2a8] sm:$0xff]
    %v226 = vld [vmem:[#allocation2 + $0x2b0] sm:$0xff]
    %v227 = vld [vmem:[#allocation2 + $0x2b8] sm:$0xff]
    %v228 = vld [vmem:[#allocation2 + $0x2c0] sm:$0xff]
    %v229 = vld [vmem:[#allocation2 + $0x2c8] sm:$0xff]
    %v230 = vld [vmem:[#allocation2 + $0x2d0] sm:$0xff]
    %v231 = vld [vmem:[#allocation2 + $0x2d8] sm:$0xff]
    %v232 = vld [vmem:[#allocation2 + $0x2e0] sm:$0xff]
    %v233 = vld [vmem:[#allocation2 + $0x2e8] sm:$0xff]
    %v234 = vld [vmem:[#allocation2 + $0x2f0] sm:$0xff]
    %v235 = vld [vmem:[#allocation2 + $0x2f8] sm:$0xff]
    %v236 = vld [vmem:[#allocation2 + $0x300] sm:$0xff]
    %v237 = vld [vmem:[#allocation2 + $0x308] sm:$0xff]
    %v238 = vld [vmem:[#allocation2 + $0x310] sm:$0xff]
    %v239 = vld [vmem:[#allocation2 + $0x318] sm:$0xff]
    %v240 = vld [vmem:[#allocation2 + $0x320] sm:$0xff]
    %v241 = vld [vmem:[#allocation2 + $0x328] sm:$0xff]
    %v242 = vld [vmem:[#allocation2 + $0x330] sm:$0xff]
    %v243 = vld [vmem:[#allocation2 + $0x338] sm:$0xff]
    %v244 = vld [vmem:[#allocation2 + $0x340] sm:$0xff]
    %v245 = vld [vmem:[#allocation2 + $0x348] sm:$0xff]
    %v246 = vld [vmem:[#allocation2 + $0x350] sm:$0xff]
    %v247 = vld [vmem:[#allocation2 + $0x358] sm:$0xff]
    %v248 = vld [vmem:[#allocation2 + $0x360] sm:$0xff]
    %v249 = vld [vmem:[#allocation2 + $0x368] sm:$0xff]
    %v250 = vld [vmem:[#allocation2 + $0x370] sm:$0xff]
    %v251 = vld [vmem:[#allocation2 + $0x378] sm:$0xff]
    %v252 = vld [vmem:[#allocation2 + $0x380] sm:$0xff]
    %v253 = vld [vmem:[#allocation2 + $0x388] sm:$0xff]
    %v254 = vld [vmem:[#allocation2 + $0x390] sm:$0xff]
    %v255 = vld [vmem:[#allocation2 + $0x398] sm:$0xff]
    %v256 = vld [vmem:[#allocation2 + $0x3a0] sm:$0xff]
    %v257 = vld [vmem:[#allocation2 + $0x3a8] sm:$0xff]
    %v258 = vld [vmem:[#allocation2 + $0x3b0] sm:$0xff]
    %v259 = vld [vmem:[#allocation2 + $0x3b8] sm:$0xff]
    %v260 = vld [vmem:[#allocation2 + $0x3c0] sm:$0xff]
    %v261 = vld [vmem:[#allocation2 + $0x3c8] sm:$0xff]
    %v262 = vld [vmem:[#allocation2 + $0x3d0] sm:$0xff]
    %v263 = vld [vmem:[#allocation2 + $0x3d8] sm:$0xff]
    %v264 = vld [vmem:[#allocation2 + $0x3e0] sm:$0xff]
    %v265 = vld [vmem:[#allocation2 + $0x3e8] sm:$0xff]
    %v266 = vld [vmem:[#allocation2 + $0x3f0] sm:$0xff]
    %v267 = vld [vmem:[#allocation2 + $0x3f8] sm:$0xff]
    %v268 = vld [vmem:[%s2] sm:$0xff]
    %v270 = vlaneseq
    %v271 = vshrl.u32 %v270, 7
    %v272 = vsub.s32 0, %v271
    %v273 = vrot.slane %v268, %v272
    %v274 = vlaneseq
    %v275 = vshrl.u32 %v274, 7
    %v276 = vsub.s32 1, %v275
    %v277 = vrot.slane %v268, %v276
    %v278 = vlaneseq
    %v279 = vshrl.u32 %v278, 7
    %v280 = vsub.s32 2, %v279
    %v281 = vrot.slane %v268, %v280
    %v282 = vlaneseq
    %v283 = vshrl.u32 %v282, 7
    %v284 = vsub.s32 3, %v283
    %v285 = vrot.slane %v268, %v284
    %v286 = vlaneseq
    %v287 = vshrl.u32 %v286, 7
    %v288 = vsub.s32 4, %v287
    %v289 = vrot.slane %v268, %v288
    %v290 = vlaneseq
    %v291 = vshrl.u32 %v290, 7
    %v292 = vsub.s32 5, %v291
    %v293 = vrot.slane %v268, %v292
    %v294 = vlaneseq
    %v295 = vshrl.u32 %v294, 7
    %v296 = vsub.s32 6, %v295
    %v297 = vrot.slane %v268, %v296
    %v298 = vlaneseq
    %v299 = vshrl.u32 %v298, 7
    %v300 = vsub.s32 7, %v299
    %v301 = vrot.slane %v268, %v300
    %v438 = vunpack.c.l.b16 %v140
    %v439 = vunpack.c.h.b16 %v140
    %v440 = vunpack.c.l.b16 %v141
    %v441 = vunpack.c.h.b16 %v141
    %v442 = vunpack.c.l.b16 %v142
    %v443 = vunpack.c.h.b16 %v142
    %v444 = vunpack.c.l.b16 %v143
    %v445 = vunpack.c.h.b16 %v143
    %v446 = vunpack.c.l.b16 %v144
    %v447 = vunpack.c.h.b16 %v144
    %v448 = vunpack.c.l.b16 %v145
    %v449 = vunpack.c.h.b16 %v145
    %v450 = vunpack.c.l.b16 %v146
    %v451 = vunpack.c.h.b16 %v146
    %v452 = vunpack.c.l.b16 %v147
    %v453 = vunpack.c.h.b16 %v147
    %v454 = vunpack.c.l.b16 %v148
    %v455 = vunpack.c.h.b16 %v148
    %v456 = vunpack.c.l.b16 %v149
    %v457 = vunpack.c.h.b16 %v149
    %v458 = vunpack.c.l.b16 %v150
    %v459 = vunpack.c.h.b16 %v150
    %v460 = vunpack.c.l.b16 %v151
    %v461 = vunpack.c.h.b16 %v151
    %v462 = vunpack.c.l.b16 %v152
    %v463 = vunpack.c.h.b16 %v152
    %v464 = vunpack.c.l.b16 %v153
    %v465 = vunpack.c.h.b16 %v153
    %v466 = vunpack.c.l.b16 %v154
    %v467 = vunpack.c.h.b16 %v154
    %v468 = vunpack.c.l.b16 %v155
    %v469 = vunpack.c.h.b16 %v155
    %v470 = vunpack.c.l.b16 %v156
    %v471 = vunpack.c.h.b16 %v156
    %v472 = vunpack.c.l.b16 %v157
    %v473 = vunpack.c.h.b16 %v157
    %v474 = vunpack.c.l.b16 %v158
    %v475 = vunpack.c.h.b16 %v158
    %v476 = vunpack.c.l.b16 %v159
    %v477 = vunpack.c.h.b16 %v159
    %v478 = vunpack.c.l.b16 %v160
    %v479 = vunpack.c.h.b16 %v160
    %v480 = vunpack.c.l.b16 %v161
    %v481 = vunpack.c.h.b16 %v161
    %v482 = vunpack.c.l.b16 %v162
    %v483 = vunpack.c.h.b16 %v162
    %v484 = vunpack.c.l.b16 %v163
    %v485 = vunpack.c.h.b16 %v163
    %v486 = vunpack.c.l.b16 %v164
    %v487 = vunpack.c.h.b16 %v164
    %v488 = vunpack.c.l.b16 %v165
    %v489 = vunpack.c.h.b16 %v165
    %v490 = vunpack.c.l.b16 %v166
    %v491 = vunpack.c.h.b16 %v166
    %v492 = vunpack.c.l.b16 %v167
    %v493 = vunpack.c.h.b16 %v167
    %v494 = vunpack.c.l.b16 %v168
    %v495 = vunpack.c.h.b16 %v168
    %v496 = vunpack.c.l.b16 %v169
    %v497 = vunpack.c.h.b16 %v169
    %v498 = vunpack.c.l.b16 %v170
    %v499 = vunpack.c.h.b16 %v170
    %v500 = vunpack.c.l.b16 %v171
    %v501 = vunpack.c.h.b16 %v171
    %v502 = vunpack.c.l.b16 %v172
    %v503 = vunpack.c.h.b16 %v172
    %v504 = vunpack.c.l.b16 %v173
    %v505 = vunpack.c.h.b16 %v173
    %v506 = vunpack.c.l.b16 %v174
    %v507 = vunpack.c.h.b16 %v174
    %v508 = vunpack.c.l.b16 %v175
    %v509 = vunpack.c.h.b16 %v175
    %v510 = vunpack.c.l.b16 %v176
    %v511 = vunpack.c.h.b16 %v176
    %v512 = vunpack.c.l.b16 %v177
    %v513 = vunpack.c.h.b16 %v177
    %v514 = vunpack.c.l.b16 %v178
    %v515 = vunpack.c.h.b16 %v178
    %v516 = vunpack.c.l.b16 %v179
    %v517 = vunpack.c.h.b16 %v179
    %v518 = vunpack.c.l.b16 %v180
    %v519 = vunpack.c.h.b16 %v180
    %v520 = vunpack.c.l.b16 %v181
    %v521 = vunpack.c.h.b16 %v181
    %v522 = vunpack.c.l.b16 %v182
    %v523 = vunpack.c.h.b16 %v182
    %v524 = vunpack.c.l.b16 %v183
    %v525 = vunpack.c.h.b16 %v183
    %v526 = vunpack.c.l.b16 %v184
    %v527 = vunpack.c.h.b16 %v184
    %v528 = vunpack.c.l.b16 %v185
    %v529 = vunpack.c.h.b16 %v185
    %v530 = vunpack.c.l.b16 %v186
    %v531 = vunpack.c.h.b16 %v186
    %v532 = vunpack.c.l.b16 %v187
    %v533 = vunpack.c.h.b16 %v187
    %v534 = vunpack.c.l.b16 %v188
    %v535 = vunpack.c.h.b16 %v188
    %v536 = vunpack.c.l.b16 %v189
    %v537 = vunpack.c.h.b16 %v189
    %v538 = vunpack.c.l.b16 %v190
    %v539 = vunpack.c.h.b16 %v190
    %v540 = vunpack.c.l.b16 %v191
    %v541 = vunpack.c.h.b16 %v191
    %v542 = vunpack.c.l.b16 %v192
    %v543 = vunpack.c.h.b16 %v192
    %v544 = vunpack.c.l.b16 %v193
    %v545 = vunpack.c.h.b16 %v193
    %v546 = vunpack.c.l.b16 %v194
    %v547 = vunpack.c.h.b16 %v194
    %v548 = vunpack.c.l.b16 %v195
    %v549 = vunpack.c.h.b16 %v195
    %v550 = vunpack.c.l.b16 %v196
    %v551 = vunpack.c.h.b16 %v196
    %v552 = vunpack.c.l.b16 %v197
    %v553 = vunpack.c.h.b16 %v197
    %v554 = vunpack.c.l.b16 %v198
    %v555 = vunpack.c.h.b16 %v198
    %v556 = vunpack.c.l.b16 %v199
    %v557 = vunpack.c.h.b16 %v199
    %v558 = vunpack.c.l.b16 %v200
    %v559 = vunpack.c.h.b16 %v200
    %v560 = vunpack.c.l.b16 %v201
    %v561 = vunpack.c.h.b16 %v201
    %v562 = vunpack.c.l.b16 %v202
    %v563 = vunpack.c.h.b16 %v202
    %v564 = vunpack.c.l.b16 %v203
    %v565 = vunpack.c.h.b16 %v203
    %v566 = vunpack.c.l.b16 %v204
    %v567 = vunpack.c.h.b16 %v204
    %v568 = vunpack.c.l.b16 %v205
    %v569 = vunpack.c.h.b16 %v205
    %v570 = vunpack.c.l.b16 %v206
    %v571 = vunpack.c.h.b16 %v206
    %v572 = vunpack.c.l.b16 %v207
    %v573 = vunpack.c.h.b16 %v207
    %v574 = vunpack.c.l.b16 %v208
    %v575 = vunpack.c.h.b16 %v208
    %v576 = vunpack.c.l.b16 %v209
    %v577 = vunpack.c.h.b16 %v209
    %v578 = vunpack.c.l.b16 %v210
    %v579 = vunpack.c.h.b16 %v210
    %v580 = vunpack.c.l.b16 %v211
    %v581 = vunpack.c.h.b16 %v211
    %v582 = vunpack.c.l.b16 %v212
    %v583 = vunpack.c.h.b16 %v212
    %v584 = vunpack.c.l.b16 %v213
    %v585 = vunpack.c.h.b16 %v213
    %v586 = vunpack.c.l.b16 %v214
    %v587 = vunpack.c.h.b16 %v214
    %v588 = vunpack.c.l.b16 %v215
    %v589 = vunpack.c.h.b16 %v215
    %v590 = vunpack.c.l.b16 %v216
    %v591 = vunpack.c.h.b16 %v216
    %v592 = vunpack.c.l.b16 %v217
    %v593 = vunpack.c.h.b16 %v217
    %v594 = vunpack.c.l.b16 %v218
    %v595 = vunpack.c.h.b16 %v218
    %v596 = vunpack.c.l.b16 %v219
    %v597 = vunpack.c.h.b16 %v219
    %v598 = vunpack.c.l.b16 %v220
    %v599 = vunpack.c.h.b16 %v220
    %v600 = vunpack.c.l.b16 %v221
    %v601 = vunpack.c.h.b16 %v221
    %v602 = vunpack.c.l.b16 %v222
    %v603 = vunpack.c.h.b16 %v222
    %v604 = vunpack.c.l.b16 %v223
    %v605 = vunpack.c.h.b16 %v223
    %v606 = vunpack.c.l.b16 %v224
    %v607 = vunpack.c.h.b16 %v224
    %v608 = vunpack.c.l.b16 %v225
    %v609 = vunpack.c.h.b16 %v225
    %v610 = vunpack.c.l.b16 %v226
    %v611 = vunpack.c.h.b16 %v226
    %v612 = vunpack.c.l.b16 %v227
    %v613 = vunpack.c.h.b16 %v227
    %v614 = vunpack.c.l.b16 %v228
    %v615 = vunpack.c.h.b16 %v228
    %v616 = vunpack.c.l.b16 %v229
    %v617 = vunpack.c.h.b16 %v229
    %v618 = vunpack.c.l.b16 %v230
    %v619 = vunpack.c.h.b16 %v230
    %v620 = vunpack.c.l.b16 %v231
    %v621 = vunpack.c.h.b16 %v231
    %v622 = vunpack.c.l.b16 %v232
    %v623 = vunpack.c.h.b16 %v232
    %v624 = vunpack.c.l.b16 %v233
    %v625 = vunpack.c.h.b16 %v233
    %v626 = vunpack.c.l.b16 %v234
    %v627 = vunpack.c.h.b16 %v234
    %v628 = vunpack.c.l.b16 %v235
    %v629 = vunpack.c.h.b16 %v235
    %v630 = vunpack.c.l.b16 %v236
    %v631 = vunpack.c.h.b16 %v236
    %v632 = vunpack.c.l.b16 %v237
    %v633 = vunpack.c.h.b16 %v237
    %v634 = vunpack.c.l.b16 %v238
    %v635 = vunpack.c.h.b16 %v238
    %v636 = vunpack.c.l.b16 %v239
    %v637 = vunpack.c.h.b16 %v239
    %v638 = vunpack.c.l.b16 %v240
    %v639 = vunpack.c.h.b16 %v240
    %v640 = vunpack.c.l.b16 %v241
    %v641 = vunpack.c.h.b16 %v241
    %v642 = vunpack.c.l.b16 %v242
    %v643 = vunpack.c.h.b16 %v242
    %v644 = vunpack.c.l.b16 %v243
    %v645 = vunpack.c.h.b16 %v243
    %v646 = vunpack.c.l.b16 %v244
    %v647 = vunpack.c.h.b16 %v244
    %v648 = vunpack.c.l.b16 %v245
    %v649 = vunpack.c.h.b16 %v245
    %v650 = vunpack.c.l.b16 %v246
    %v651 = vunpack.c.h.b16 %v246
    %v652 = vunpack.c.l.b16 %v247
    %v653 = vunpack.c.h.b16 %v247
    %v654 = vunpack.c.l.b16 %v248
    %v655 = vunpack.c.h.b16 %v248
    %v656 = vunpack.c.l.b16 %v249
    %v657 = vunpack.c.h.b16 %v249
    %v658 = vunpack.c.l.b16 %v250
    %v659 = vunpack.c.h.b16 %v250
    %v660 = vunpack.c.l.b16 %v251
    %v661 = vunpack.c.h.b16 %v251
    %v662 = vunpack.c.l.b16 %v252
    %v663 = vunpack.c.h.b16 %v252
    %v664 = vunpack.c.l.b16 %v253
    %v665 = vunpack.c.h.b16 %v253
    %v666 = vunpack.c.l.b16 %v254
    %v667 = vunpack.c.h.b16 %v254
    %v668 = vunpack.c.l.b16 %v255
    %v669 = vunpack.c.h.b16 %v255
    %v670 = vunpack.c.l.b16 %v256
    %v671 = vunpack.c.h.b16 %v256
    %v672 = vunpack.c.l.b16 %v257
    %v673 = vunpack.c.h.b16 %v257
    %v674 = vunpack.c.l.b16 %v258
    %v675 = vunpack.c.h.b16 %v258
    %v676 = vunpack.c.l.b16 %v259
    %v677 = vunpack.c.h.b16 %v259
    %v678 = vunpack.c.l.b16 %v260
    %v679 = vunpack.c.h.b16 %v260
    %v680 = vunpack.c.l.b16 %v261
    %v681 = vunpack.c.h.b16 %v261
    %v682 = vunpack.c.l.b16 %v262
    %v683 = vunpack.c.h.b16 %v262
    %v684 = vunpack.c.l.b16 %v263
    %v685 = vunpack.c.h.b16 %v263
    %v686 = vunpack.c.l.b16 %v264
    %v687 = vunpack.c.h.b16 %v264
    %v688 = vunpack.c.l.b16 %v265
    %v689 = vunpack.c.h.b16 %v265
    %v690 = vunpack.c.l.b16 %v266
    %v691 = vunpack.c.h.b16 %v266
    %v692 = vunpack.c.l.b16 %v267
    %v693 = vunpack.c.h.b16 %v267
    %v694 = vpack.c.b16 %v446, %v438
    %v695 = vpack.c.b16 %v447, %v439
    %v696 = vpack.c.b16 %v448, %v440
    %v697 = vpack.c.b16 %v449, %v441
    %v698 = vpack.c.b16 %v450, %v442
    %v699 = vpack.c.b16 %v451, %v443
    %v700 = vpack.c.b16 %v452, %v444
    %v701 = vpack.c.b16 %v453, %v445
    %v702 = vpack.c.b16 %v462, %v454
    %v703 = vpack.c.b16 %v463, %v455
    %v704 = vpack.c.b16 %v464, %v456
    %v705 = vpack.c.b16 %v465, %v457
    %v706 = vpack.c.b16 %v466, %v458
    %v707 = vpack.c.b16 %v467, %v459
    %v708 = vpack.c.b16 %v468, %v460
    %v709 = vpack.c.b16 %v469, %v461
    %v710 = vpack.c.b16 %v478, %v470
    %v711 = vpack.c.b16 %v479, %v471
    %v712 = vpack.c.b16 %v480, %v472
    %v713 = vpack.c.b16 %v481, %v473
    %v714 = vpack.c.b16 %v482, %v474
    %v715 = vpack.c.b16 %v483, %v475
    %v716 = vpack.c.b16 %v484, %v476
    %v717 = vpack.c.b16 %v485, %v477
    %v718 = vpack.c.b16 %v494, %v486
    %v719 = vpack.c.b16 %v495, %v487
    %v720 = vpack.c.b16 %v496, %v488
    %v721 = vpack.c.b16 %v497, %v489
    %v722 = vpack.c.b16 %v498, %v490
    %v723 = vpack.c.b16 %v499, %v491
    %v724 = vpack.c.b16 %v500, %v492
    %v725 = vpack.c.b16 %v501, %v493
    %v726 = vpack.c.b16 %v510, %v502
    %v727 = vpack.c.b16 %v511, %v503
    %v728 = vpack.c.b16 %v512, %v504
    %v729 = vpack.c.b16 %v513, %v505
    %v730 = vpack.c.b16 %v514, %v506
    %v731 = vpack.c.b16 %v515, %v507
    %v732 = vpack.c.b16 %v516, %v508
    %v733 = vpack.c.b16 %v517, %v509
    %v734 = vpack.c.b16 %v526, %v518
    %v735 = vpack.c.b16 %v527, %v519
    %v736 = vpack.c.b16 %v528, %v520
    %v737 = vpack.c.b16 %v529, %v521
    %v738 = vpack.c.b16 %v530, %v522
    %v739 = vpack.c.b16 %v531, %v523
    %v740 = vpack.c.b16 %v532, %v524
    %v741 = vpack.c.b16 %v533, %v525
    %v742 = vpack.c.b16 %v542, %v534
    %v743 = vpack.c.b16 %v543, %v535
    %v744 = vpack.c.b16 %v544, %v536
    %v745 = vpack.c.b16 %v545, %v537
    %v746 = vpack.c.b16 %v546, %v538
    %v747 = vpack.c.b16 %v547, %v539
    %v748 = vpack.c.b16 %v548, %v540
    %v749 = vpack.c.b16 %v549, %v541
    %v750 = vpack.c.b16 %v558, %v550
    %v751 = vpack.c.b16 %v559, %v551
    %v752 = vpack.c.b16 %v560, %v552
    %v753 = vpack.c.b16 %v561, %v553
    %v754 = vpack.c.b16 %v562, %v554
    %v755 = vpack.c.b16 %v563, %v555
    %v756 = vpack.c.b16 %v564, %v556
    %v757 = vpack.c.b16 %v565, %v557
    %v758 = vpack.c.b16 %v574, %v566
    %v759 = vpack.c.b16 %v575, %v567
    %v760 = vpack.c.b16 %v576, %v568
    %v761 = vpack.c.b16 %v577, %v569
    %v762 = vpack.c.b16 %v578, %v570
    %v763 = vpack.c.b16 %v579, %v571
    %v764 = vpack.c.b16 %v580, %v572
    %v765 = vpack.c.b16 %v581, %v573
    %v766 = vpack.c.b16 %v590, %v582
    %v767 = vpack.c.b16 %v591, %v583
    %v768 = vpack.c.b16 %v592, %v584
    %v769 = vpack.c.b16 %v593, %v585
    %v770 = vpack.c.b16 %v594, %v586
    %v771 = vpack.c.b16 %v595, %v587
    %v772 = vpack.c.b16 %v596, %v588
    %v773 = vpack.c.b16 %v597, %v589
    %v774 = vpack.c.b16 %v606, %v598
    %v775 = vpack.c.b16 %v607, %v599
    %v776 = vpack.c.b16 %v608, %v600
    %v777 = vpack.c.b16 %v609, %v601
    %v778 = vpack.c.b16 %v610, %v602
    %v779 = vpack.c.b16 %v611, %v603
    %v780 = vpack.c.b16 %v612, %v604
    %v781 = vpack.c.b16 %v613, %v605
    %v782 = vpack.c.b16 %v622, %v614
    %v783 = vpack.c.b16 %v623, %v615
    %v784 = vpack.c.b16 %v624, %v616
    %v785 = vpack.c.b16 %v625, %v617
    %v786 = vpack.c.b16 %v626, %v618
    %v787 = vpack.c.b16 %v627, %v619
    %v788 = vpack.c.b16 %v628, %v620
    %v789 = vpack.c.b16 %v629, %v621
    %v790 = vpack.c.b16 %v638, %v630
    %v791 = vpack.c.b16 %v639, %v631
    %v792 = vpack.c.b16 %v640, %v632
    %v793 = vpack.c.b16 %v641, %v633
    %v794 = vpack.c.b16 %v642, %v634
    %v795 = vpack.c.b16 %v643, %v635
    %v796 = vpack.c.b16 %v644, %v636
    %v797 = vpack.c.b16 %v645, %v637
    %v798 = vpack.c.b16 %v654, %v646
    %v799 = vpack.c.b16 %v655, %v647
    %v800 = vpack.c.b16 %v656, %v648
    %v801 = vpack.c.b16 %v657, %v649
    %v802 = vpack.c.b16 %v658, %v650
    %v803 = vpack.c.b16 %v659, %v651
    %v804 = vpack.c.b16 %v660, %v652
    %v805 = vpack.c.b16 %v661, %v653
    %v806 = vpack.c.b16 %v670, %v662
    %v807 = vpack.c.b16 %v671, %v663
    %v808 = vpack.c.b16 %v672, %v664
    %v809 = vpack.c.b16 %v673, %v665
    %v810 = vpack.c.b16 %v674, %v666
    %v811 = vpack.c.b16 %v675, %v667
    %v812 = vpack.c.b16 %v676, %v668
    %v813 = vpack.c.b16 %v677, %v669
    %v814 = vpack.c.b16 %v686, %v678
    %v815 = vpack.c.b16 %v687, %v679
    %v816 = vpack.c.b16 %v688, %v680
    %v817 = vpack.c.b16 %v689, %v681
    %v818 = vpack.c.b16 %v690, %v682
    %v819 = vpack.c.b16 %v691, %v683
    %v820 = vpack.c.b16 %v692, %v684
    %v821 = vpack.c.b16 %v693, %v685
    %950 = vmatprep.subr.bf16.mxu0 %v695
    %951 = vmatpush1.bf16.msra.mxu0 %v694
    %952 = vmatprep.subr.bf16.mxu0 %v703
    %953 = vmatpush1.bf16.msra.mxu0 %v702
    %954 = vmatprep.subr.bf16.mxu0 %v711
    %955 = vmatpush1.bf16.msra.mxu0 %v710
    %956 = vmatprep.subr.bf16.mxu0 %v719
    %957 = vmatpush1.bf16.msra.mxu0 %v718
    %958 = vmatprep.subr.bf16.mxu0 %v727
    %959 = vmatpush1.bf16.msra.mxu0 %v726
    %960 = vmatprep.subr.bf16.mxu0 %v735
    %961 = vmatpush1.bf16.msra.mxu0 %v734
    %962 = vmatprep.subr.bf16.mxu0 %v743
    %963 = vmatpush1.bf16.msra.mxu0 %v742
    %964 = vmatprep.subr.bf16.mxu0 %v751
    %965 = vmatpush1.bf16.msra.mxu0 %v750
    %966 = vmatprep.subr.bf16.mxu0 %v759
    %967 = vmatpush1.bf16.msra.mxu0 %v758
    %968 = vmatprep.subr.bf16.mxu0 %v767
    %969 = vmatpush1.bf16.msra.mxu0 %v766
    %970 = vmatprep.subr.bf16.mxu0 %v775
    %971 = vmatpush1.bf16.msra.mxu0 %v774
    %972 = vmatprep.subr.bf16.mxu0 %v783
    %973 = vmatpush1.bf16.msra.mxu0 %v782
    %974 = vmatprep.subr.bf16.mxu0 %v791
    %975 = vmatpush1.bf16.msra.mxu0 %v790
    %976 = vmatprep.subr.bf16.mxu0 %v799
    %977 = vmatpush1.bf16.msra.mxu0 %v798
    %978 = vmatprep.subr.bf16.mxu0 %v807
    %979 = vmatpush1.bf16.msra.mxu0 %v806
    %980 = vmatprep.subr.bf16.mxu0 %v815
    %981 = vmatpush1.bf16.msra.mxu0 %v814
    %982 = vmatprep.mubr.bf16.mxu0 %v139
    %983 = vmatmul.mubr.bf16.gmra.mrb[0].mxu0 %v138
    %v984 = vpop.f32.mrb[0].mxu0
    %v985 = vadd.f32 %v273, %v984
    %v986 = vpop.f32.mrb[0].mxu0
    %v987 = vadd.f32 %v277, %v986
    %v988 = vpop.f32.mrb[0].mxu0
    %v989 = vpop.f32.mrb[0].mxu0
    %990 = vdwg.mxu0
    %991 = vmatprep.subr.bf16.mxu0 %v697
    %992 = vmatpush1.bf16.msra.mxu0 %v696
    %993 = vmatprep.subr.bf16.mxu0 %v705
    %994 = vmatpush1.bf16.msra.mxu0 %v704
    %995 = vmatprep.subr.bf16.mxu0 %v713
    %996 = vmatpush1.bf16.msra.mxu0 %v712
    %997 = vmatprep.subr.bf16.mxu0 %v721
    %998 = vmatpush1.bf16.msra.mxu0 %v720
    %999 = vmatprep.subr.bf16.mxu0 %v729
    %1000 = vmatpush1.bf16.msra.mxu0 %v728
    %1001 = vmatprep.subr.bf16.mxu0 %v737
    %1002 = vmatpush1.bf16.msra.mxu0 %v736
    %1003 = vmatprep.subr.bf16.mxu0 %v745
    %1004 = vmatpush1.bf16.msra.mxu0 %v744
    %1005 = vmatprep.subr.bf16.mxu0 %v753
    %1006 = vmatpush1.bf16.msra.mxu0 %v752
    %1007 = vmatprep.subr.bf16.mxu0 %v761
    %1008 = vmatpush1.bf16.msra.mxu0 %v760
    %1009 = vmatprep.subr.bf16.mxu0 %v769
    %1010 = vmatpush1.bf16.msra.mxu0 %v768
    %1011 = vmatprep.subr.bf16.mxu0 %v777
    %1012 = vmatpush1.bf16.msra.mxu0 %v776
    %1013 = vmatprep.subr.bf16.mxu0 %v785
    %1014 = vmatpush1.bf16.msra.mxu0 %v784
    %1015 = vmatprep.subr.bf16.mxu0 %v793
    %1016 = vmatpush1.bf16.msra.mxu0 %v792
    %1017 = vmatprep.subr.bf16.mxu0 %v801
    %1018 = vmatpush1.bf16.msra.mxu0 %v800
    %1019 = vmatprep.subr.bf16.mxu0 %v809
    %1020 = vmatpush1.bf16.msra.mxu0 %v808
    %1021 = vmatprep.subr.bf16.mxu0 %v817
    %1022 = vmatpush1.bf16.msra.mxu0 %v816
    %1023 = vmatprep.mubr.bf16.mxu0 %v139
    %1024 = vmatmul.mubr.bf16.gmra.mrb[0].mxu0 %v138
    %v1025 = vpop.f32.mrb[0].mxu0
    %v1026 = vadd.f32 %v281, %v1025
    %v1027 = vpop.f32.mrb[0].mxu0
    %v1028 = vadd.f32 %v285, %v1027
    %v1029 = vpop.f32.mrb[0].mxu0
    %v1030 = vpop.f32.mrb[0].mxu0
    %1031 = vdwg.mxu0
    %1032 = vmatprep.subr.bf16.mxu0 %v699
    %1033 = vmatpush1.bf16.msra.mxu0 %v698
    %1034 = vmatprep.subr.bf16.mxu0 %v707
    %1035 = vmatpush1.bf16.msra.mxu0 %v706
    %1036 = vmatprep.subr.bf16.mxu0 %v715
    %1037 = vmatpush1.bf16.msra.mxu0 %v714
    %1038 = vmatprep.subr.bf16.mxu0 %v723
    %1039 = vmatpush1.bf16.msra.mxu0 %v722
    %1040 = vmatprep.subr.bf16.mxu0 %v731
    %1041 = vmatpush1.bf16.msra.mxu0 %v730
    %1042 = vmatprep.subr.bf16.mxu0 %v739
    %1043 = vmatpush1.bf16.msra.mxu0 %v738
    %1044 = vmatprep.subr.bf16.mxu0 %v747
    %1045 = vmatpush1.bf16.msra.mxu0 %v746
    %1046 = vmatprep.subr.bf16.mxu0 %v755
    %1047 = vmatpush1.bf16.msra.mxu0 %v754
    %1048 = vmatprep.subr.bf16.mxu0 %v763
    %1049 = vmatpush1.bf16.msra.mxu0 %v762
    %1050 = vmatprep.subr.bf16.mxu0 %v771
    %1051 = vmatpush1.bf16.msra.mxu0 %v770
    %1052 = vmatprep.subr.bf16.mxu0 %v779
    %1053 = vmatpush1.bf16.msra.mxu0 %v778
    %1054 = vmatprep.subr.bf16.mxu0 %v787
    %1055 = vmatpush1.bf16.msra.mxu0 %v786
    %1056 = vmatprep.subr.bf16.mxu0 %v795
    %1057 = vmatpush1.bf16.msra.mxu0 %v794
    %1058 = vmatprep.subr.bf16.mxu0 %v803
    %1059 = vmatpush1.bf16.msra.mxu0 %v802
    %1060 = vmatprep.subr.bf16.mxu0 %v811
    %1061 = vmatpush1.bf16.msra.mxu0 %v810
    %1062 = vmatprep.subr.bf16.mxu0 %v819
    %1063 = vmatpush1.bf16.msra.mxu0 %v818
    %1064 = vmatprep.mubr.bf16.mxu0 %v139
    %1065 = vmatmul.mubr.bf16.gmra.mrb[0].mxu0 %v138
    %v1066 = vpop.f32.mrb[0].mxu0
    %v1067 = vadd.f32 %v289, %v1066
    %v1068 = vpop.f32.mrb[0].mxu0
    %v1069 = vadd.f32 %v293, %v1068
    %v1070 = vpop.f32.mrb[0].mxu0
    %v1071 = vpop.f32.mrb[0].mxu0
    %1072 = vdwg.mxu0
    %1073 = vmatprep.subr.bf16.mxu0 %v701
    %1074 = vmatpush1.bf16.msra.mxu0 %v700
    %1075 = vmatprep.subr.bf16.mxu0 %v709
    %1076 = vmatpush1.bf16.msra.mxu0 %v708
    %1077 = vmatprep.subr.bf16.mxu0 %v717
    %1078 = vmatpush1.bf16.msra.mxu0 %v716
    %1079 = vmatprep.subr.bf16.mxu0 %v725
    %1080 = vmatpush1.bf16.msra.mxu0 %v724
    %1081 = vmatprep.subr.bf16.mxu0 %v733
    %1082 = vmatpush1.bf16.msra.mxu0 %v732
    %1083 = vmatprep.subr.bf16.mxu0 %v741
    %1084 = vmatpush1.bf16.msra.mxu0 %v740
    %1085 = vmatprep.subr.bf16.mxu0 %v749
    %1086 = vmatpush1.bf16.msra.mxu0 %v748
    %1087 = vmatprep.subr.bf16.mxu0 %v757
    %1088 = vmatpush1.bf16.msra.mxu0 %v756
    %1089 = vmatprep.subr.bf16.mxu0 %v765
    %1090 = vmatpush1.bf16.msra.mxu0 %v764
    %1091 = vmatprep.subr.bf16.mxu0 %v773
    %1092 = vmatpush1.bf16.msra.mxu0 %v772
    %1093 = vmatprep.subr.bf16.mxu0 %v781
    %1094 = vmatpush1.bf16.msra.mxu0 %v780
    %1095 = vmatprep.subr.bf16.mxu0 %v789
    %1096 = vmatpush1.bf16.msra.mxu0 %v788
    %1097 = vmatprep.subr.bf16.mxu0 %v797
    %1098 = vmatpush1.bf16.msra.mxu0 %v796
    %1099 = vmatprep.subr.bf16.mxu0 %v805
    %1100 = vmatpush1.bf16.msra.mxu0 %v804
    %1101 = vmatprep.subr.bf16.mxu0 %v813
    %1102 = vmatpush1.bf16.msra.mxu0 %v812
    %1103 = vmatprep.subr.bf16.mxu0 %v821
    %1104 = vmatpush1.bf16.msra.mxu0 %v820
    %1105 = vmatprep.mubr.bf16.mxu0 %v139
    %1106 = vmatmul.mubr.bf16.gmra.mrb[0].mxu0 %v138
    %v1107 = vpop.f32.mrb[0].mxu0
    %v1108 = vadd.f32 %v297, %v1107
    %v1109 = vpop.f32.mrb[0].mxu0
    %v1110 = vadd.f32 %v301, %v1109
    %v1111 = vpop.f32.mrb[0].mxu0
    %v1112 = vpop.f32.mrb[0].mxu0
    %1113 = vdwg.mxu0
    %v1114 = vmax.f32 %v985, 0.0
    %v1115 = vmax.f32 %v987, 0.0
    %v1116 = vmax.f32 %v1026, 0.0
    %v1117 = vmax.f32 %v1028, 0.0
    %v1118 = vmax.f32 %v1067, 0.0
    %v1119 = vmax.f32 %v1069, 0.0
    %v1120 = vmax.f32 %v1108, 0.0
    %v1121 = vmax.f32 %v1110, 0.0
    %v1122 = vpack.c.bf16 %v1114, %v1114
    %v1123 = vpack.c.bf16 %v1115, %v1115
    %v1124 = vpack.c.bf16 %v1116, %v1116
    %v1125 = vpack.c.bf16 %v1117, %v1117
    %v1126 = vpack.c.bf16 %v1118, %v1118
    %v1127 = vpack.c.bf16 %v1119, %v1119
    %v1128 = vpack.c.bf16 %v1120, %v1120
    %v1129 = vpack.c.bf16 %v1121, %v1121
    %v1130 = vld [vmem:[#allocation4] sm:$0xff]
    %v1131 = vld [vmem:[#allocation4 + $0x8] sm:$0xff]
    %v1132 = vld [vmem:[#allocation4 + $0x10] sm:$0xff]
    %v1133 = vld [vmem:[#allocation4 + $0x18] sm:$0xff]
    %v1134 = vld [vmem:[#allocation4 + $0x20] sm:$0xff]
    %v1135 = vld [vmem:[#allocation4 + $0x28] sm:$0xff]
    %v1136 = vld [vmem:[#allocation4 + $0x30] sm:$0xff]
    %v1137 = vld [vmem:[#allocation4 + $0x38] sm:$0xff]
    %v1138 = vld [vmem:[#allocation4 + $0x40] sm:$0xff]
    %v1139 = vld [vmem:[#allocation4 + $0x48] sm:$0xff]
    %v1140 = vld [vmem:[#allocation4 + $0x50] sm:$0xff]
    %v1141 = vld [vmem:[#allocation4 + $0x58] sm:$0xff]
    %v1142 = vld [vmem:[#allocation4 + $0x60] sm:$0xff]
    %v1143 = vld [vmem:[#allocation4 + $0x68] sm:$0xff]
    %v1144 = vld [vmem:[#allocation4 + $0x70] sm:$0xff]
    %v1145 = vld [vmem:[#allocation4 + $0x78] sm:$0xff]
    %v1146 = vld [vmem:[#allocation4 + $0x80] sm:$0xff]
    %v1147 = vld [vmem:[#allocation4 + $0x88] sm:$0xff]
    %v1148 = vld [vmem:[#allocation4 + $0x90] sm:$0xff]
    %v1149 = vld [vmem:[#allocation4 + $0x98] sm:$0xff]
    %v1150 = vld [vmem:[#allocation4 + $0xa0] sm:$0xff]
    %v1151 = vld [vmem:[#allocation4 + $0xa8] sm:$0xff]
    %v1152 = vld [vmem:[#allocation4 + $0xb0] sm:$0xff]
    %v1153 = vld [vmem:[#allocation4 + $0xb8] sm:$0xff]
    %v1154 = vld [vmem:[#allocation4 + $0xc0] sm:$0xff]
    %v1155 = vld [vmem:[#allocation4 + $0xc8] sm:$0xff]
    %v1156 = vld [vmem:[#allocation4 + $0xd0] sm:$0xff]
    %v1157 = vld [vmem:[#allocation4 + $0xd8] sm:$0xff]
    %v1158 = vld [vmem:[#allocation4 + $0xe0] sm:$0xff]
    %v1159 = vld [vmem:[#allocation4 + $0xe8] sm:$0xff]
    %v1160 = vld [vmem:[#allocation4 + $0xf0] sm:$0xff]
    %v1161 = vld [vmem:[#allocation4 + $0xf8] sm:$0xff]
    %v1162 = vld [vmem:[#allocation4 + $0x100] sm:$0xff]
    %v1163 = vld [vmem:[#allocation4 + $0x108] sm:$0xff]
    %v1164 = vld [vmem:[#allocation4 + $0x110] sm:$0xff]
    %v1165 = vld [vmem:[#allocation4 + $0x118] sm:$0xff]
    %v1166 = vld [vmem:[#allocation4 + $0x120] sm:$0xff]
    %v1167 = vld [vmem:[#allocation4 + $0x128] sm:$0xff]
    %v1168 = vld [vmem:[#allocation4 + $0x130] sm:$0xff]
    %v1169 = vld [vmem:[#allocation4 + $0x138] sm:$0xff]
    %v1170 = vld [vmem:[#allocation4 + $0x140] sm:$0xff]
    %v1171 = vld [vmem:[#allocation4 + $0x148] sm:$0xff]
    %v1172 = vld [vmem:[#allocation4 + $0x150] sm:$0xff]
    %v1173 = vld [vmem:[#allocation4 + $0x158] sm:$0xff]
    %v1174 = vld [vmem:[#allocation4 + $0x160] sm:$0xff]
    %v1175 = vld [vmem:[#allocation4 + $0x168] sm:$0xff]
    %v1176 = vld [vmem:[#allocation4 + $0x170] sm:$0xff]
    %v1177 = vld [vmem:[#allocation4 + $0x178] sm:$0xff]
    %v1178 = vld [vmem:[#allocation4 + $0x180] sm:$0xff]
    %v1179 = vld [vmem:[#allocation4 + $0x188] sm:$0xff]
    %v1180 = vld [vmem:[#allocation4 + $0x190] sm:$0xff]
    %v1181 = vld [vmem:[#allocation4 + $0x198] sm:$0xff]
    %v1182 = vld [vmem:[#allocation4 + $0x1a0] sm:$0xff]
    %v1183 = vld [vmem:[#allocation4 + $0x1a8] sm:$0xff]
    %v1184 = vld [vmem:[#allocation4 + $0x1b0] sm:$0xff]
    %v1185 = vld [vmem:[#allocation4 + $0x1b8] sm:$0xff]
    %v1186 = vld [vmem:[#allocation4 + $0x1c0] sm:$0xff]
    %v1187 = vld [vmem:[#allocation4 + $0x1c8] sm:$0xff]
    %v1188 = vld [vmem:[#allocation4 + $0x1d0] sm:$0xff]
    %v1189 = vld [vmem:[#allocation4 + $0x1d8] sm:$0xff]
    %v1190 = vld [vmem:[#allocation4 + $0x1e0] sm:$0xff]
    %v1191 = vld [vmem:[#allocation4 + $0x1e8] sm:$0xff]
    %v1192 = vld [vmem:[#allocation4 + $0x1f0] sm:$0xff]
    %v1193 = vld [vmem:[#allocation4 + $0x1f8] sm:$0xff]
    %v1194 = vld [vmem:[#allocation4 + $0x200] sm:$0xff]
    %v1195 = vld [vmem:[#allocation4 + $0x208] sm:$0xff]
    %v1196 = vld [vmem:[#allocation4 + $0x210] sm:$0xff]
    %v1197 = vld [vmem:[#allocation4 + $0x218] sm:$0xff]
    %v1198 = vld [vmem:[#allocation4 + $0x220] sm:$0xff]
    %v1199 = vld [vmem:[#allocation4 + $0x228] sm:$0xff]
    %v1200 = vld [vmem:[#allocation4 + $0x230] sm:$0xff]
    %v1201 = vld [vmem:[#allocation4 + $0x238] sm:$0xff]
    %v1202 = vld [vmem:[#allocation4 + $0x240] sm:$0xff]
    %v1203 = vld [vmem:[#allocation4 + $0x248] sm:$0xff]
    %v1204 = vld [vmem:[#allocation4 + $0x250] sm:$0xff]
    %v1205 = vld [vmem:[#allocation4 + $0x258] sm:$0xff]
    %v1206 = vld [vmem:[#allocation4 + $0x260] sm:$0xff]
    %v1207 = vld [vmem:[#allocation4 + $0x268] sm:$0xff]
    %v1208 = vld [vmem:[#allocation4 + $0x270] sm:$0xff]
    %v1209 = vld [vmem:[#allocation4 + $0x278] sm:$0xff]
    %v1210 = vld [vmem:[#allocation4 + $0x280] sm:$0xff]
    %v1211 = vld [vmem:[#allocation4 + $0x288] sm:$0xff]
    %v1212 = vld [vmem:[#allocation4 + $0x290] sm:$0xff]
    %v1213 = vld [vmem:[#allocation4 + $0x298] sm:$0xff]
    %v1214 = vld [vmem:[#allocation4 + $0x2a0] sm:$0xff]
    %v1215 = vld [vmem:[#allocation4 + $0x2a8] sm:$0xff]
    %v1216 = vld [vmem:[#allocation4 + $0x2b0] sm:$0xff]
    %v1217 = vld [vmem:[#allocation4 + $0x2b8] sm:$0xff]
    %v1218 = vld [vmem:[#allocation4 + $0x2c0] sm:$0xff]
    %v1219 = vld [vmem:[#allocation4 + $0x2c8] sm:$0xff]
    %v1220 = vld [vmem:[#allocation4 + $0x2d0] sm:$0xff]
    %v1221 = vld [vmem:[#allocation4 + $0x2d8] sm:$0xff]
    %v1222 = vld [vmem:[#allocation4 + $0x2e0] sm:$0xff]
    %v1223 = vld [vmem:[#allocation4 + $0x2e8] sm:$0xff]
    %v1224 = vld [vmem:[#allocation4 + $0x2f0] sm:$0xff]
    %v1225 = vld [vmem:[#allocation4 + $0x2f8] sm:$0xff]
    %v1226 = vld [vmem:[#allocation4 + $0x300] sm:$0xff]
    %v1227 = vld [vmem:[#allocation4 + $0x308] sm:$0xff]
    %v1228 = vld [vmem:[#allocation4 + $0x310] sm:$0xff]
    %v1229 = vld [vmem:[#allocation4 + $0x318] sm:$0xff]
    %v1230 = vld [vmem:[#allocation4 + $0x320] sm:$0xff]
    %v1231 = vld [vmem:[#allocation4 + $0x328] sm:$0xff]
    %v1232 = vld [vmem:[#allocation4 + $0x330] sm:$0xff]
    %v1233 = vld [vmem:[#allocation4 + $0x338] sm:$0xff]
    %v1234 = vld [vmem:[#allocation4 + $0x340] sm:$0xff]
    %v1235 = vld [vmem:[#allocation4 + $0x348] sm:$0xff]
    %v1236 = vld [vmem:[#allocation4 + $0x350] sm:$0xff]
    %v1237 = vld [vmem:[#allocation4 + $0x358] sm:$0xff]
    %v1238 = vld [vmem:[#allocation4 + $0x360] sm:$0xff]
    %v1239 = vld [vmem:[#allocation4 + $0x368] sm:$0xff]
    %v1240 = vld [vmem:[#allocation4 + $0x370] sm:$0xff]
    %v1241 = vld [vmem:[#allocation4 + $0x378] sm:$0xff]
    %v1242 = vld [vmem:[#allocation4 + $0x380] sm:$0xff]
    %v1243 = vld [vmem:[#allocation4 + $0x388] sm:$0xff]
    %v1244 = vld [vmem:[#allocation4 + $0x390] sm:$0xff]
    %v1245 = vld [vmem:[#allocation4 + $0x398] sm:$0xff]
    %v1246 = vld [vmem:[#allocation4 + $0x3a0] sm:$0xff]
    %v1247 = vld [vmem:[#allocation4 + $0x3a8] sm:$0xff]
    %v1248 = vld [vmem:[#allocation4 + $0x3b0] sm:$0xff]
    %v1249 = vld [vmem:[#allocation4 + $0x3b8] sm:$0xff]
    %v1250 = vld [vmem:[#allocation4 + $0x3c0] sm:$0xff]
    %v1251 = vld [vmem:[#allocation4 + $0x3c8] sm:$0xff]
    %v1252 = vld [vmem:[#allocation4 + $0x3d0] sm:$0xff]
    %v1253 = vld [vmem:[#allocation4 + $0x3d8] sm:$0xff]
    %v1254 = vld [vmem:[#allocation4 + $0x3e0] sm:$0xff]
    %v1255 = vld [vmem:[#allocation4 + $0x3e8] sm:$0xff]
    %v1256 = vld [vmem:[#allocation4 + $0x3f0] sm:$0xff]
    %v1257 = vld [vmem:[#allocation4 + $0x3f8] sm:$0xff]
    %v1258 = vld [vmem:[#allocation4 + $0x400] sm:$0xff]
    %v1259 = vld [vmem:[#allocation4 + $0x408] sm:$0xff]
    %v1260 = vld [vmem:[#allocation4 + $0x410] sm:$0xff]
    %v1261 = vld [vmem:[#allocation4 + $0x418] sm:$0xff]
    %v1262 = vld [vmem:[#allocation4 + $0x420] sm:$0xff]
    %v1263 = vld [vmem:[#allocation4 + $0x428] sm:$0xff]
    %v1264 = vld [vmem:[#allocation4 + $0x430] sm:$0xff]
    %v1265 = vld [vmem:[#allocation4 + $0x438] sm:$0xff]
    %v1266 = vld [vmem:[#allocation4 + $0x440] sm:$0xff]
    %v1267 = vld [vmem:[#allocation4 + $0x448] sm:$0xff]
    %v1268 = vld [vmem:[#allocation4 + $0x450] sm:$0xff]
    %v1269 = vld [vmem:[#allocation4 + $0x458] sm:$0xff]
    %v1270 = vld [vmem:[#allocation4 + $0x460] sm:$0xff]
    %v1271 = vld [vmem:[#allocation4 + $0x468] sm:$0xff]
    %v1272 = vld [vmem:[#allocation4 + $0x470] sm:$0xff]
    %v1273 = vld [vmem:[#allocation4 + $0x478] sm:$0xff]
    %v1274 = vld [vmem:[#allocation4 + $0x480] sm:$0xff]
    %v1275 = vld [vmem:[#allocation4 + $0x488] sm:$0xff]
    %v1276 = vld [vmem:[#allocation4 + $0x490] sm:$0xff]
    %v1277 = vld [vmem:[#allocation4 + $0x498] sm:$0xff]
    %v1278 = vld [vmem:[#allocation4 + $0x4a0] sm:$0xff]
    %v1279 = vld [vmem:[#allocation4 + $0x4a8] sm:$0xff]
    %v1280 = vld [vmem:[#allocation4 + $0x4b0] sm:$0xff]
    %v1281 = vld [vmem:[#allocation4 + $0x4b8] sm:$0xff]
    %v1282 = vld [vmem:[#allocation4 + $0x4c0] sm:$0xff]
    %v1283 = vld [vmem:[#allocation4 + $0x4c8] sm:$0xff]
    %v1284 = vld [vmem:[#allocation4 + $0x4d0] sm:$0xff]
    %v1285 = vld [vmem:[#allocation4 + $0x4d8] sm:$0xff]
    %v1286 = vld [vmem:[#allocation4 + $0x4e0] sm:$0xff]
    %v1287 = vld [vmem:[#allocation4 + $0x4e8] sm:$0xff]
    %v1288 = vld [vmem:[#allocation4 + $0x4f0] sm:$0xff]
    %v1289 = vld [vmem:[#allocation4 + $0x4f8] sm:$0xff]
    %v1290 = vld [vmem:[#allocation4 + $0x500] sm:$0xff]
    %v1291 = vld [vmem:[#allocation4 + $0x508] sm:$0xff]
    %v1292 = vld [vmem:[#allocation4 + $0x510] sm:$0xff]
    %v1293 = vld [vmem:[#allocation4 + $0x518] sm:$0xff]
    %v1294 = vld [vmem:[#allocation4 + $0x520] sm:$0xff]
    %v1295 = vld [vmem:[#allocation4 + $0x528] sm:$0xff]
    %v1296 = vld [vmem:[#allocation4 + $0x530] sm:$0xff]
    %v1297 = vld [vmem:[#allocation4 + $0x538] sm:$0xff]
    %v1298 = vld [vmem:[#allocation4 + $0x540] sm:$0xff]
    %v1299 = vld [vmem:[#allocation4 + $0x548] sm:$0xff]
    %v1300 = vld [vmem:[#allocation4 + $0x550] sm:$0xff]
    %v1301 = vld [vmem:[#allocation4 + $0x558] sm:$0xff]
    %v1302 = vld [vmem:[#allocation4 + $0x560] sm:$0xff]
    %v1303 = vld [vmem:[#allocation4 + $0x568] sm:$0xff]
    %v1304 = vld [vmem:[#allocation4 + $0x570] sm:$0xff]
    %v1305 = vld [vmem:[#allocation4 + $0x578] sm:$0xff]
    %v1306 = vld [vmem:[#allocation4 + $0x580] sm:$0xff]
    %v1307 = vld [vmem:[#allocation4 + $0x588] sm:$0xff]
    %v1308 = vld [vmem:[#allocation4 + $0x590] sm:$0xff]
    %v1309 = vld [vmem:[#allocation4 + $0x598] sm:$0xff]
    %v1310 = vld [vmem:[#allocation4 + $0x5a0] sm:$0xff]
    %v1311 = vld [vmem:[#allocation4 + $0x5a8] sm:$0xff]
    %v1312 = vld [vmem:[#allocation4 + $0x5b0] sm:$0xff]
    %v1313 = vld [vmem:[#allocation4 + $0x5b8] sm:$0xff]
    %v1314 = vld [vmem:[#allocation4 + $0x5c0] sm:$0xff]
    %v1315 = vld [vmem:[#allocation4 + $0x5c8] sm:$0xff]
    %v1316 = vld [vmem:[#allocation4 + $0x5d0] sm:$0xff]
    %v1317 = vld [vmem:[#allocation4 + $0x5d8] sm:$0xff]
    %v1318 = vld [vmem:[#allocation4 + $0x5e0] sm:$0xff]
    %v1319 = vld [vmem:[#allocation4 + $0x5e8] sm:$0xff]
    %v1320 = vld [vmem:[#allocation4 + $0x5f0] sm:$0xff]
    %v1321 = vld [vmem:[#allocation4 + $0x5f8] sm:$0xff]
    %v1322 = vld [vmem:[#allocation4 + $0x600] sm:$0xff]
    %v1323 = vld [vmem:[#allocation4 + $0x608] sm:$0xff]
    %v1324 = vld [vmem:[#allocation4 + $0x610] sm:$0xff]
    %v1325 = vld [vmem:[#allocation4 + $0x618] sm:$0xff]
    %v1326 = vld [vmem:[#allocation4 + $0x620] sm:$0xff]
    %v1327 = vld [vmem:[#allocation4 + $0x628] sm:$0xff]
    %v1328 = vld [vmem:[#allocation4 + $0x630] sm:$0xff]
    %v1329 = vld [vmem:[#allocation4 + $0x638] sm:$0xff]
    %v1330 = vld [vmem:[#allocation4 + $0x640] sm:$0xff]
    %v1331 = vld [vmem:[#allocation4 + $0x648] sm:$0xff]
    %v1332 = vld [vmem:[#allocation4 + $0x650] sm:$0xff]
    %v1333 = vld [vmem:[#allocation4 + $0x658] sm:$0xff]
    %v1334 = vld [vmem:[#allocation4 + $0x660] sm:$0xff]
    %v1335 = vld [vmem:[#allocation4 + $0x668] sm:$0xff]
    %v1336 = vld [vmem:[#allocation4 + $0x670] sm:$0xff]
    %v1337 = vld [vmem:[#allocation4 + $0x678] sm:$0xff]
    %v1338 = vld [vmem:[#allocation4 + $0x680] sm:$0xff]
    %v1339 = vld [vmem:[#allocation4 + $0x688] sm:$0xff]
    %v1340 = vld [vmem:[#allocation4 + $0x690] sm:$0xff]
    %v1341 = vld [vmem:[#allocation4 + $0x698] sm:$0xff]
    %v1342 = vld [vmem:[#allocation4 + $0x6a0] sm:$0xff]
    %v1343 = vld [vmem:[#allocation4 + $0x6a8] sm:$0xff]
    %v1344 = vld [vmem:[#allocation4 + $0x6b0] sm:$0xff]
    %v1345 = vld [vmem:[#allocation4 + $0x6b8] sm:$0xff]
    %v1346 = vld [vmem:[#allocation4 + $0x6c0] sm:$0xff]
    %v1347 = vld [vmem:[#allocation4 + $0x6c8] sm:$0xff]
    %v1348 = vld [vmem:[#allocation4 + $0x6d0] sm:$0xff]
    %v1349 = vld [vmem:[#allocation4 + $0x6d8] sm:$0xff]
    %v1350 = vld [vmem:[#allocation4 + $0x6e0] sm:$0xff]
    %v1351 = vld [vmem:[#allocation4 + $0x6e8] sm:$0xff]
    %v1352 = vld [vmem:[#allocation4 + $0x6f0] sm:$0xff]
    %v1353 = vld [vmem:[#allocation4 + $0x6f8] sm:$0xff]
    %v1354 = vld [vmem:[#allocation4 + $0x700] sm:$0xff]
    %v1355 = vld [vmem:[#allocation4 + $0x708] sm:$0xff]
    %v1356 = vld [vmem:[#allocation4 + $0x710] sm:$0xff]
    %v1357 = vld [vmem:[#allocation4 + $0x718] sm:$0xff]
    %v1358 = vld [vmem:[#allocation4 + $0x720] sm:$0xff]
    %v1359 = vld [vmem:[#allocation4 + $0x728] sm:$0xff]
    %v1360 = vld [vmem:[#allocation4 + $0x730] sm:$0xff]
    %v1361 = vld [vmem:[#allocation4 + $0x738] sm:$0xff]
    %v1362 = vld [vmem:[#allocation4 + $0x740] sm:$0xff]
    %v1363 = vld [vmem:[#allocation4 + $0x748] sm:$0xff]
    %v1364 = vld [vmem:[#allocation4 + $0x750] sm:$0xff]
    %v1365 = vld [vmem:[#allocation4 + $0x758] sm:$0xff]
    %v1366 = vld [vmem:[#allocation4 + $0x760] sm:$0xff]
    %v1367 = vld [vmem:[#allocation4 + $0x768] sm:$0xff]
    %v1368 = vld [vmem:[#allocation4 + $0x770] sm:$0xff]
    %v1369 = vld [vmem:[#allocation4 + $0x778] sm:$0xff]
    %v1370 = vld [vmem:[#allocation4 + $0x780] sm:$0xff]
    %v1371 = vld [vmem:[#allocation4 + $0x788] sm:$0xff]
    %v1372 = vld [vmem:[#allocation4 + $0x790] sm:$0xff]
    %v1373 = vld [vmem:[#allocation4 + $0x798] sm:$0xff]
    %v1374 = vld [vmem:[#allocation4 + $0x7a0] sm:$0xff]
    %v1375 = vld [vmem:[#allocation4 + $0x7a8] sm:$0xff]
    %v1376 = vld [vmem:[#allocation4 + $0x7b0] sm:$0xff]
    %v1377 = vld [vmem:[#allocation4 + $0x7b8] sm:$0xff]
    %v1378 = vld [vmem:[#allocation4 + $0x7c0] sm:$0xff]
    %v1379 = vld [vmem:[#allocation4 + $0x7c8] sm:$0xff]
    %v1380 = vld [vmem:[#allocation4 + $0x7d0] sm:$0xff]
    %v1381 = vld [vmem:[#allocation4 + $0x7d8] sm:$0xff]
    %v1382 = vld [vmem:[#allocation4 + $0x7e0] sm:$0xff]
    %v1383 = vld [vmem:[#allocation4 + $0x7e8] sm:$0xff]
    %v1384 = vld [vmem:[#allocation4 + $0x7f0] sm:$0xff]
    %v1385 = vld [vmem:[#allocation4 + $0x7f8] sm:$0xff]
    %v1386 = vld [vmem:[%s4] sm:$0xf]
    %v1388 = vlaneseq
    %v1389 = vshrl.u32 %v1388, 7
    %v1390 = vsub.s32 0, %v1389
    %v1391 = vrot.slane %v1386, %v1390
    %v1392 = vlaneseq
    %v1393 = vshrl.u32 %v1392, 7
    %v1394 = vsub.s32 1, %v1393
    %v1395 = vrot.slane %v1386, %v1394
    %v1396 = vlaneseq
    %v1397 = vshrl.u32 %v1396, 7
    %v1398 = vsub.s32 2, %v1397
    %v1399 = vrot.slane %v1386, %v1398
    %v1400 = vlaneseq
    %v1401 = vshrl.u32 %v1400, 7
    %v1402 = vsub.s32 3, %v1401
    %v1403 = vrot.slane %v1386, %v1402
    %v1664 = vunpack.c.l.b16 %v1130
    %v1665 = vunpack.c.h.b16 %v1130
    %v1666 = vunpack.c.l.b16 %v1131
    %v1667 = vunpack.c.h.b16 %v1131
    %v1668 = vunpack.c.l.b16 %v1132
    %v1669 = vunpack.c.h.b16 %v1132
    %v1670 = vunpack.c.l.b16 %v1133
    %v1671 = vunpack.c.h.b16 %v1133
    %v1672 = vunpack.c.l.b16 %v1134
    %v1673 = vunpack.c.h.b16 %v1134
    %v1674 = vunpack.c.l.b16 %v1135
    %v1675 = vunpack.c.h.b16 %v1135
    %v1676 = vunpack.c.l.b16 %v1136
    %v1677 = vunpack.c.h.b16 %v1136
    %v1678 = vunpack.c.l.b16 %v1137
    %v1679 = vunpack.c.h.b16 %v1137
    %v1680 = vunpack.c.l.b16 %v1138
    %v1681 = vunpack.c.h.b16 %v1138
    %v1682 = vunpack.c.l.b16 %v1139
    %v1683 = vunpack.c.h.b16 %v1139
    %v1684 = vunpack.c.l.b16 %v1140
    %v1685 = vunpack.c.h.b16 %v1140
    %v1686 = vunpack.c.l.b16 %v1141
    %v1687 = vunpack.c.h.b16 %v1141
    %v1688 = vunpack.c.l.b16 %v1142
    %v1689 = vunpack.c.h.b16 %v1142
    %v1690 = vunpack.c.l.b16 %v1143
    %v1691 = vunpack.c.h.b16 %v1143
    %v1692 = vunpack.c.l.b16 %v1144
    %v1693 = vunpack.c.h.b16 %v1144
    %v1694 = vunpack.c.l.b16 %v1145
    %v1695 = vunpack.c.h.b16 %v1145
    %v1696 = vunpack.c.l.b16 %v1146
    %v1697 = vunpack.c.h.b16 %v1146
    %v1698 = vunpack.c.l.b16 %v1147
    %v1699 = vunpack.c.h.b16 %v1147
    %v1700 = vunpack.c.l.b16 %v1148
    %v1701 = vunpack.c.h.b16 %v1148
    %v1702 = vunpack.c.l.b16 %v1149
    %v1703 = vunpack.c.h.b16 %v1149
    %v1704 = vunpack.c.l.b16 %v1150
    %v1705 = vunpack.c.h.b16 %v1150
    %v1706 = vunpack.c.l.b16 %v1151
    %v1707 = vunpack.c.h.b16 %v1151
    %v1708 = vunpack.c.l.b16 %v1152
    %v1709 = vunpack.c.h.b16 %v1152
    %v1710 = vunpack.c.l.b16 %v1153
    %v1711 = vunpack.c.h.b16 %v1153
    %v1712 = vunpack.c.l.b16 %v1154
    %v1713 = vunpack.c.h.b16 %v1154
    %v1714 = vunpack.c.l.b16 %v1155
    %v1715 = vunpack.c.h.b16 %v1155
    %v1716 = vunpack.c.l.b16 %v1156
    %v1717 = vunpack.c.h.b16 %v1156
    %v1718 = vunpack.c.l.b16 %v1157
    %v1719 = vunpack.c.h.b16 %v1157
    %v1720 = vunpack.c.l.b16 %v1158
    %v1721 = vunpack.c.h.b16 %v1158
    %v1722 = vunpack.c.l.b16 %v1159
    %v1723 = vunpack.c.h.b16 %v1159
    %v1724 = vunpack.c.l.b16 %v1160
    %v1725 = vunpack.c.h.b16 %v1160
    %v1726 = vunpack.c.l.b16 %v1161
    %v1727 = vunpack.c.h.b16 %v1161
    %v1728 = vunpack.c.l.b16 %v1162
    %v1729 = vunpack.c.h.b16 %v1162
    %v1730 = vunpack.c.l.b16 %v1163
    %v1731 = vunpack.c.h.b16 %v1163
    %v1732 = vunpack.c.l.b16 %v1164
    %v1733 = vunpack.c.h.b16 %v1164
    %v1734 = vunpack.c.l.b16 %v1165
    %v1735 = vunpack.c.h.b16 %v1165
    %v1736 = vunpack.c.l.b16 %v1166
    %v1737 = vunpack.c.h.b16 %v1166
    %v1738 = vunpack.c.l.b16 %v1167
    %v1739 = vunpack.c.h.b16 %v1167
    %v1740 = vunpack.c.l.b16 %v1168
    %v1741 = vunpack.c.h.b16 %v1168
    %v1742 = vunpack.c.l.b16 %v1169
    %v1743 = vunpack.c.h.b16 %v1169
    %v1744 = vunpack.c.l.b16 %v1170
    %v1745 = vunpack.c.h.b16 %v1170
    %v1746 = vunpack.c.l.b16 %v1171
    %v1747 = vunpack.c.h.b16 %v1171
    %v1748 = vunpack.c.l.b16 %v1172
    %v1749 = vunpack.c.h.b16 %v1172
    %v1750 = vunpack.c.l.b16 %v1173
    %v1751 = vunpack.c.h.b16 %v1173
    %v1752 = vunpack.c.l.b16 %v1174
    %v1753 = vunpack.c.h.b16 %v1174
    %v1754 = vunpack.c.l.b16 %v1175
    %v1755 = vunpack.c.h.b16 %v1175
    %v1756 = vunpack.c.l.b16 %v1176
    %v1757 = vunpack.c.h.b16 %v1176
    %v1758 = vunpack.c.l.b16 %v1177
    %v1759 = vunpack.c.h.b16 %v1177
    %v1760 = vunpack.c.l.b16 %v1178
    %v1761 = vunpack.c.h.b16 %v1178
    %v1762 = vunpack.c.l.b16 %v1179
    %v1763 = vunpack.c.h.b16 %v1179
    %v1764 = vunpack.c.l.b16 %v1180
    %v1765 = vunpack.c.h.b16 %v1180
    %v1766 = vunpack.c.l.b16 %v1181
    %v1767 = vunpack.c.h.b16 %v1181
    %v1768 = vunpack.c.l.b16 %v1182
    %v1769 = vunpack.c.h.b16 %v1182
    %v1770 = vunpack.c.l.b16 %v1183
    %v1771 = vunpack.c.h.b16 %v1183
    %v1772 = vunpack.c.l.b16 %v1184
    %v1773 = vunpack.c.h.b16 %v1184
    %v1774 = vunpack.c.l.b16 %v1185
    %v1775 = vunpack.c.h.b16 %v1185
    %v1776 = vunpack.c.l.b16 %v1186
    %v1777 = vunpack.c.h.b16 %v1186
    %v1778 = vunpack.c.l.b16 %v1187
    %v1779 = vunpack.c.h.b16 %v1187
    %v1780 = vunpack.c.l.b16 %v1188
    %v1781 = vunpack.c.h.b16 %v1188
    %v1782 = vunpack.c.l.b16 %v1189
    %v1783 = vunpack.c.h.b16 %v1189
    %v1784 = vunpack.c.l.b16 %v1190
    %v1785 = vunpack.c.h.b16 %v1190
    %v1786 = vunpack.c.l.b16 %v1191
    %v1787 = vunpack.c.h.b16 %v1191
    %v1788 = vunpack.c.l.b16 %v1192
    %v1789 = vunpack.c.h.b16 %v1192
    %v1790 = vunpack.c.l.b16 %v1193
    %v1791 = vunpack.c.h.b16 %v1193
    %v1792 = vunpack.c.l.b16 %v1194
    %v1793 = vunpack.c.h.b16 %v1194
    %v1794 = vunpack.c.l.b16 %v1195
    %v1795 = vunpack.c.h.b16 %v1195
    %v1796 = vunpack.c.l.b16 %v1196
    %v1797 = vunpack.c.h.b16 %v1196
    %v1798 = vunpack.c.l.b16 %v1197
    %v1799 = vunpack.c.h.b16 %v1197
    %v1800 = vunpack.c.l.b16 %v1198
    %v1801 = vunpack.c.h.b16 %v1198
    %v1802 = vunpack.c.l.b16 %v1199
    %v1803 = vunpack.c.h.b16 %v1199
    %v1804 = vunpack.c.l.b16 %v1200
    %v1805 = vunpack.c.h.b16 %v1200
    %v1806 = vunpack.c.l.b16 %v1201
    %v1807 = vunpack.c.h.b16 %v1201
    %v1808 = vunpack.c.l.b16 %v1202
    %v1809 = vunpack.c.h.b16 %v1202
    %v1810 = vunpack.c.l.b16 %v1203
    %v1811 = vunpack.c.h.b16 %v1203
    %v1812 = vunpack.c.l.b16 %v1204
    %v1813 = vunpack.c.h.b16 %v1204
    %v1814 = vunpack.c.l.b16 %v1205
    %v1815 = vunpack.c.h.b16 %v1205
    %v1816 = vunpack.c.l.b16 %v1206
    %v1817 = vunpack.c.h.b16 %v1206
    %v1818 = vunpack.c.l.b16 %v1207
    %v1819 = vunpack.c.h.b16 %v1207
    %v1820 = vunpack.c.l.b16 %v1208
    %v1821 = vunpack.c.h.b16 %v1208
    %v1822 = vunpack.c.l.b16 %v1209
    %v1823 = vunpack.c.h.b16 %v1209
    %v1824 = vunpack.c.l.b16 %v1210
    %v1825 = vunpack.c.h.b16 %v1210
    %v1826 = vunpack.c.l.b16 %v1211
    %v1827 = vunpack.c.h.b16 %v1211
    %v1828 = vunpack.c.l.b16 %v1212
    %v1829 = vunpack.c.h.b16 %v1212
    %v1830 = vunpack.c.l.b16 %v1213
    %v1831 = vunpack.c.h.b16 %v1213
    %v1832 = vunpack.c.l.b16 %v1214
    %v1833 = vunpack.c.h.b16 %v1214
    %v1834 = vunpack.c.l.b16 %v1215
    %v1835 = vunpack.c.h.b16 %v1215
    %v1836 = vunpack.c.l.b16 %v1216
    %v1837 = vunpack.c.h.b16 %v1216
    %v1838 = vunpack.c.l.b16 %v1217
    %v1839 = vunpack.c.h.b16 %v1217
    %v1840 = vunpack.c.l.b16 %v1218
    %v1841 = vunpack.c.h.b16 %v1218
    %v1842 = vunpack.c.l.b16 %v1219
    %v1843 = vunpack.c.h.b16 %v1219
    %v1844 = vunpack.c.l.b16 %v1220
    %v1845 = vunpack.c.h.b16 %v1220
    %v1846 = vunpack.c.l.b16 %v1221
    %v1847 = vunpack.c.h.b16 %v1221
    %v1848 = vunpack.c.l.b16 %v1222
    %v1849 = vunpack.c.h.b16 %v1222
    %v1850 = vunpack.c.l.b16 %v1223
    %v1851 = vunpack.c.h.b16 %v1223
    %v1852 = vunpack.c.l.b16 %v1224
    %v1853 = vunpack.c.h.b16 %v1224
    %v1854 = vunpack.c.l.b16 %v1225
    %v1855 = vunpack.c.h.b16 %v1225
    %v1856 = vunpack.c.l.b16 %v1226
    %v1857 = vunpack.c.h.b16 %v1226
    %v1858 = vunpack.c.l.b16 %v1227
    %v1859 = vunpack.c.h.b16 %v1227
    %v1860 = vunpack.c.l.b16 %v1228
    %v1861 = vunpack.c.h.b16 %v1228
    %v1862 = vunpack.c.l.b16 %v1229
    %v1863 = vunpack.c.h.b16 %v1229
    %v1864 = vunpack.c.l.b16 %v1230
    %v1865 = vunpack.c.h.b16 %v1230
    %v1866 = vunpack.c.l.b16 %v1231
    %v1867 = vunpack.c.h.b16 %v1231
    %v1868 = vunpack.c.l.b16 %v1232
    %v1869 = vunpack.c.h.b16 %v1232
    %v1870 = vunpack.c.l.b16 %v1233
    %v1871 = vunpack.c.h.b16 %v1233
    %v1872 = vunpack.c.l.b16 %v1234
    %v1873 = vunpack.c.h.b16 %v1234
    %v1874 = vunpack.c.l.b16 %v1235
    %v1875 = vunpack.c.h.b16 %v1235
    %v1876 = vunpack.c.l.b16 %v1236
    %v1877 = vunpack.c.h.b16 %v1236
    %v1878 = vunpack.c.l.b16 %v1237
    %v1879 = vunpack.c.h.b16 %v1237
    %v1880 = vunpack.c.l.b16 %v1238
    %v1881 = vunpack.c.h.b16 %v1238
    %v1882 = vunpack.c.l.b16 %v1239
    %v1883 = vunpack.c.h.b16 %v1239
    %v1884 = vunpack.c.l.b16 %v1240
    %v1885 = vunpack.c.h.b16 %v1240
    %v1886 = vunpack.c.l.b16 %v1241
    %v1887 = vunpack.c.h.b16 %v1241
    %v1888 = vunpack.c.l.b16 %v1242
    %v1889 = vunpack.c.h.b16 %v1242
    %v1890 = vunpack.c.l.b16 %v1243
    %v1891 = vunpack.c.h.b16 %v1243
    %v1892 = vunpack.c.l.b16 %v1244
    %v1893 = vunpack.c.h.b16 %v1244
    %v1894 = vunpack.c.l.b16 %v1245
    %v1895 = vunpack.c.h.b16 %v1245
    %v1896 = vunpack.c.l.b16 %v1246
    %v1897 = vunpack.c.h.b16 %v1246
    %v1898 = vunpack.c.l.b16 %v1247
    %v1899 = vunpack.c.h.b16 %v1247
    %v1900 = vunpack.c.l.b16 %v1248
    %v1901 = vunpack.c.h.b16 %v1248
    %v1902 = vunpack.c.l.b16 %v1249
    %v1903 = vunpack.c.h.b16 %v1249
    %v1904 = vunpack.c.l.b16 %v1250
    %v1905 = vunpack.c.h.b16 %v1250
    %v1906 = vunpack.c.l.b16 %v1251
    %v1907 = vunpack.c.h.b16 %v1251
    %v1908 = vunpack.c.l.b16 %v1252
    %v1909 = vunpack.c.h.b16 %v1252
    %v1910 = vunpack.c.l.b16 %v1253
    %v1911 = vunpack.c.h.b16 %v1253
    %v1912 = vunpack.c.l.b16 %v1254
    %v1913 = vunpack.c.h.b16 %v1254
    %v1914 = vunpack.c.l.b16 %v1255
    %v1915 = vunpack.c.h.b16 %v1255
    %v1916 = vunpack.c.l.b16 %v1256
    %v1917 = vunpack.c.h.b16 %v1256
    %v1918 = vunpack.c.l.b16 %v1257
    %v1919 = vunpack.c.h.b16 %v1257
    %v1920 = vunpack.c.l.b16 %v1258
    %v1921 = vunpack.c.h.b16 %v1258
    %v1922 = vunpack.c.l.b16 %v1259
    %v1923 = vunpack.c.h.b16 %v1259
    %v1924 = vunpack.c.l.b16 %v1260
    %v1925 = vunpack.c.h.b16 %v1260
    %v1926 = vunpack.c.l.b16 %v1261
    %v1927 = vunpack.c.h.b16 %v1261
    %v1928 = vunpack.c.l.b16 %v1262
    %v1929 = vunpack.c.h.b16 %v1262
    %v1930 = vunpack.c.l.b16 %v1263
    %v1931 = vunpack.c.h.b16 %v1263
    %v1932 = vunpack.c.l.b16 %v1264
    %v1933 = vunpack.c.h.b16 %v1264
    %v1934 = vunpack.c.l.b16 %v1265
    %v1935 = vunpack.c.h.b16 %v1265
    %v1936 = vunpack.c.l.b16 %v1266
    %v1937 = vunpack.c.h.b16 %v1266
    %v1938 = vunpack.c.l.b16 %v1267
    %v1939 = vunpack.c.h.b16 %v1267
    %v1940 = vunpack.c.l.b16 %v1268
    %v1941 = vunpack.c.h.b16 %v1268
    %v1942 = vunpack.c.l.b16 %v1269
    %v1943 = vunpack.c.h.b16 %v1269
    %v1944 = vunpack.c.l.b16 %v1270
    %v1945 = vunpack.c.h.b16 %v1270
    %v1946 = vunpack.c.l.b16 %v1271
    %v1947 = vunpack.c.h.b16 %v1271
    %v1948 = vunpack.c.l.b16 %v1272
    %v1949 = vunpack.c.h.b16 %v1272
    %v1950 = vunpack.c.l.b16 %v1273
    %v1951 = vunpack.c.h.b16 %v1273
    %v1952 = vunpack.c.l.b16 %v1274
    %v1953 = vunpack.c.h.b16 %v1274
    %v1954 = vunpack.c.l.b16 %v1275
    %v1955 = vunpack.c.h.b16 %v1275
    %v1956 = vunpack.c.l.b16 %v1276
    %v1957 = vunpack.c.h.b16 %v1276
    %v1958 = vunpack.c.l.b16 %v1277
    %v1959 = vunpack.c.h.b16 %v1277
    %v1960 = vunpack.c.l.b16 %v1278
    %v1961 = vunpack.c.h.b16 %v1278
    %v1962 = vunpack.c.l.b16 %v1279
    %v1963 = vunpack.c.h.b16 %v1279
    %v1964 = vunpack.c.l.b16 %v1280
    %v1965 = vunpack.c.h.b16 %v1280
    %v1966 = vunpack.c.l.b16 %v1281
    %v1967 = vunpack.c.h.b16 %v1281
    %v1968 = vunpack.c.l.b16 %v1282
    %v1969 = vunpack.c.h.b16 %v1282
    %v1970 = vunpack.c.l.b16 %v1283
    %v1971 = vunpack.c.h.b16 %v1283
    %v1972 = vunpack.c.l.b16 %v1284
    %v1973 = vunpack.c.h.b16 %v1284
    %v1974 = vunpack.c.l.b16 %v1285
    %v1975 = vunpack.c.h.b16 %v1285
    %v1976 = vunpack.c.l.b16 %v1286
    %v1977 = vunpack.c.h.b16 %v1286
    %v1978 = vunpack.c.l.b16 %v1287
    %v1979 = vunpack.c.h.b16 %v1287
    %v1980 = vunpack.c.l.b16 %v1288
    %v1981 = vunpack.c.h.b16 %v1288
    %v1982 = vunpack.c.l.b16 %v1289
    %v1983 = vunpack.c.h.b16 %v1289
    %v1984 = vunpack.c.l.b16 %v1290
    %v1985 = vunpack.c.h.b16 %v1290
    %v1986 = vunpack.c.l.b16 %v1291
    %v1987 = vunpack.c.h.b16 %v1291
    %v1988 = vunpack.c.l.b16 %v1292
    %v1989 = vunpack.c.h.b16 %v1292
    %v1990 = vunpack.c.l.b16 %v1293
    %v1991 = vunpack.c.h.b16 %v1293
    %v1992 = vunpack.c.l.b16 %v1294
    %v1993 = vunpack.c.h.b16 %v1294
    %v1994 = vunpack.c.l.b16 %v1295
    %v1995 = vunpack.c.h.b16 %v1295
    %v1996 = vunpack.c.l.b16 %v1296
    %v1997 = vunpack.c.h.b16 %v1296
    %v1998 = vunpack.c.l.b16 %v1297
    %v1999 = vunpack.c.h.b16 %v1297
    %v2000 = vunpack.c.l.b16 %v1298
    %v2001 = vunpack.c.h.b16 %v1298
    %v2002 = vunpack.c.l.b16 %v1299
    %v2003 = vunpack.c.h.b16 %v1299
    %v2004 = vunpack.c.l.b16 %v1300
    %v2005 = vunpack.c.h.b16 %v1300
    %v2006 = vunpack.c.l.b16 %v1301
    %v2007 = vunpack.c.h.b16 %v1301
    %v2008 = vunpack.c.l.b16 %v1302
    %v2009 = vunpack.c.h.b16 %v1302
    %v2010 = vunpack.c.l.b16 %v1303
    %v2011 = vunpack.c.h.b16 %v1303
    %v2012 = vunpack.c.l.b16 %v1304
    %v2013 = vunpack.c.h.b16 %v1304
    %v2014 = vunpack.c.l.b16 %v1305
    %v2015 = vunpack.c.h.b16 %v1305
    %v2016 = vunpack.c.l.b16 %v1306
    %v2017 = vunpack.c.h.b16 %v1306
    %v2018 = vunpack.c.l.b16 %v1307
    %v2019 = vunpack.c.h.b16 %v1307
    %v2020 = vunpack.c.l.b16 %v1308
    %v2021 = vunpack.c.h.b16 %v1308
    %v2022 = vunpack.c.l.b16 %v1309
    %v2023 = vunpack.c.h.b16 %v1309
    %v2024 = vunpack.c.l.b16 %v1310
    %v2025 = vunpack.c.h.b16 %v1310
    %v2026 = vunpack.c.l.b16 %v1311
    %v2027 = vunpack.c.h.b16 %v1311
    %v2028 = vunpack.c.l.b16 %v1312
    %v2029 = vunpack.c.h.b16 %v1312
    %v2030 = vunpack.c.l.b16 %v1313
    %v2031 = vunpack.c.h.b16 %v1313
    %v2032 = vunpack.c.l.b16 %v1314
    %v2033 = vunpack.c.h.b16 %v1314
    %v2034 = vunpack.c.l.b16 %v1315
    %v2035 = vunpack.c.h.b16 %v1315
    %v2036 = vunpack.c.l.b16 %v1316
    %v2037 = vunpack.c.h.b16 %v1316
    %v2038 = vunpack.c.l.b16 %v1317
    %v2039 = vunpack.c.h.b16 %v1317
    %v2040 = vunpack.c.l.b16 %v1318
    %v2041 = vunpack.c.h.b16 %v1318
    %v2042 = vunpack.c.l.b16 %v1319
    %v2043 = vunpack.c.h.b16 %v1319
    %v2044 = vunpack.c.l.b16 %v1320
    %v2045 = vunpack.c.h.b16 %v1320
    %v2046 = vunpack.c.l.b16 %v1321
    %v2047 = vunpack.c.h.b16 %v1321
    %v2048 = vunpack.c.l.b16 %v1322
    %v2049 = vunpack.c.h.b16 %v1322
    %v2050 = vunpack.c.l.b16 %v1323
    %v2051 = vunpack.c.h.b16 %v1323
    %v2052 = vunpack.c.l.b16 %v1324
    %v2053 = vunpack.c.h.b16 %v1324
    %v2054 = vunpack.c.l.b16 %v1325
    %v2055 = vunpack.c.h.b16 %v1325
    %v2056 = vunpack.c.l.b16 %v1326
    %v2057 = vunpack.c.h.b16 %v1326
    %v2058 = vunpack.c.l.b16 %v1327
    %v2059 = vunpack.c.h.b16 %v1327
    %v2060 = vunpack.c.l.b16 %v1328
    %v2061 = vunpack.c.h.b16 %v1328
    %v2062 = vunpack.c.l.b16 %v1329
    %v2063 = vunpack.c.h.b16 %v1329
    %v2064 = vunpack.c.l.b16 %v1330
    %v2065 = vunpack.c.h.b16 %v1330
    %v2066 = vunpack.c.l.b16 %v1331
    %v2067 = vunpack.c.h.b16 %v1331
    %v2068 = vunpack.c.l.b16 %v1332
    %v2069 = vunpack.c.h.b16 %v1332
    %v2070 = vunpack.c.l.b16 %v1333
    %v2071 = vunpack.c.h.b16 %v1333
    %v2072 = vunpack.c.l.b16 %v1334
    %v2073 = vunpack.c.h.b16 %v1334
    %v2074 = vunpack.c.l.b16 %v1335
    %v2075 = vunpack.c.h.b16 %v1335
    %v2076 = vunpack.c.l.b16 %v1336
    %v2077 = vunpack.c.h.b16 %v1336
    %v2078 = vunpack.c.l.b16 %v1337
    %v2079 = vunpack.c.h.b16 %v1337
    %v2080 = vunpack.c.l.b16 %v1338
    %v2081 = vunpack.c.h.b16 %v1338
    %v2082 = vunpack.c.l.b16 %v1339
    %v2083 = vunpack.c.h.b16 %v1339
    %v2084 = vunpack.c.l.b16 %v1340
    %v2085 = vunpack.c.h.b16 %v1340
    %v2086 = vunpack.c.l.b16 %v1341
    %v2087 = vunpack.c.h.b16 %v1341
    %v2088 = vunpack.c.l.b16 %v1342
    %v2089 = vunpack.c.h.b16 %v1342
    %v2090 = vunpack.c.l.b16 %v1343
    %v2091 = vunpack.c.h.b16 %v1343
    %v2092 = vunpack.c.l.b16 %v1344
    %v2093 = vunpack.c.h.b16 %v1344
    %v2094 = vunpack.c.l.b16 %v1345
    %v2095 = vunpack.c.h.b16 %v1345
    %v2096 = vunpack.c.l.b16 %v1346
    %v2097 = vunpack.c.h.b16 %v1346
    %v2098 = vunpack.c.l.b16 %v1347
    %v2099 = vunpack.c.h.b16 %v1347
    %v2100 = vunpack.c.l.b16 %v1348
    %v2101 = vunpack.c.h.b16 %v1348
    %v2102 = vunpack.c.l.b16 %v1349
    %v2103 = vunpack.c.h.b16 %v1349
    %v2104 = vunpack.c.l.b16 %v1350
    %v2105 = vunpack.c.h.b16 %v1350
    %v2106 = vunpack.c.l.b16 %v1351
    %v2107 = vunpack.c.h.b16 %v1351
    %v2108 = vunpack.c.l.b16 %v1352
    %v2109 = vunpack.c.h.b16 %v1352
    %v2110 = vunpack.c.l.b16 %v1353
    %v2111 = vunpack.c.h.b16 %v1353
    %v2112 = vunpack.c.l.b16 %v1354
    %v2113 = vunpack.c.h.b16 %v1354
    %v2114 = vunpack.c.l.b16 %v1355
    %v2115 = vunpack.c.h.b16 %v1355
    %v2116 = vunpack.c.l.b16 %v1356
    %v2117 = vunpack.c.h.b16 %v1356
    %v2118 = vunpack.c.l.b16 %v1357
    %v2119 = vunpack.c.h.b16 %v1357
    %v2120 = vunpack.c.l.b16 %v1358
    %v2121 = vunpack.c.h.b16 %v1358
    %v2122 = vunpack.c.l.b16 %v1359
    %v2123 = vunpack.c.h.b16 %v1359
    %v2124 = vunpack.c.l.b16 %v1360
    %v2125 = vunpack.c.h.b16 %v1360
    %v2126 = vunpack.c.l.b16 %v1361
    %v2127 = vunpack.c.h.b16 %v1361
    %v2128 = vunpack.c.l.b16 %v1362
    %v2129 = vunpack.c.h.b16 %v1362
    %v2130 = vunpack.c.l.b16 %v1363
    %v2131 = vunpack.c.h.b16 %v1363
    %v2132 = vunpack.c.l.b16 %v1364
    %v2133 = vunpack.c.h.b16 %v1364
    %v2134 = vunpack.c.l.b16 %v1365
    %v2135 = vunpack.c.h.b16 %v1365
    %v2136 = vunpack.c.l.b16 %v1366
    %v2137 = vunpack.c.h.b16 %v1366
    %v2138 = vunpack.c.l.b16 %v1367
    %v2139 = vunpack.c.h.b16 %v1367
    %v2140 = vunpack.c.l.b16 %v1368
    %v2141 = vunpack.c.h.b16 %v1368
    %v2142 = vunpack.c.l.b16 %v1369
    %v2143 = vunpack.c.h.b16 %v1369
    %v2144 = vunpack.c.l.b16 %v1370
    %v2145 = vunpack.c.h.b16 %v1370
    %v2146 = vunpack.c.l.b16 %v1371
    %v2147 = vunpack.c.h.b16 %v1371
    %v2148 = vunpack.c.l.b16 %v1372
    %v2149 = vunpack.c.h.b16 %v1372
    %v2150 = vunpack.c.l.b16 %v1373
    %v2151 = vunpack.c.h.b16 %v1373
    %v2152 = vunpack.c.l.b16 %v1374
    %v2153 = vunpack.c.h.b16 %v1374
    %v2154 = vunpack.c.l.b16 %v1375
    %v2155 = vunpack.c.h.b16 %v1375
    %v2156 = vunpack.c.l.b16 %v1376
    %v2157 = vunpack.c.h.b16 %v1376
    %v2158 = vunpack.c.l.b16 %v1377
    %v2159 = vunpack.c.h.b16 %v1377
    %v2160 = vunpack.c.l.b16 %v1378
    %v2161 = vunpack.c.h.b16 %v1378
    %v2162 = vunpack.c.l.b16 %v1379
    %v2163 = vunpack.c.h.b16 %v1379
    %v2164 = vunpack.c.l.b16 %v1380
    %v2165 = vunpack.c.h.b16 %v1380
    %v2166 = vunpack.c.l.b16 %v1381
    %v2167 = vunpack.c.h.b16 %v1381
    %v2168 = vunpack.c.l.b16 %v1382
    %v2169 = vunpack.c.h.b16 %v1382
    %v2170 = vunpack.c.l.b16 %v1383
    %v2171 = vunpack.c.h.b16 %v1383
    %v2172 = vunpack.c.l.b16 %v1384
    %v2173 = vunpack.c.h.b16 %v1384
    %v2174 = vunpack.c.l.b16 %v1385
    %v2175 = vunpack.c.h.b16 %v1385
    %v2176 = vpack.c.b16 %v1668, %v1664
    %v2177 = vpack.c.b16 %v1669, %v1665
    %v2178 = vpack.c.b16 %v1670, %v1666
    %v2179 = vpack.c.b16 %v1671, %v1667
    %v2180 = vpack.c.b16 %v1676, %v1672
    %v2181 = vpack.c.b16 %v1677, %v1673
    %v2182 = vpack.c.b16 %v1678, %v1674
    %v2183 = vpack.c.b16 %v1679, %v1675
    %v2184 = vpack.c.b16 %v1684, %v1680
    %v2185 = vpack.c.b16 %v1685, %v1681
    %v2186 = vpack.c.b16 %v1686, %v1682
    %v2187 = vpack.c.b16 %v1687, %v1683
    %v2188 = vpack.c.b16 %v1692, %v1688
    %v2189 = vpack.c.b16 %v1693, %v1689
    %v2190 = vpack.c.b16 %v1694, %v1690
    %v2191 = vpack.c.b16 %v1695, %v1691
    %v2192 = vpack.c.b16 %v1700, %v1696
    %v2193 = vpack.c.b16 %v1701, %v1697
    %v2194 = vpack.c.b16 %v1702, %v1698
    %v2195 = vpack.c.b16 %v1703, %v1699
    %v2196 = vpack.c.b16 %v1708, %v1704
    %v2197 = vpack.c.b16 %v1709, %v1705
    %v2198 = vpack.c.b16 %v1710, %v1706
    %v2199 = vpack.c.b16 %v1711, %v1707
    %v2200 = vpack.c.b16 %v1716, %v1712
    %v2201 = vpack.c.b16 %v1717, %v1713
    %v2202 = vpack.c.b16 %v1718, %v1714
    %v2203 = vpack.c.b16 %v1719, %v1715
    %v2204 = vpack.c.b16 %v1724, %v1720
    %v2205 = vpack.c.b16 %v1725, %v1721
    %v2206 = vpack.c.b16 %v1726, %v1722
    %v2207 = vpack.c.b16 %v1727, %v1723
    %v2208 = vpack.c.b16 %v1732, %v1728
    %v2209 = vpack.c.b16 %v1733, %v1729
    %v2210 = vpack.c.b16 %v1734, %v1730
    %v2211 = vpack.c.b16 %v1735, %v1731
    %v2212 = vpack.c.b16 %v1740, %v1736
    %v2213 = vpack.c.b16 %v1741, %v1737
    %v2214 = vpack.c.b16 %v1742, %v1738
    %v2215 = vpack.c.b16 %v1743, %v1739
    %v2216 = vpack.c.b16 %v1748, %v1744
    %v2217 = vpack.c.b16 %v1749, %v1745
    %v2218 = vpack.c.b16 %v1750, %v1746
    %v2219 = vpack.c.b16 %v1751, %v1747
    %v2220 = vpack.c.b16 %v1756, %v1752
    %v2221 = vpack.c.b16 %v1757, %v1753
    %v2222 = vpack.c.b16 %v1758, %v1754
    %v2223 = vpack.c.b16 %v1759, %v1755
    %v2224 = vpack.c.b16 %v1764, %v1760
    %v2225 = vpack.c.b16 %v1765, %v1761
    %v2226 = vpack.c.b16 %v1766, %v1762
    %v2227 = vpack.c.b16 %v1767, %v1763
    %v2228 = vpack.c.b16 %v1772, %v1768
    %v2229 = vpack.c.b16 %v1773, %v1769
    %v2230 = vpack.c.b16 %v1774, %v1770
    %v2231 = vpack.c.b16 %v1775, %v1771
    %v2232 = vpack.c.b16 %v1780, %v1776
    %v2233 = vpack.c.b16 %v1781, %v1777
    %v2234 = vpack.c.b16 %v1782, %v1778
    %v2235 = vpack.c.b16 %v1783, %v1779
    %v2236 = vpack.c.b16 %v1788, %v1784
    %v2237 = vpack.c.b16 %v1789, %v1785
    %v2238 = vpack.c.b16 %v1790, %v1786
    %v2239 = vpack.c.b16 %v1791, %v1787
    %v2240 = vpack.c.b16 %v1796, %v1792
    %v2241 = vpack.c.b16 %v1797, %v1793
    %v2242 = vpack.c.b16 %v1798, %v1794
    %v2243 = vpack.c.b16 %v1799, %v1795
    %v2244 = vpack.c.b16 %v1804, %v1800
    %v2245 = vpack.c.b16 %v1805, %v1801
    %v2246 = vpack.c.b16 %v1806, %v1802
    %v2247 = vpack.c.b16 %v1807, %v1803
    %v2248 = vpack.c.b16 %v1812, %v1808
    %v2249 = vpack.c.b16 %v1813, %v1809
    %v2250 = vpack.c.b16 %v1814, %v1810
    %v2251 = vpack.c.b16 %v1815, %v1811
    %v2252 = vpack.c.b16 %v1820, %v1816
    %v2253 = vpack.c.b16 %v1821, %v1817
    %v2254 = vpack.c.b16 %v1822, %v1818
    %v2255 = vpack.c.b16 %v1823, %v1819
    %v2256 = vpack.c.b16 %v1828, %v1824
    %v2257 = vpack.c.b16 %v1829, %v1825
    %v2258 = vpack.c.b16 %v1830, %v1826
    %v2259 = vpack.c.b16 %v1831, %v1827
    %v2260 = vpack.c.b16 %v1836, %v1832
    %v2261 = vpack.c.b16 %v1837, %v1833
    %v2262 = vpack.c.b16 %v1838, %v1834
    %v2263 = vpack.c.b16 %v1839, %v1835
    %v2264 = vpack.c.b16 %v1844, %v1840
    %v2265 = vpack.c.b16 %v1845, %v1841
    %v2266 = vpack.c.b16 %v1846, %v1842
    %v2267 = vpack.c.b16 %v1847, %v1843
    %v2268 = vpack.c.b16 %v1852, %v1848
    %v2269 = vpack.c.b16 %v1853, %v1849
    %v2270 = vpack.c.b16 %v1854, %v1850
    %v2271 = vpack.c.b16 %v1855, %v1851
    %v2272 = vpack.c.b16 %v1860, %v1856
    %v2273 = vpack.c.b16 %v1861, %v1857
    %v2274 = vpack.c.b16 %v1862, %v1858
    %v2275 = vpack.c.b16 %v1863, %v1859
    %v2276 = vpack.c.b16 %v1868, %v1864
    %v2277 = vpack.c.b16 %v1869, %v1865
    %v2278 = vpack.c.b16 %v1870, %v1866
    %v2279 = vpack.c.b16 %v1871, %v1867
    %v2280 = vpack.c.b16 %v1876, %v1872
    %v2281 = vpack.c.b16 %v1877, %v1873
    %v2282 = vpack.c.b16 %v1878, %v1874
    %v2283 = vpack.c.b16 %v1879, %v1875
    %v2284 = vpack.c.b16 %v1884, %v1880
    %v2285 = vpack.c.b16 %v1885, %v1881
    %v2286 = vpack.c.b16 %v1886, %v1882
    %v2287 = vpack.c.b16 %v1887, %v1883
    %v2288 = vpack.c.b16 %v1892, %v1888
    %v2289 = vpack.c.b16 %v1893, %v1889
    %v2290 = vpack.c.b16 %v1894, %v1890
    %v2291 = vpack.c.b16 %v1895, %v1891
    %v2292 = vpack.c.b16 %v1900, %v1896
    %v2293 = vpack.c.b16 %v1901, %v1897
    %v2294 = vpack.c.b16 %v1902, %v1898
    %v2295 = vpack.c.b16 %v1903, %v1899
    %v2296 = vpack.c.b16 %v1908, %v1904
    %v2297 = vpack.c.b16 %v1909, %v1905
    %v2298 = vpack.c.b16 %v1910, %v1906
    %v2299 = vpack.c.b16 %v1911, %v1907
    %v2300 = vpack.c.b16 %v1916, %v1912
    %v2301 = vpack.c.b16 %v1917, %v1913
    %v2302 = vpack.c.b16 %v1918, %v1914
    %v2303 = vpack.c.b16 %v1919, %v1915
    %v2304 = vpack.c.b16 %v1924, %v1920
    %v2305 = vpack.c.b16 %v1925, %v1921
    %v2306 = vpack.c.b16 %v1926, %v1922
    %v2307 = vpack.c.b16 %v1927, %v1923
    %v2308 = vpack.c.b16 %v1932, %v1928
    %v2309 = vpack.c.b16 %v1933, %v1929
    %v2310 = vpack.c.b16 %v1934, %v1930
    %v2311 = vpack.c.b16 %v1935, %v1931
    %v2312 = vpack.c.b16 %v1940, %v1936
    %v2313 = vpack.c.b16 %v1941, %v1937
    %v2314 = vpack.c.b16 %v1942, %v1938
    %v2315 = vpack.c.b16 %v1943, %v1939
    %v2316 = vpack.c.b16 %v1948, %v1944
    %v2317 = vpack.c.b16 %v1949, %v1945
    %v2318 = vpack.c.b16 %v1950, %v1946
    %v2319 = vpack.c.b16 %v1951, %v1947
    %v2320 = vpack.c.b16 %v1956, %v1952
    %v2321 = vpack.c.b16 %v1957, %v1953
    %v2322 = vpack.c.b16 %v1958, %v1954
    %v2323 = vpack.c.b16 %v1959, %v1955
    %v2324 = vpack.c.b16 %v1964, %v1960
    %v2325 = vpack.c.b16 %v1965, %v1961
    %v2326 = vpack.c.b16 %v1966, %v1962
    %v2327 = vpack.c.b16 %v1967, %v1963
    %v2328 = vpack.c.b16 %v1972, %v1968
    %v2329 = vpack.c.b16 %v1973, %v1969
    %v2330 = vpack.c.b16 %v1974, %v1970
    %v2331 = vpack.c.b16 %v1975, %v1971
    %v2332 = vpack.c.b16 %v1980, %v1976
    %v2333 = vpack.c.b16 %v1981, %v1977
    %v2334 = vpack.c.b16 %v1982, %v1978
    %v2335 = vpack.c.b16 %v1983, %v1979
    %v2336 = vpack.c.b16 %v1988, %v1984
    %v2337 = vpack.c.b16 %v1989, %v1985
    %v2338 = vpack.c.b16 %v1990, %v1986
    %v2339 = vpack.c.b16 %v1991, %v1987
    %v2340 = vpack.c.b16 %v1996, %v1992
    %v2341 = vpack.c.b16 %v1997, %v1993
    %v2342 = vpack.c.b16 %v1998, %v1994
    %v2343 = vpack.c.b16 %v1999, %v1995
    %v2344 = vpack.c.b16 %v2004, %v2000
    %v2345 = vpack.c.b16 %v2005, %v2001
    %v2346 = vpack.c.b16 %v2006, %v2002
    %v2347 = vpack.c.b16 %v2007, %v2003
    %v2348 = vpack.c.b16 %v2012, %v2008
    %v2349 = vpack.c.b16 %v2013, %v2009
    %v2350 = vpack.c.b16 %v2014, %v2010
    %v2351 = vpack.c.b16 %v2015, %v2011
    %v2352 = vpack.c.b16 %v2020, %v2016
    %v2353 = vpack.c.b16 %v2021, %v2017
    %v2354 = vpack.c.b16 %v2022, %v2018
    %v2355 = vpack.c.b16 %v2023, %v2019
    %v2356 = vpack.c.b16 %v2028, %v2024
    %v2357 = vpack.c.b16 %v2029, %v2025
    %v2358 = vpack.c.b16 %v2030, %v2026
    %v2359 = vpack.c.b16 %v2031, %v2027
    %v2360 = vpack.c.b16 %v2036, %v2032
    %v2361 = vpack.c.b16 %v2037, %v2033
    %v2362 = vpack.c.b16 %v2038, %v2034
    %v2363 = vpack.c.b16 %v2039, %v2035
    %v2364 = vpack.c.b16 %v2044, %v2040
    %v2365 = vpack.c.b16 %v2045, %v2041
    %v2366 = vpack.c.b16 %v2046, %v2042
    %v2367 = vpack.c.b16 %v2047, %v2043
    %v2368 = vpack.c.b16 %v2052, %v2048
    %v2369 = vpack.c.b16 %v2053, %v2049
    %v2370 = vpack.c.b16 %v2054, %v2050
    %v2371 = vpack.c.b16 %v2055, %v2051
    %v2372 = vpack.c.b16 %v2060, %v2056
    %v2373 = vpack.c.b16 %v2061, %v2057
    %v2374 = vpack.c.b16 %v2062, %v2058
    %v2375 = vpack.c.b16 %v2063, %v2059
    %v2376 = vpack.c.b16 %v2068, %v2064
    %v2377 = vpack.c.b16 %v2069, %v2065
    %v2378 = vpack.c.b16 %v2070, %v2066
    %v2379 = vpack.c.b16 %v2071, %v2067
    %v2380 = vpack.c.b16 %v2076, %v2072
    %v2381 = vpack.c.b16 %v2077, %v2073
    %v2382 = vpack.c.b16 %v2078, %v2074
    %v2383 = vpack.c.b16 %v2079, %v2075
    %v2384 = vpack.c.b16 %v2084, %v2080
    %v2385 = vpack.c.b16 %v2085, %v2081
    %v2386 = vpack.c.b16 %v2086, %v2082
    %v2387 = vpack.c.b16 %v2087, %v2083
    %v2388 = vpack.c.b16 %v2092, %v2088
    %v2389 = vpack.c.b16 %v2093, %v2089
    %v2390 = vpack.c.b16 %v2094, %v2090
    %v2391 = vpack.c.b16 %v2095, %v2091
    %v2392 = vpack.c.b16 %v2100, %v2096
    %v2393 = vpack.c.b16 %v2101, %v2097
    %v2394 = vpack.c.b16 %v2102, %v2098
    %v2395 = vpack.c.b16 %v2103, %v2099
    %v2396 = vpack.c.b16 %v2108, %v2104
    %v2397 = vpack.c.b16 %v2109, %v2105
    %v2398 = vpack.c.b16 %v2110, %v2106
    %v2399 = vpack.c.b16 %v2111, %v2107
    %v2400 = vpack.c.b16 %v2116, %v2112
    %v2401 = vpack.c.b16 %v2117, %v2113
    %v2402 = vpack.c.b16 %v2118, %v2114
    %v2403 = vpack.c.b16 %v2119, %v2115
    %v2404 = vpack.c.b16 %v2124, %v2120
    %v2405 = vpack.c.b16 %v2125, %v2121
    %v2406 = vpack.c.b16 %v2126, %v2122
    %v2407 = vpack.c.b16 %v2127, %v2123
    %v2408 = vpack.c.b16 %v2132, %v2128
    %v2409 = vpack.c.b16 %v2133, %v2129
    %v2410 = vpack.c.b16 %v2134, %v2130
    %v2411 = vpack.c.b16 %v2135, %v2131
    %v2412 = vpack.c.b16 %v2140, %v2136
    %v2413 = vpack.c.b16 %v2141, %v2137
    %v2414 = vpack.c.b16 %v2142, %v2138
    %v2415 = vpack.c.b16 %v2143, %v2139
    %v2416 = vpack.c.b16 %v2148, %v2144
    %v2417 = vpack.c.b16 %v2149, %v2145
    %v2418 = vpack.c.b16 %v2150, %v2146
    %v2419 = vpack.c.b16 %v2151, %v2147
    %v2420 = vpack.c.b16 %v2156, %v2152
    %v2421 = vpack.c.b16 %v2157, %v2153
    %v2422 = vpack.c.b16 %v2158, %v2154
    %v2423 = vpack.c.b16 %v2159, %v2155
    %v2424 = vpack.c.b16 %v2164, %v2160
    %v2425 = vpack.c.b16 %v2165, %v2161
    %v2426 = vpack.c.b16 %v2166, %v2162
    %v2427 = vpack.c.b16 %v2167, %v2163
    %v2428 = vpack.c.b16 %v2172, %v2168
    %v2429 = vpack.c.b16 %v2173, %v2169
    %v2430 = vpack.c.b16 %v2174, %v2170
    %v2431 = vpack.c.b16 %v2175, %v2171
    %2688 = vmatprep.subr.bf16.mxu0 %v2177
    %2689 = vmatpush1.bf16.msra.mxu0 %v2176
    %2690 = vmatprep.subr.bf16.mxu0 %v2181
    %2691 = vmatpush1.bf16.msra.mxu0 %v2180
    %2692 = vmatprep.subr.bf16.mxu0 %v2185
    %2693 = vmatpush1.bf16.msra.mxu0 %v2184
    %2694 = vmatprep.subr.bf16.mxu0 %v2189
    %2695 = vmatpush1.bf16.msra.mxu0 %v2188
    %2696 = vmatprep.subr.bf16.mxu0 %v2193
    %2697 = vmatpush1.bf16.msra.mxu0 %v2192
    %2698 = vmatprep.subr.bf16.mxu0 %v2197
    %2699 = vmatpush1.bf16.msra.mxu0 %v2196
    %2700 = vmatprep.subr.bf16.mxu0 %v2201
    %2701 = vmatpush1.bf16.msra.mxu0 %v2200
    %2702 = vmatprep.subr.bf16.mxu0 %v2205
    %2703 = vmatpush1.bf16.msra.mxu0 %v2204
    %2704 = vmatprep.subr.bf16.mxu0 %v2209
    %2705 = vmatpush1.bf16.msra.mxu0 %v2208
    %2706 = vmatprep.subr.bf16.mxu0 %v2213
    %2707 = vmatpush1.bf16.msra.mxu0 %v2212
    %2708 = vmatprep.subr.bf16.mxu0 %v2217
    %2709 = vmatpush1.bf16.msra.mxu0 %v2216
    %2710 = vmatprep.subr.bf16.mxu0 %v2221
    %2711 = vmatpush1.bf16.msra.mxu0 %v2220
    %2712 = vmatprep.subr.bf16.mxu0 %v2225
    %2713 = vmatpush1.bf16.msra.mxu0 %v2224
    %2714 = vmatprep.subr.bf16.mxu0 %v2229
    %2715 = vmatpush1.bf16.msra.mxu0 %v2228
    %2716 = vmatprep.subr.bf16.mxu0 %v2233
    %2717 = vmatpush1.bf16.msra.mxu0 %v2232
    %2718 = vmatprep.subr.bf16.mxu0 %v2237
    %2719 = vmatpush1.bf16.msra.mxu0 %v2236
    %2720 = vmatprep.mubr.bf16.mxu0 %v1123
    %2721 = vmatmul.mubr.bf16.gmra.mrb[0].mxu0 %v1122
    %v2722 = vpop.f32.mrb[0].mxu0
    %v2723 = vadd.f32 %v1391, %v2722
    %v2724 = vpop.f32.mrb[0].mxu0
    %v2725 = vadd.f32 %v1395, %v2724
    %v2726 = vpop.f32.mrb[0].mxu0
    %v2727 = vpop.f32.mrb[0].mxu0
    %2728 = vdwg.mxu0
    %2729 = vmatprep.subr.bf16.mxu0 %v2241
    %2730 = vmatpush1.bf16.msra.mxu0 %v2240
    %2731 = vmatprep.subr.bf16.mxu0 %v2245
    %2732 = vmatpush1.bf16.msra.mxu0 %v2244
    %2733 = vmatprep.subr.bf16.mxu0 %v2249
    %2734 = vmatpush1.bf16.msra.mxu0 %v2248
    %2735 = vmatprep.subr.bf16.mxu0 %v2253
    %2736 = vmatpush1.bf16.msra.mxu0 %v2252
    %2737 = vmatprep.subr.bf16.mxu0 %v2257
    %2738 = vmatpush1.bf16.msra.mxu0 %v2256
    %2739 = vmatprep.subr.bf16.mxu0 %v2261
    %2740 = vmatpush1.bf16.msra.mxu0 %v2260
    %2741 = vmatprep.subr.bf16.mxu0 %v2265
    %2742 = vmatpush1.bf16.msra.mxu0 %v2264
    %2743 = vmatprep.subr.bf16.mxu0 %v2269
    %2744 = vmatpush1.bf16.msra.mxu0 %v2268
    %2745 = vmatprep.subr.bf16.mxu0 %v2273
    %2746 = vmatpush1.bf16.msra.mxu0 %v2272
    %2747 = vmatprep.subr.bf16.mxu0 %v2277
    %2748 = vmatpush1.bf16.msra.mxu0 %v2276
    %2749 = vmatprep.subr.bf16.mxu0 %v2281
    %2750 = vmatpush1.bf16.msra.mxu0 %v2280
    %2751 = vmatprep.subr.bf16.mxu0 %v2285
    %2752 = vmatpush1.bf16.msra.mxu0 %v2284
    %2753 = vmatprep.subr.bf16.mxu0 %v2289
    %2754 = vmatpush1.bf16.msra.mxu0 %v2288
    %2755 = vmatprep.subr.bf16.mxu0 %v2293
    %2756 = vmatpush1.bf16.msra.mxu0 %v2292
    %2757 = vmatprep.subr.bf16.mxu0 %v2297
    %2758 = vmatpush1.bf16.msra.mxu0 %v2296
    %2759 = vmatprep.subr.bf16.mxu0 %v2301
    %2760 = vmatpush1.bf16.msra.mxu0 %v2300
    %2761 = vmatprep.mubr.bf16.mxu0 %v1125
    %2762 = vmatmul.mubr.bf16.gmra.mrb[0].mxu0 %v1124
    %v2763 = vpop.f32.mrb[0].mxu0
    %v2764 = vadd.f32 %v2723, %v2763
    %v2765 = vpop.f32.mrb[0].mxu0
    %v2766 = vadd.f32 %v2725, %v2765
    %v2767 = vpop.f32.mrb[0].mxu0
    %v2768 = vpop.f32.mrb[0].mxu0
    %2769 = vdwg.mxu0
    %2770 = vmatprep.subr.bf16.mxu0 %v2305
    %2771 = vmatpush1.bf16.msra.mxu0 %v2304
    %2772 = vmatprep.subr.bf16.mxu0 %v2309
    %2773 = vmatpush1.bf16.msra.mxu0 %v2308
    %2774 = vmatprep.subr.bf16.mxu0 %v2313
    %2775 = vmatpush1.bf16.msra.mxu0 %v2312
    %2776 = vmatprep.subr.bf16.mxu0 %v2317
    %2777 = vmatpush1.bf16.msra.mxu0 %v2316
    %2778 = vmatprep.subr.bf16.mxu0 %v2321
    %2779 = vmatpush1.bf16.msra.mxu0 %v2320
    %2780 = vmatprep.subr.bf16.mxu0 %v2325
    %2781 = vmatpush1.bf16.msra.mxu0 %v2324
    %2782 = vmatprep.subr.bf16.mxu0 %v2329
    %2783 = vmatpush1.bf16.msra.mxu0 %v2328
    %2784 = vmatprep.subr.bf16.mxu0 %v2333
    %2785 = vmatpush1.bf16.msra.mxu0 %v2332
    %2786 = vmatprep.subr.bf16.mxu0 %v2337
    %2787 = vmatpush1.bf16.msra.mxu0 %v2336
    %2788 = vmatprep.subr.bf16.mxu0 %v2341
    %2789 = vmatpush1.bf16.msra.mxu0 %v2340
    %2790 = vmatprep.subr.bf16.mxu0 %v2345
    %2791 = vmatpush1.bf16.msra.mxu0 %v2344
    %2792 = vmatprep.subr.bf16.mxu0 %v2349
    %2793 = vmatpush1.bf16.msra.mxu0 %v2348
    %2794 = vmatprep.subr.bf16.mxu0 %v2353
    %2795 = vmatpush1.bf16.msra.mxu0 %v2352
    %2796 = vmatprep.subr.bf16.mxu0 %v2357
    %2797 = vmatpush1.bf16.msra.mxu0 %v2356
    %2798 = vmatprep.subr.bf16.mxu0 %v2361
    %2799 = vmatpush1.bf16.msra.mxu0 %v2360
    %2800 = vmatprep.subr.bf16.mxu0 %v2365
    %2801 = vmatpush1.bf16.msra.mxu0 %v2364
    %2802 = vmatprep.mubr.bf16.mxu0 %v1127
    %2803 = vmatmul.mubr.bf16.gmra.mrb[0].mxu0 %v1126
    %v2804 = vpop.f32.mrb[0].mxu0
    %v2805 = vadd.f32 %v2764, %v2804
    %v2806 = vpop.f32.mrb[0].mxu0
    %v2807 = vadd.f32 %v2766, %v2806
    %v2808 = vpop.f32.mrb[0].mxu0
    %v2809 = vpop.f32.mrb[0].mxu0
    %2810 = vdwg.mxu0
    %2811 = vmatprep.subr.bf16.mxu0 %v2369
    %2812 = vmatpush1.bf16.msra.mxu0 %v2368
    %2813 = vmatprep.subr.bf16.mxu0 %v2373
    %2814 = vmatpush1.bf16.msra.mxu0 %v2372
    %2815 = vmatprep.subr.bf16.mxu0 %v2377
    %2816 = vmatpush1.bf16.msra.mxu0 %v2376
    %2817 = vmatprep.subr.bf16.mxu0 %v2381
    %2818 = vmatpush1.bf16.msra.mxu0 %v2380
    %2819 = vmatprep.subr.bf16.mxu0 %v2385
    %2820 = vmatpush1.bf16.msra.mxu0 %v2384
    %2821 = vmatprep.subr.bf16.mxu0 %v2389
    %2822 = vmatpush1.bf16.msra.mxu0 %v2388
    %2823 = vmatprep.subr.bf16.mxu0 %v2393
    %2824 = vmatpush1.bf16.msra.mxu0 %v2392
    %2825 = vmatprep.subr.bf16.mxu0 %v2397
    %2826 = vmatpush1.bf16.msra.mxu0 %v2396
    %2827 = vmatprep.subr.bf16.mxu0 %v2401
    %2828 = vmatpush1.bf16.msra.mxu0 %v2400
    %2829 = vmatprep.subr.bf16.mxu0 %v2405
    %2830 = vmatpush1.bf16.msra.mxu0 %v2404
    %2831 = vmatprep.subr.bf16.mxu0 %v2409
    %2832 = vmatpush1.bf16.msra.mxu0 %v2408
    %2833 = vmatprep.subr.bf16.mxu0 %v2413
    %2834 = vmatpush1.bf16.msra.mxu0 %v2412
    %2835 = vmatprep.subr.bf16.mxu0 %v2417
    %2836 = vmatpush1.bf16.msra.mxu0 %v2416
    %2837 = vmatprep.subr.bf16.mxu0 %v2421
    %2838 = vmatpush1.bf16.msra.mxu0 %v2420
    %2839 = vmatprep.subr.bf16.mxu0 %v2425
    %2840 = vmatpush1.bf16.msra.mxu0 %v2424
    %2841 = vmatprep.subr.bf16.mxu0 %v2429
    %2842 = vmatpush1.bf16.msra.mxu0 %v2428
    %2843 = vmatprep.mubr.bf16.mxu0 %v1129
    %2844 = vmatmul.mubr.bf16.gmra.mrb[0].mxu0 %v1128
    %v2845 = vpop.f32.mrb[0].mxu0
    %v2846 = vadd.f32 %v2805, %v2845
    %v2847 = vpop.f32.mrb[0].mxu0
    %v2848 = vadd.f32 %v2807, %v2847
    %v2849 = vpop.f32.mrb[0].mxu0
    %v2850 = vpop.f32.mrb[0].mxu0
    %2851 = vdwg.mxu0
    %2852 = vmatprep.subr.bf16.mxu0 %v2179
    %2853 = vmatpush1.bf16.msra.mxu0 %v2178
    %2854 = vmatprep.subr.bf16.mxu0 %v2183
    %2855 = vmatpush1.bf16.msra.mxu0 %v2182
    %2856 = vmatprep.subr.bf16.mxu0 %v2187
    %2857 = vmatpush1.bf16.msra.mxu0 %v2186
    %2858 = vmatprep.subr.bf16.mxu0 %v2191
    %2859 = vmatpush1.bf16.msra.mxu0 %v2190
    %2860 = vmatprep.subr.bf16.mxu0 %v2195
    %2861 = vmatpush1.bf16.msra.mxu0 %v2194
    %2862 = vmatprep.subr.bf16.mxu0 %v2199
    %2863 = vmatpush1.bf16.msra.mxu0 %v2198
    %2864 = vmatprep.subr.bf16.mxu0 %v2203
    %2865 = vmatpush1.bf16.msra.mxu0 %v2202
    %2866 = vmatprep.subr.bf16.mxu0 %v2207
    %2867 = vmatpush1.bf16.msra.mxu0 %v2206
    %2868 = vmatprep.subr.bf16.mxu0 %v2211
    %2869 = vmatpush1.bf16.msra.mxu0 %v2210
    %2870 = vmatprep.subr.bf16.mxu0 %v2215
    %2871 = vmatpush1.bf16.msra.mxu0 %v2214
    %2872 = vmatprep.subr.bf16.mxu0 %v2219
    %2873 = vmatpush1.bf16.msra.mxu0 %v2218
    %2874 = vmatprep.subr.bf16.mxu0 %v2223
    %2875 = vmatpush1.bf16.msra.mxu0 %v2222
    %2876 = vmatprep.subr.bf16.mxu0 %v2227
    %2877 = vmatpush1.bf16.msra.mxu0 %v2226
    %2878 = vmatprep.subr.bf16.mxu0 %v2231
    %2879 = vmatpush1.bf16.msra.mxu0 %v2230
    %2880 = vmatprep.subr.bf16.mxu0 %v2235
    %2881 = vmatpush1.bf16.msra.mxu0 %v2234
    %2882 = vmatprep.subr.bf16.mxu0 %v2239
    %2883 = vmatpush1.bf16.msra.mxu0 %v2238
    %2884 = vmatprep.mubr.bf16.mxu0 %v1123
    %2885 = vmatmul.mubr.bf16.gmra.mrb[0].mxu0 %v1122
    %v2886 = vpop.f32.mrb[0].mxu0
    %v2887 = vadd.f32 %v1399, %v2886
    %v2888 = vpop.f32.mrb[0].mxu0
    %v2889 = vadd.f32 %v1403, %v2888
    %v2890 = vpop.f32.mrb[0].mxu0
    %v2891 = vpop.f32.mrb[0].mxu0
    %2892 = vdwg.mxu0
    %2893 = vmatprep.subr.bf16.mxu0 %v2243
    %2894 = vmatpush1.bf16.msra.mxu0 %v2242
    %2895 = vmatprep.subr.bf16.mxu0 %v2247
    %2896 = vmatpush1.bf16.msra.mxu0 %v2246
    %2897 = vmatprep.subr.bf16.mxu0 %v2251
    %2898 = vmatpush1.bf16.msra.mxu0 %v2250
    %2899 = vmatprep.subr.bf16.mxu0 %v2255
    %2900 = vmatpush1.bf16.msra.mxu0 %v2254
    %2901 = vmatprep.subr.bf16.mxu0 %v2259
    %2902 = vmatpush1.bf16.msra.mxu0 %v2258
    %2903 = vmatprep.subr.bf16.mxu0 %v2263
    %2904 = vmatpush1.bf16.msra.mxu0 %v2262
    %2905 = vmatprep.subr.bf16.mxu0 %v2267
    %2906 = vmatpush1.bf16.msra.mxu0 %v2266
    %2907 = vmatprep.subr.bf16.mxu0 %v2271
    %2908 = vmatpush1.bf16.msra.mxu0 %v2270
    %2909 = vmatprep.subr.bf16.mxu0 %v2275
    %2910 = vmatpush1.bf16.msra.mxu0 %v2274
    %2911 = vmatprep.subr.bf16.mxu0 %v2279
    %2912 = vmatpush1.bf16.msra.mxu0 %v2278
    %2913 = vmatprep.subr.bf16.mxu0 %v2283
    %2914 = vmatpush1.bf16.msra.mxu0 %v2282
    %2915 = vmatprep.subr.bf16.mxu0 %v2287
    %2916 = vmatpush1.bf16.msra.mxu0 %v2286
    %2917 = vmatprep.subr.bf16.mxu0 %v2291
    %2918 = vmatpush1.bf16.msra.mxu0 %v2290
    %2919 = vmatprep.subr.bf16.mxu0 %v2295
    %2920 = vmatpush1.bf16.msra.mxu0 %v2294
    %2921 = vmatprep.subr.bf16.mxu0 %v2299
    %2922 = vmatpush1.bf16.msra.mxu0 %v2298
    %2923 = vmatprep.subr.bf16.mxu0 %v2303
    %2924 = vmatpush1.bf16.msra.mxu0 %v2302
    %2925 = vmatprep.mubr.bf16.mxu0 %v1125
    %2926 = vmatmul.mubr.bf16.gmra.mrb[0].mxu0 %v1124
    %v2927 = vpop.f32.mrb[0].mxu0
    %v2928 = vadd.f32 %v2887, %v2927
    %v2929 = vpop.f32.mrb[0].mxu0
    %v2930 = vadd.f32 %v2889, %v2929
    %v2931 = vpop.f32.mrb[0].mxu0
    %v2932 = vpop.f32.mrb[0].mxu0
    %2933 = vdwg.mxu0
    %2934 = vmatprep.subr.bf16.mxu0 %v2307
    %2935 = vmatpush1.bf16.msra.mxu0 %v2306
    %2936 = vmatprep.subr.bf16.mxu0 %v2311
    %2937 = vmatpush1.bf16.msra.mxu0 %v2310
    %2938 = vmatprep.subr.bf16.mxu0 %v2315
    %2939 = vmatpush1.bf16.msra.mxu0 %v2314
    %2940 = vmatprep.subr.bf16.mxu0 %v2319
    %2941 = vmatpush1.bf16.msra.mxu0 %v2318
    %2942 = vmatprep.subr.bf16.mxu0 %v2323
    %2943 = vmatpush1.bf16.msra.mxu0 %v2322
    %2944 = vmatprep.subr.bf16.mxu0 %v2327
    %2945 = vmatpush1.bf16.msra.mxu0 %v2326
    %2946 = vmatprep.subr.bf16.mxu0 %v2331
    %2947 = vmatpush1.bf16.msra.mxu0 %v2330
    %2948 = vmatprep.subr.bf16.mxu0 %v2335
    %2949 = vmatpush1.bf16.msra.mxu0 %v2334
    %2950 = vmatprep.subr.bf16.mxu0 %v2339
    %2951 = vmatpush1.bf16.msra.mxu0 %v2338
    %2952 = vmatprep.subr.bf16.mxu0 %v2343
    %2953 = vmatpush1.bf16.msra.mxu0 %v2342
    %2954 = vmatprep.subr.bf16.mxu0 %v2347
    %2955 = vmatpush1.bf16.msra.mxu0 %v2346
    %2956 = vmatprep.subr.bf16.mxu0 %v2351
    %2957 = vmatpush1.bf16.msra.mxu0 %v2350
    %2958 = vmatprep.subr.bf16.mxu0 %v2355
    %2959 = vmatpush1.bf16.msra.mxu0 %v2354
    %2960 = vmatprep.subr.bf16.mxu0 %v2359
    %2961 = vmatpush1.bf16.msra.mxu0 %v2358
    %2962 = vmatprep.subr.bf16.mxu0 %v2363
    %2963 = vmatpush1.bf16.msra.mxu0 %v2362
    %2964 = vmatprep.subr.bf16.mxu0 %v2367
    %2965 = vmatpush1.bf16.msra.mxu0 %v2366
    %2966 = vmatprep.mubr.bf16.mxu0 %v1127
    %2967 = vmatmul.mubr.bf16.gmra.mrb[0].mxu0 %v1126
    %v2968 = vpop.f32.mrb[0].mxu0
    %v2969 = vadd.f32 %v2928, %v2968
    %v2970 = vpop.f32.mrb[0].mxu0
    %v2971 = vadd.f32 %v2930, %v2970
    %v2972 = vpop.f32.mrb[0].mxu0
    %v2973 = vpop.f32.mrb[0].mxu0
    %2974 = vdwg.mxu0
    %2975 = vmatprep.subr.bf16.mxu0 %v2371
    %2976 = vmatpush1.bf16.msra.mxu0 %v2370
    %2977 = vmatprep.subr.bf16.mxu0 %v2375
    %2978 = vmatpush1.bf16.msra.mxu0 %v2374
    %2979 = vmatprep.subr.bf16.mxu0 %v2379
    %2980 = vmatpush1.bf16.msra.mxu0 %v2378
    %2981 = vmatprep.subr.bf16.mxu0 %v2383
    %2982 = vmatpush1.bf16.msra.mxu0 %v2382
    %2983 = vmatprep.subr.bf16.mxu0 %v2387
    %2984 = vmatpush1.bf16.msra.mxu0 %v2386
    %2985 = vmatprep.subr.bf16.mxu0 %v2391
    %2986 = vmatpush1.bf16.msra.mxu0 %v2390
    %2987 = vmatprep.subr.bf16.mxu0 %v2395
    %2988 = vmatpush1.bf16.msra.mxu0 %v2394
    %2989 = vmatprep.subr.bf16.mxu0 %v2399
    %2990 = vmatpush1.bf16.msra.mxu0 %v2398
    %2991 = vmatprep.subr.bf16.mxu0 %v2403
    %2992 = vmatpush1.bf16.msra.mxu0 %v2402
    %2993 = vmatprep.subr.bf16.mxu0 %v2407
    %2994 = vmatpush1.bf16.msra.mxu0 %v2406
    %2995 = vmatprep.subr.bf16.mxu0 %v2411
    %2996 = vmatpush1.bf16.msra.mxu0 %v2410
    %2997 = vmatprep.subr.bf16.mxu0 %v2415
    %2998 = vmatpush1.bf16.msra.mxu0 %v2414
    %2999 = vmatprep.subr.bf16.mxu0 %v2419
    %3000 = vmatpush1.bf16.msra.mxu0 %v2418
    %3001 = vmatprep.subr.bf16.mxu0 %v2423
    %3002 = vmatpush1.bf16.msra.mxu0 %v2422
    %3003 = vmatprep.subr.bf16.mxu0 %v2427
    %3004 = vmatpush1.bf16.msra.mxu0 %v2426
    %3005 = vmatprep.subr.bf16.mxu0 %v2431
    %3006 = vmatpush1.bf16.msra.mxu0 %v2430
    %3007 = vmatprep.mubr.bf16.mxu0 %v1129
    %3008 = vmatmul.mubr.bf16.gmra.mrb[0].mxu0 %v1128
    %v3009 = vpop.f32.mrb[0].mxu0
    %v3010 = vadd.f32 %v2969, %v3009
    %v3011 = vpop.f32.mrb[0].mxu0
    %v3012 = vadd.f32 %v2971, %v3011
    %v3013 = vpop.f32.mrb[0].mxu0
    %v3014 = vpop.f32.mrb[0].mxu0
    %3015 = vdwg.mxu0
    %v3016 = vmax.f32 %v2846, 0.0
    %v3017 = vmax.f32 %v2848, 0.0
    %v3018 = vmax.f32 %v3010, 0.0
    %v3019 = vmax.f32 %v3012, 0.0
    %v3020 = vpack.c.bf16 %v3016, %v3016
    %v3021 = vpack.c.bf16 %v3017, %v3017
    %v3022 = vpack.c.bf16 %v3018, %v3018
    %v3023 = vpack.c.bf16 %v3019, %v3019
    %v3024 = vld [vmem:[#allocation6] sm:$0xff]
    %v3025 = vld [vmem:[#allocation6 + $0x8] sm:$0xff]
    %v3026 = vld [vmem:[#allocation6 + $0x10] sm:$0xff]
    %v3027 = vld [vmem:[#allocation6 + $0x18] sm:$0xff]
    %v3028 = vld [vmem:[#allocation6 + $0x20] sm:$0xff]
    %v3029 = vld [vmem:[#allocation6 + $0x28] sm:$0xff]
    %v3030 = vld [vmem:[#allocation6 + $0x30] sm:$0xff]
    %v3031 = vld [vmem:[#allocation6 + $0x38] sm:$0xff]
    %v3032 = vld [vmem:[#allocation6 + $0x40] sm:$0xff]
    %v3033 = vld [vmem:[#allocation6 + $0x48] sm:$0xff]
    %v3034 = vld [vmem:[#allocation6 + $0x50] sm:$0xff]
    %v3035 = vld [vmem:[#allocation6 + $0x58] sm:$0xff]
    %v3036 = vld [vmem:[#allocation6 + $0x60] sm:$0xff]
    %v3037 = vld [vmem:[#allocation6 + $0x68] sm:$0xff]
    %v3038 = vld [vmem:[#allocation6 + $0x70] sm:$0xff]
    %v3039 = vld [vmem:[#allocation6 + $0x78] sm:$0xff]
    %v3040 = vld [vmem:[#allocation6 + $0x80] sm:$0xff]
    %v3041 = vld [vmem:[#allocation6 + $0x88] sm:$0xff]
    %v3042 = vld [vmem:[#allocation6 + $0x90] sm:$0xff]
    %v3043 = vld [vmem:[#allocation6 + $0x98] sm:$0xff]
    %v3044 = vld [vmem:[#allocation6 + $0xa0] sm:$0xff]
    %v3045 = vld [vmem:[#allocation6 + $0xa8] sm:$0xff]
    %v3046 = vld [vmem:[#allocation6 + $0xb0] sm:$0xff]
    %v3047 = vld [vmem:[#allocation6 + $0xb8] sm:$0xff]
    %v3048 = vld [vmem:[#allocation6 + $0xc0] sm:$0xff]
    %v3049 = vld [vmem:[#allocation6 + $0xc8] sm:$0xff]
    %v3050 = vld [vmem:[#allocation6 + $0xd0] sm:$0xff]
    %v3051 = vld [vmem:[#allocation6 + $0xd8] sm:$0xff]
    %v3052 = vld [vmem:[#allocation6 + $0xe0] sm:$0xff]
    %v3053 = vld [vmem:[#allocation6 + $0xe8] sm:$0xff]
    %v3054 = vld [vmem:[#allocation6 + $0xf0] sm:$0xff]
    %v3055 = vld [vmem:[#allocation6 + $0xf8] sm:$0xff]
    %v3056 = vld [vmem:[#allocation6 + $0x100] sm:$0xff]
    %v3057 = vld [vmem:[#allocation6 + $0x108] sm:$0xff]
    %v3058 = vld [vmem:[#allocation6 + $0x110] sm:$0xff]
    %v3059 = vld [vmem:[#allocation6 + $0x118] sm:$0xff]
    %v3060 = vld [vmem:[#allocation6 + $0x120] sm:$0xff]
    %v3061 = vld [vmem:[#allocation6 + $0x128] sm:$0xff]
    %v3062 = vld [vmem:[#allocation6 + $0x130] sm:$0xff]
    %v3063 = vld [vmem:[#allocation6 + $0x138] sm:$0xff]
    %v3064 = vld [vmem:[#allocation6 + $0x140] sm:$0xff]
    %v3065 = vld [vmem:[#allocation6 + $0x148] sm:$0xff]
    %v3066 = vld [vmem:[#allocation6 + $0x150] sm:$0xff]
    %v3067 = vld [vmem:[#allocation6 + $0x158] sm:$0xff]
    %v3068 = vld [vmem:[#allocation6 + $0x160] sm:$0xff]
    %v3069 = vld [vmem:[#allocation6 + $0x168] sm:$0xff]
    %v3070 = vld [vmem:[#allocation6 + $0x170] sm:$0xff]
    %v3071 = vld [vmem:[#allocation6 + $0x178] sm:$0xff]
    %v3072 = vld [vmem:[#allocation6 + $0x180] sm:$0xff]
    %v3073 = vld [vmem:[#allocation6 + $0x188] sm:$0xff]
    %v3074 = vld [vmem:[#allocation6 + $0x190] sm:$0xff]
    %v3075 = vld [vmem:[#allocation6 + $0x198] sm:$0xff]
    %v3076 = vld [vmem:[#allocation6 + $0x1a0] sm:$0xff]
    %v3077 = vld [vmem:[#allocation6 + $0x1a8] sm:$0xff]
    %v3078 = vld [vmem:[#allocation6 + $0x1b0] sm:$0xff]
    %v3079 = vld [vmem:[#allocation6 + $0x1b8] sm:$0xff]
    %v3080 = vld [vmem:[#allocation6 + $0x1c0] sm:$0xff]
    %v3081 = vld [vmem:[#allocation6 + $0x1c8] sm:$0xff]
    %v3082 = vld [vmem:[#allocation6 + $0x1d0] sm:$0xff]
    %v3083 = vld [vmem:[#allocation6 + $0x1d8] sm:$0xff]
    %v3084 = vld [vmem:[#allocation6 + $0x1e0] sm:$0xff]
    %v3085 = vld [vmem:[#allocation6 + $0x1e8] sm:$0xff]
    %v3086 = vld [vmem:[#allocation6 + $0x1f0] sm:$0xff]
    %v3087 = vld [vmem:[#allocation6 + $0x1f8] sm:$0xff]
    %v3088 = vld [vmem:[%s6] sm:$0x3]
    %v3090 = vlaneseq
    %v3091 = vshrl.u32 %v3090, 7
    %v3092 = vsub.s32 0, %v3091
    %v3093 = vrot.slane %v3088, %v3092
    %v3094 = vlaneseq
    %v3095 = vshrl.u32 %v3094, 7
    %v3096 = vsub.s32 1, %v3095
    %v3097 = vrot.slane %v3088, %v3096
    %v3164 = vunpack.c.l.b16 %v3024
    %v3165 = vunpack.c.h.b16 %v3024
    %v3166 = vunpack.c.l.b16 %v3025
    %v3167 = vunpack.c.h.b16 %v3025
    %v3168 = vunpack.c.l.b16 %v3026
    %v3169 = vunpack.c.h.b16 %v3026
    %v3170 = vunpack.c.l.b16 %v3027
    %v3171 = vunpack.c.h.b16 %v3027
    %v3172 = vunpack.c.l.b16 %v3028
    %v3173 = vunpack.c.h.b16 %v3028
    %v3174 = vunpack.c.l.b16 %v3029
    %v3175 = vunpack.c.h.b16 %v3029
    %v3176 = vunpack.c.l.b16 %v3030
    %v3177 = vunpack.c.h.b16 %v3030
    %v3178 = vunpack.c.l.b16 %v3031
    %v3179 = vunpack.c.h.b16 %v3031
    %v3180 = vunpack.c.l.b16 %v3032
    %v3181 = vunpack.c.h.b16 %v3032
    %v3182 = vunpack.c.l.b16 %v3033
    %v3183 = vunpack.c.h.b16 %v3033
    %v3184 = vunpack.c.l.b16 %v3034
    %v3185 = vunpack.c.h.b16 %v3034
    %v3186 = vunpack.c.l.b16 %v3035
    %v3187 = vunpack.c.h.b16 %v3035
    %v3188 = vunpack.c.l.b16 %v3036
    %v3189 = vunpack.c.h.b16 %v3036
    %v3190 = vunpack.c.l.b16 %v3037
    %v3191 = vunpack.c.h.b16 %v3037
    %v3192 = vunpack.c.l.b16 %v3038
    %v3193 = vunpack.c.h.b16 %v3038
    %v3194 = vunpack.c.l.b16 %v3039
    %v3195 = vunpack.c.h.b16 %v3039
    %v3196 = vunpack.c.l.b16 %v3040
    %v3197 = vunpack.c.h.b16 %v3040
    %v3198 = vunpack.c.l.b16 %v3041
    %v3199 = vunpack.c.h.b16 %v3041
    %v3200 = vunpack.c.l.b16 %v3042
    %v3201 = vunpack.c.h.b16 %v3042
    %v3202 = vunpack.c.l.b16 %v3043
    %v3203 = vunpack.c.h.b16 %v3043
    %v3204 = vunpack.c.l.b16 %v3044
    %v3205 = vunpack.c.h.b16 %v3044
    %v3206 = vunpack.c.l.b16 %v3045
    %v3207 = vunpack.c.h.b16 %v3045
    %v3208 = vunpack.c.l.b16 %v3046
    %v3209 = vunpack.c.h.b16 %v3046
    %v3210 = vunpack.c.l.b16 %v3047
    %v3211 = vunpack.c.h.b16 %v3047
    %v3212 = vunpack.c.l.b16 %v3048
    %v3213 = vunpack.c.h.b16 %v3048
    %v3214 = vunpack.c.l.b16 %v3049
    %v3215 = vunpack.c.h.b16 %v3049
    %v3216 = vunpack.c.l.b16 %v3050
    %v3217 = vunpack.c.h.b16 %v3050
    %v3218 = vunpack.c.l.b16 %v3051
    %v3219 = vunpack.c.h.b16 %v3051
    %v3220 = vunpack.c.l.b16 %v3052
    %v3221 = vunpack.c.h.b16 %v3052
    %v3222 = vunpack.c.l.b16 %v3053
    %v3223 = vunpack.c.h.b16 %v3053
    %v3224 = vunpack.c.l.b16 %v3054
    %v3225 = vunpack.c.h.b16 %v3054
    %v3226 = vunpack.c.l.b16 %v3055
    %v3227 = vunpack.c.h.b16 %v3055
    %v3228 = vunpack.c.l.b16 %v3056
    %v3229 = vunpack.c.h.b16 %v3056
    %v3230 = vunpack.c.l.b16 %v3057
    %v3231 = vunpack.c.h.b16 %v3057
    %v3232 = vunpack.c.l.b16 %v3058
    %v3233 = vunpack.c.h.b16 %v3058
    %v3234 = vunpack.c.l.b16 %v3059
    %v3235 = vunpack.c.h.b16 %v3059
    %v3236 = vunpack.c.l.b16 %v3060
    %v3237 = vunpack.c.h.b16 %v3060
    %v3238 = vunpack.c.l.b16 %v3061
    %v3239 = vunpack.c.h.b16 %v3061
    %v3240 = vunpack.c.l.b16 %v3062
    %v3241 = vunpack.c.h.b16 %v3062
    %v3242 = vunpack.c.l.b16 %v3063
    %v3243 = vunpack.c.h.b16 %v3063
    %v3244 = vunpack.c.l.b16 %v3064
    %v3245 = vunpack.c.h.b16 %v3064
    %v3246 = vunpack.c.l.b16 %v3065
    %v3247 = vunpack.c.h.b16 %v3065
    %v3248 = vunpack.c.l.b16 %v3066
    %v3249 = vunpack.c.h.b16 %v3066
    %v3250 = vunpack.c.l.b16 %v3067
    %v3251 = vunpack.c.h.b16 %v3067
    %v3252 = vunpack.c.l.b16 %v3068
    %v3253 = vunpack.c.h.b16 %v3068
    %v3254 = vunpack.c.l.b16 %v3069
    %v3255 = vunpack.c.h.b16 %v3069
    %v3256 = vunpack.c.l.b16 %v3070
    %v3257 = vunpack.c.h.b16 %v3070
    %v3258 = vunpack.c.l.b16 %v3071
    %v3259 = vunpack.c.h.b16 %v3071
    %v3260 = vunpack.c.l.b16 %v3072
    %v3261 = vunpack.c.h.b16 %v3072
    %v3262 = vunpack.c.l.b16 %v3073
    %v3263 = vunpack.c.h.b16 %v3073
    %v3264 = vunpack.c.l.b16 %v3074
    %v3265 = vunpack.c.h.b16 %v3074
    %v3266 = vunpack.c.l.b16 %v3075
    %v3267 = vunpack.c.h.b16 %v3075
    %v3268 = vunpack.c.l.b16 %v3076
    %v3269 = vunpack.c.h.b16 %v3076
    %v3270 = vunpack.c.l.b16 %v3077
    %v3271 = vunpack.c.h.b16 %v3077
    %v3272 = vunpack.c.l.b16 %v3078
    %v3273 = vunpack.c.h.b16 %v3078
    %v3274 = vunpack.c.l.b16 %v3079
    %v3275 = vunpack.c.h.b16 %v3079
    %v3276 = vunpack.c.l.b16 %v3080
    %v3277 = vunpack.c.h.b16 %v3080
    %v3278 = vunpack.c.l.b16 %v3081
    %v3279 = vunpack.c.h.b16 %v3081
    %v3280 = vunpack.c.l.b16 %v3082
    %v3281 = vunpack.c.h.b16 %v3082
    %v3282 = vunpack.c.l.b16 %v3083
    %v3283 = vunpack.c.h.b16 %v3083
    %v3284 = vunpack.c.l.b16 %v3084
    %v3285 = vunpack.c.h.b16 %v3084
    %v3286 = vunpack.c.l.b16 %v3085
    %v3287 = vunpack.c.h.b16 %v3085
    %v3288 = vunpack.c.l.b16 %v3086
    %v3289 = vunpack.c.h.b16 %v3086
    %v3290 = vunpack.c.l.b16 %v3087
    %v3291 = vunpack.c.h.b16 %v3087
    %v3292 = vpack.c.b16 %v3166, %v3164
    %v3293 = vpack.c.b16 %v3167, %v3165
    %v3294 = vpack.c.b16 %v3170, %v3168
    %v3295 = vpack.c.b16 %v3171, %v3169
    %v3296 = vpack.c.b16 %v3174, %v3172
    %v3297 = vpack.c.b16 %v3175, %v3173
    %v3298 = vpack.c.b16 %v3178, %v3176
    %v3299 = vpack.c.b16 %v3179, %v3177
    %v3300 = vpack.c.b16 %v3182, %v3180
    %v3301 = vpack.c.b16 %v3183, %v3181
    %v3302 = vpack.c.b16 %v3186, %v3184
    %v3303 = vpack.c.b16 %v3187, %v3185
    %v3304 = vpack.c.b16 %v3190, %v3188
    %v3305 = vpack.c.b16 %v3191, %v3189
    %v3306 = vpack.c.b16 %v3194, %v3192
    %v3307 = vpack.c.b16 %v3195, %v3193
    %v3308 = vpack.c.b16 %v3198, %v3196
    %v3309 = vpack.c.b16 %v3199, %v3197
    %v3310 = vpack.c.b16 %v3202, %v3200
    %v3311 = vpack.c.b16 %v3203, %v3201
    %v3312 = vpack.c.b16 %v3206, %v3204
    %v3313 = vpack.c.b16 %v3207, %v3205
    %v3314 = vpack.c.b16 %v3210, %v3208
    %v3315 = vpack.c.b16 %v3211, %v3209
    %v3316 = vpack.c.b16 %v3214, %v3212
    %v3317 = vpack.c.b16 %v3215, %v3213
    %v3318 = vpack.c.b16 %v3218, %v3216
    %v3319 = vpack.c.b16 %v3219, %v3217
    %v3320 = vpack.c.b16 %v3222, %v3220
    %v3321 = vpack.c.b16 %v3223, %v3221
    %v3322 = vpack.c.b16 %v3226, %v3224
    %v3323 = vpack.c.b16 %v3227, %v3225
    %v3324 = vpack.c.b16 %v3230, %v3228
    %v3325 = vpack.c.b16 %v3231, %v3229
    %v3326 = vpack.c.b16 %v3234, %v3232
    %v3327 = vpack.c.b16 %v3235, %v3233
    %v3328 = vpack.c.b16 %v3238, %v3236
    %v3329 = vpack.c.b16 %v3239, %v3237
    %v3330 = vpack.c.b16 %v3242, %v3240
    %v3331 = vpack.c.b16 %v3243, %v3241
    %v3332 = vpack.c.b16 %v3246, %v3244
    %v3333 = vpack.c.b16 %v3247, %v3245
    %v3334 = vpack.c.b16 %v3250, %v3248
    %v3335 = vpack.c.b16 %v3251, %v3249
    %v3336 = vpack.c.b16 %v3254, %v3252
    %v3337 = vpack.c.b16 %v3255, %v3253
    %v3338 = vpack.c.b16 %v3258, %v3256
    %v3339 = vpack.c.b16 %v3259, %v3257
    %v3340 = vpack.c.b16 %v3262, %v3260
    %v3341 = vpack.c.b16 %v3263, %v3261
    %v3342 = vpack.c.b16 %v3266, %v3264
    %v3343 = vpack.c.b16 %v3267, %v3265
    %v3344 = vpack.c.b16 %v3270, %v3268
    %v3345 = vpack.c.b16 %v3271, %v3269
    %v3346 = vpack.c.b16 %v3274, %v3272
    %v3347 = vpack.c.b16 %v3275, %v3273
    %v3348 = vpack.c.b16 %v3278, %v3276
    %v3349 = vpack.c.b16 %v3279, %v3277
    %v3350 = vpack.c.b16 %v3282, %v3280
    %v3351 = vpack.c.b16 %v3283, %v3281
    %v3352 = vpack.c.b16 %v3286, %v3284
    %v3353 = vpack.c.b16 %v3287, %v3285
    %v3354 = vpack.c.b16 %v3290, %v3288
    %v3355 = vpack.c.b16 %v3291, %v3289
    %3420 = vmatprep.subr.bf16.mxu0 %v3293
    %3421 = vmatpush1.bf16.msra.mxu0 %v3292
    %3422 = vmatprep.subr.bf16.mxu0 %v3295
    %3423 = vmatpush1.bf16.msra.mxu0 %v3294
    %3424 = vmatprep.subr.bf16.mxu0 %v3297
    %3425 = vmatpush1.bf16.msra.mxu0 %v3296
    %3426 = vmatprep.subr.bf16.mxu0 %v3299
    %3427 = vmatpush1.bf16.msra.mxu0 %v3298
    %3428 = vmatprep.subr.bf16.mxu0 %v3301
    %3429 = vmatpush1.bf16.msra.mxu0 %v3300
    %3430 = vmatprep.subr.bf16.mxu0 %v3303
    %3431 = vmatpush1.bf16.msra.mxu0 %v3302
    %3432 = vmatprep.subr.bf16.mxu0 %v3305
    %3433 = vmatpush1.bf16.msra.mxu0 %v3304
    %3434 = vmatprep.subr.bf16.mxu0 %v3307
    %3435 = vmatpush1.bf16.msra.mxu0 %v3306
    %3436 = vmatprep.subr.bf16.mxu0 %v3309
    %3437 = vmatpush1.bf16.msra.mxu0 %v3308
    %3438 = vmatprep.subr.bf16.mxu0 %v3311
    %3439 = vmatpush1.bf16.msra.mxu0 %v3310
    %3440 = vmatprep.subr.bf16.mxu0 %v3313
    %3441 = vmatpush1.bf16.msra.mxu0 %v3312
    %3442 = vmatprep.subr.bf16.mxu0 %v3315
    %3443 = vmatpush1.bf16.msra.mxu0 %v3314
    %3444 = vmatprep.subr.bf16.mxu0 %v3317
    %3445 = vmatpush1.bf16.msra.mxu0 %v3316
    %3446 = vmatprep.subr.bf16.mxu0 %v3319
    %3447 = vmatpush1.bf16.msra.mxu0 %v3318
    %3448 = vmatprep.subr.bf16.mxu0 %v3321
    %3449 = vmatpush1.bf16.msra.mxu0 %v3320
    %3450 = vmatprep.subr.bf16.mxu0 %v3323
    %3451 = vmatpush1.bf16.msra.mxu0 %v3322
    %3452 = vmatprep.mubr.bf16.mxu0 %v3021
    %3453 = vmatmul.mubr.bf16.gmra.mrb[0].mxu0 %v3020
    %v3454 = vpop.f32.mrb[0].mxu0
    %v3455 = vadd.f32 %v3093, %v3454
    %v3456 = vpop.f32.mrb[0].mxu0
    %v3457 = vadd.f32 %v3097, %v3456
    %v3458 = vpop.f32.mrb[0].mxu0
    %v3459 = vpop.f32.mrb[0].mxu0
    %3460 = vdwg.mxu0
    %3461 = vmatprep.subr.bf16.mxu0 %v3325
    %3462 = vmatpush1.bf16.msra.mxu0 %v3324
    %3463 = vmatprep.subr.bf16.mxu0 %v3327
    %3464 = vmatpush1.bf16.msra.mxu0 %v3326
    %3465 = vmatprep.subr.bf16.mxu0 %v3329
    %3466 = vmatpush1.bf16.msra.mxu0 %v3328
    %3467 = vmatprep.subr.bf16.mxu0 %v3331
    %3468 = vmatpush1.bf16.msra.mxu0 %v3330
    %3469 = vmatprep.subr.bf16.mxu0 %v3333
    %3470 = vmatpush1.bf16.msra.mxu0 %v3332
    %3471 = vmatprep.subr.bf16.mxu0 %v3335
    %3472 = vmatpush1.bf16.msra.mxu0 %v3334
    %3473 = vmatprep.subr.bf16.mxu0 %v3337
    %3474 = vmatpush1.bf16.msra.mxu0 %v3336
    %3475 = vmatprep.subr.bf16.mxu0 %v3339
    %3476 = vmatpush1.bf16.msra.mxu0 %v3338
    %3477 = vmatprep.subr.bf16.mxu0 %v3341
    %3478 = vmatpush1.bf16.msra.mxu0 %v3340
    %3479 = vmatprep.subr.bf16.mxu0 %v3343
    %3480 = vmatpush1.bf16.msra.mxu0 %v3342
    %3481 = vmatprep.subr.bf16.mxu0 %v3345
    %3482 = vmatpush1.bf16.msra.mxu0 %v3344
    %3483 = vmatprep.subr.bf16.mxu0 %v3347
    %3484 = vmatpush1.bf16.msra.mxu0 %v3346
    %3485 = vmatprep.subr.bf16.mxu0 %v3349
    %3486 = vmatpush1.bf16.msra.mxu0 %v3348
    %3487 = vmatprep.subr.bf16.mxu0 %v3351
    %3488 = vmatpush1.bf16.msra.mxu0 %v3350
    %3489 = vmatprep.subr.bf16.mxu0 %v3353
    %3490 = vmatpush1.bf16.msra.mxu0 %v3352
    %3491 = vmatprep.subr.bf16.mxu0 %v3355
    %3492 = vmatpush1.bf16.msra.mxu0 %v3354
    %3493 = vmatprep.mubr.bf16.mxu0 %v3023
    %3494 = vmatmul.mubr.bf16.gmra.mrb[0].mxu0 %v3022
    %v3495 = vpop.f32.mrb[0].mxu0
    %v3496 = vadd.f32 %v3455, %v3495
    %v3497 = vpop.f32.mrb[0].mxu0
    %v3498 = vadd.f32 %v3457, %v3497
    %v3499 = vpop.f32.mrb[0].mxu0
    %v3500 = vpop.f32.mrb[0].mxu0
    %3501 = vdwg.mxu0
    %v3502 = vmax.f32 %v3496, 0.0
    %v3503 = vmax.f32 %v3498, 0.0
    %v3504 = vpack.c.bf16 %v3502, %v3502
    %v3505 = vpack.c.bf16 %v3503, %v3503
    %v3506 = vld [vmem:[#allocation7] sm:$0xff]
    %v3507 = vld [vmem:[#allocation7 + $0x8] sm:$0xff]
    %v3508 = vld [vmem:[#allocation7 + $0x10] sm:$0xff]
    %v3509 = vld [vmem:[#allocation7 + $0x18] sm:$0xff]
    %v3510 = vld [vmem:[#allocation7 + $0x20] sm:$0xff]
    %v3511 = vld [vmem:[#allocation7 + $0x28] sm:$0xff]
    %v3512 = vld [vmem:[#allocation7 + $0x30] sm:$0xff]
    %v3513 = vld [vmem:[#allocation7 + $0x38] sm:$0xff]
    %v3514 = vld [vmem:[#allocation7 + $0x40] sm:$0xff]
    %v3515 = vld [vmem:[#allocation7 + $0x48] sm:$0xff]
    %v3516 = vld [vmem:[#allocation7 + $0x50] sm:$0xff]
    %v3517 = vld [vmem:[#allocation7 + $0x58] sm:$0xff]
    %v3518 = vld [vmem:[#allocation7 + $0x60] sm:$0xff]
    %v3519 = vld [vmem:[#allocation7 + $0x68] sm:$0xff]
    %v3520 = vld [vmem:[#allocation7 + $0x70] sm:$0xff]
    %v3521 = vld [vmem:[#allocation7 + $0x78] sm:$0xff]
    %v3522 = vld [vmem:[#allocation7 + $0x80] sm:$0xff]
    %v3523 = vld [vmem:[#allocation7 + $0x88] sm:$0xff]
    %v3524 = vld [vmem:[#allocation7 + $0x90] sm:$0xff]
    %v3525 = vld [vmem:[#allocation7 + $0x98] sm:$0xff]
    %v3526 = vld [vmem:[#allocation7 + $0xa0] sm:$0xff]
    %v3527 = vld [vmem:[#allocation7 + $0xa8] sm:$0xff]
    %v3528 = vld [vmem:[#allocation7 + $0xb0] sm:$0xff]
    %v3529 = vld [vmem:[#allocation7 + $0xb8] sm:$0xff]
    %v3530 = vld [vmem:[#allocation7 + $0xc0] sm:$0xff]
    %v3531 = vld [vmem:[#allocation7 + $0xc8] sm:$0xff]
    %v3532 = vld [vmem:[#allocation7 + $0xd0] sm:$0xff]
    %v3533 = vld [vmem:[#allocation7 + $0xd8] sm:$0xff]
    %v3534 = vld [vmem:[#allocation7 + $0xe0] sm:$0xff]
    %v3535 = vld [vmem:[#allocation7 + $0xe8] sm:$0xff]
    %v3536 = vld [vmem:[#allocation7 + $0xf0] sm:$0xff]
    %v3537 = vld [vmem:[#allocation7 + $0xf8] sm:$0xff]
    %v3538 = vld [vmem:[#allocation7 + $0x100] sm:$0xff]
    %v3539 = vld [vmem:[#allocation7 + $0x108] sm:$0xff]
    %v3540 = vld [vmem:[#allocation7 + $0x110] sm:$0xff]
    %v3541 = vld [vmem:[#allocation7 + $0x118] sm:$0xff]
    %v3542 = vld [vmem:[#allocation7 + $0x120] sm:$0xff]
    %v3543 = vld [vmem:[#allocation7 + $0x128] sm:$0xff]
    %v3544 = vld [vmem:[#allocation7 + $0x130] sm:$0xff]
    %v3545 = vld [vmem:[#allocation7 + $0x138] sm:$0xff]
    %v3546 = vld [vmem:[#allocation7 + $0x140] sm:$0xff]
    %v3547 = vld [vmem:[#allocation7 + $0x148] sm:$0xff]
    %v3548 = vld [vmem:[#allocation7 + $0x150] sm:$0xff]
    %v3549 = vld [vmem:[#allocation7 + $0x158] sm:$0xff]
    %v3550 = vld [vmem:[#allocation7 + $0x160] sm:$0xff]
    %v3551 = vld [vmem:[#allocation7 + $0x168] sm:$0xff]
    %v3552 = vld [vmem:[#allocation7 + $0x170] sm:$0xff]
    %v3553 = vld [vmem:[#allocation7 + $0x178] sm:$0xff]
    %v3554 = vld [vmem:[#allocation7 + $0x180] sm:$0xff]
    %v3555 = vld [vmem:[#allocation7 + $0x188] sm:$0xff]
    %v3556 = vld [vmem:[#allocation7 + $0x190] sm:$0xff]
    %v3557 = vld [vmem:[#allocation7 + $0x198] sm:$0xff]
    %v3558 = vld [vmem:[#allocation7 + $0x1a0] sm:$0xff]
    %v3559 = vld [vmem:[#allocation7 + $0x1a8] sm:$0xff]
    %v3560 = vld [vmem:[#allocation7 + $0x1b0] sm:$0xff]
    %v3561 = vld [vmem:[#allocation7 + $0x1b8] sm:$0xff]
    %v3562 = vld [vmem:[#allocation7 + $0x1c0] sm:$0xff]
    %v3563 = vld [vmem:[#allocation7 + $0x1c8] sm:$0xff]
    %v3564 = vld [vmem:[#allocation7 + $0x1d0] sm:$0xff]
    %v3565 = vld [vmem:[#allocation7 + $0x1d8] sm:$0xff]
    %v3566 = vld [vmem:[#allocation7 + $0x1e0] sm:$0xff]
    %v3567 = vld [vmem:[#allocation7 + $0x1e8] sm:$0xff]
    %v3568 = vld [vmem:[#allocation7 + $0x1f0] sm:$0xff]
    %v3569 = vld [vmem:[#allocation7 + $0x1f8] sm:$0xff]
    %v3570 = vld [vmem:[%s8] sm:$0xf]
    %v3572 = vlaneseq
    %v3573 = vshrl.u32 %v3572, 7
    %v3574 = vsub.s32 0, %v3573
    %v3575 = vrot.slane %v3570, %v3574
    %v3576 = vlaneseq
    %v3577 = vshrl.u32 %v3576, 7
    %v3578 = vsub.s32 1, %v3577
    %v3579 = vrot.slane %v3570, %v3578
    %v3580 = vlaneseq
    %v3581 = vshrl.u32 %v3580, 7
    %v3582 = vsub.s32 2, %v3581
    %v3583 = vrot.slane %v3570, %v3582
    %v3584 = vlaneseq
    %v3585 = vshrl.u32 %v3584, 7
    %v3586 = vsub.s32 3, %v3585
    %v3587 = vrot.slane %v3570, %v3586
    %v3656 = vunpack.c.l.b16 %v3506
    %v3657 = vunpack.c.h.b16 %v3506
    %v3658 = vunpack.c.l.b16 %v3507
    %v3659 = vunpack.c.h.b16 %v3507
    %v3660 = vunpack.c.l.b16 %v3508
    %v3661 = vunpack.c.h.b16 %v3508
    %v3662 = vunpack.c.l.b16 %v3509
    %v3663 = vunpack.c.h.b16 %v3509
    %v3664 = vunpack.c.l.b16 %v3510
    %v3665 = vunpack.c.h.b16 %v3510
    %v3666 = vunpack.c.l.b16 %v3511
    %v3667 = vunpack.c.h.b16 %v3511
    %v3668 = vunpack.c.l.b16 %v3512
    %v3669 = vunpack.c.h.b16 %v3512
    %v3670 = vunpack.c.l.b16 %v3513
    %v3671 = vunpack.c.h.b16 %v3513
    %v3672 = vunpack.c.l.b16 %v3514
    %v3673 = vunpack.c.h.b16 %v3514
    %v3674 = vunpack.c.l.b16 %v3515
    %v3675 = vunpack.c.h.b16 %v3515
    %v3676 = vunpack.c.l.b16 %v3516
    %v3677 = vunpack.c.h.b16 %v3516
    %v3678 = vunpack.c.l.b16 %v3517
    %v3679 = vunpack.c.h.b16 %v3517
    %v3680 = vunpack.c.l.b16 %v3518
    %v3681 = vunpack.c.h.b16 %v3518
    %v3682 = vunpack.c.l.b16 %v3519
    %v3683 = vunpack.c.h.b16 %v3519
    %v3684 = vunpack.c.l.b16 %v3520
    %v3685 = vunpack.c.h.b16 %v3520
    %v3686 = vunpack.c.l.b16 %v3521
    %v3687 = vunpack.c.h.b16 %v3521
    %v3688 = vunpack.c.l.b16 %v3522
    %v3689 = vunpack.c.h.b16 %v3522
    %v3690 = vunpack.c.l.b16 %v3523
    %v3691 = vunpack.c.h.b16 %v3523
    %v3692 = vunpack.c.l.b16 %v3524
    %v3693 = vunpack.c.h.b16 %v3524
    %v3694 = vunpack.c.l.b16 %v3525
    %v3695 = vunpack.c.h.b16 %v3525
    %v3696 = vunpack.c.l.b16 %v3526
    %v3697 = vunpack.c.h.b16 %v3526
    %v3698 = vunpack.c.l.b16 %v3527
    %v3699 = vunpack.c.h.b16 %v3527
    %v3700 = vunpack.c.l.b16 %v3528
    %v3701 = vunpack.c.h.b16 %v3528
    %v3702 = vunpack.c.l.b16 %v3529
    %v3703 = vunpack.c.h.b16 %v3529
    %v3704 = vunpack.c.l.b16 %v3530
    %v3705 = vunpack.c.h.b16 %v3530
    %v3706 = vunpack.c.l.b16 %v3531
    %v3707 = vunpack.c.h.b16 %v3531
    %v3708 = vunpack.c.l.b16 %v3532
    %v3709 = vunpack.c.h.b16 %v3532
    %v3710 = vunpack.c.l.b16 %v3533
    %v3711 = vunpack.c.h.b16 %v3533
    %v3712 = vunpack.c.l.b16 %v3534
    %v3713 = vunpack.c.h.b16 %v3534
    %v3714 = vunpack.c.l.b16 %v3535
    %v3715 = vunpack.c.h.b16 %v3535
    %v3716 = vunpack.c.l.b16 %v3536
    %v3717 = vunpack.c.h.b16 %v3536
    %v3718 = vunpack.c.l.b16 %v3537
    %v3719 = vunpack.c.h.b16 %v3537
    %v3720 = vunpack.c.l.b16 %v3538
    %v3721 = vunpack.c.h.b16 %v3538
    %v3722 = vunpack.c.l.b16 %v3539
    %v3723 = vunpack.c.h.b16 %v3539
    %v3724 = vunpack.c.l.b16 %v3540
    %v3725 = vunpack.c.h.b16 %v3540
    %v3726 = vunpack.c.l.b16 %v3541
    %v3727 = vunpack.c.h.b16 %v3541
    %v3728 = vunpack.c.l.b16 %v3542
    %v3729 = vunpack.c.h.b16 %v3542
    %v3730 = vunpack.c.l.b16 %v3543
    %v3731 = vunpack.c.h.b16 %v3543
    %v3732 = vunpack.c.l.b16 %v3544
    %v3733 = vunpack.c.h.b16 %v3544
    %v3734 = vunpack.c.l.b16 %v3545
    %v3735 = vunpack.c.h.b16 %v3545
    %v3736 = vunpack.c.l.b16 %v3546
    %v3737 = vunpack.c.h.b16 %v3546
    %v3738 = vunpack.c.l.b16 %v3547
    %v3739 = vunpack.c.h.b16 %v3547
    %v3740 = vunpack.c.l.b16 %v3548
    %v3741 = vunpack.c.h.b16 %v3548
    %v3742 = vunpack.c.l.b16 %v3549
    %v3743 = vunpack.c.h.b16 %v3549
    %v3744 = vunpack.c.l.b16 %v3550
    %v3745 = vunpack.c.h.b16 %v3550
    %v3746 = vunpack.c.l.b16 %v3551
    %v3747 = vunpack.c.h.b16 %v3551
    %v3748 = vunpack.c.l.b16 %v3552
    %v3749 = vunpack.c.h.b16 %v3552
    %v3750 = vunpack.c.l.b16 %v3553
    %v3751 = vunpack.c.h.b16 %v3553
    %v3752 = vunpack.c.l.b16 %v3554
    %v3753 = vunpack.c.h.b16 %v3554
    %v3754 = vunpack.c.l.b16 %v3555
    %v3755 = vunpack.c.h.b16 %v3555
    %v3756 = vunpack.c.l.b16 %v3556
    %v3757 = vunpack.c.h.b16 %v3556
    %v3758 = vunpack.c.l.b16 %v3557
    %v3759 = vunpack.c.h.b16 %v3557
    %v3760 = vunpack.c.l.b16 %v3558
    %v3761 = vunpack.c.h.b16 %v3558
    %v3762 = vunpack.c.l.b16 %v3559
    %v3763 = vunpack.c.h.b16 %v3559
    %v3764 = vunpack.c.l.b16 %v3560
    %v3765 = vunpack.c.h.b16 %v3560
    %v3766 = vunpack.c.l.b16 %v3561
    %v3767 = vunpack.c.h.b16 %v3561
    %v3768 = vunpack.c.l.b16 %v3562
    %v3769 = vunpack.c.h.b16 %v3562
    %v3770 = vunpack.c.l.b16 %v3563
    %v3771 = vunpack.c.h.b16 %v3563
    %v3772 = vunpack.c.l.b16 %v3564
    %v3773 = vunpack.c.h.b16 %v3564
    %v3774 = vunpack.c.l.b16 %v3565
    %v3775 = vunpack.c.h.b16 %v3565
    %v3776 = vunpack.c.l.b16 %v3566
    %v3777 = vunpack.c.h.b16 %v3566
    %v3778 = vunpack.c.l.b16 %v3567
    %v3779 = vunpack.c.h.b16 %v3567
    %v3780 = vunpack.c.l.b16 %v3568
    %v3781 = vunpack.c.h.b16 %v3568
    %v3782 = vunpack.c.l.b16 %v3569
    %v3783 = vunpack.c.h.b16 %v3569
    %v3784 = vpack.c.b16 %v3660, %v3656
    %v3785 = vpack.c.b16 %v3661, %v3657
    %v3786 = vpack.c.b16 %v3662, %v3658
    %v3787 = vpack.c.b16 %v3663, %v3659
    %v3788 = vpack.c.b16 %v3668, %v3664
    %v3789 = vpack.c.b16 %v3669, %v3665
    %v3790 = vpack.c.b16 %v3670, %v3666
    %v3791 = vpack.c.b16 %v3671, %v3667
    %v3792 = vpack.c.b16 %v3676, %v3672
    %v3793 = vpack.c.b16 %v3677, %v3673
    %v3794 = vpack.c.b16 %v3678, %v3674
    %v3795 = vpack.c.b16 %v3679, %v3675
    %v3796 = vpack.c.b16 %v3684, %v3680
    %v3797 = vpack.c.b16 %v3685, %v3681
    %v3798 = vpack.c.b16 %v3686, %v3682
    %v3799 = vpack.c.b16 %v3687, %v3683
    %v3800 = vpack.c.b16 %v3692, %v3688
    %v3801 = vpack.c.b16 %v3693, %v3689
    %v3802 = vpack.c.b16 %v3694, %v3690
    %v3803 = vpack.c.b16 %v3695, %v3691
    %v3804 = vpack.c.b16 %v3700, %v3696
    %v3805 = vpack.c.b16 %v3701, %v3697
    %v3806 = vpack.c.b16 %v3702, %v3698
    %v3807 = vpack.c.b16 %v3703, %v3699
    %v3808 = vpack.c.b16 %v3708, %v3704
    %v3809 = vpack.c.b16 %v3709, %v3705
    %v3810 = vpack.c.b16 %v3710, %v3706
    %v3811 = vpack.c.b16 %v3711, %v3707
    %v3812 = vpack.c.b16 %v3716, %v3712
    %v3813 = vpack.c.b16 %v3717, %v3713
    %v3814 = vpack.c.b16 %v3718, %v3714
    %v3815 = vpack.c.b16 %v3719, %v3715
    %v3816 = vpack.c.b16 %v3724, %v3720
    %v3817 = vpack.c.b16 %v3725, %v3721
    %v3818 = vpack.c.b16 %v3726, %v3722
    %v3819 = vpack.c.b16 %v3727, %v3723
    %v3820 = vpack.c.b16 %v3732, %v3728
    %v3821 = vpack.c.b16 %v3733, %v3729
    %v3822 = vpack.c.b16 %v3734, %v3730
    %v3823 = vpack.c.b16 %v3735, %v3731
    %v3824 = vpack.c.b16 %v3740, %v3736
    %v3825 = vpack.c.b16 %v3741, %v3737
    %v3826 = vpack.c.b16 %v3742, %v3738
    %v3827 = vpack.c.b16 %v3743, %v3739
    %v3828 = vpack.c.b16 %v3748, %v3744
    %v3829 = vpack.c.b16 %v3749, %v3745
    %v3830 = vpack.c.b16 %v3750, %v3746
    %v3831 = vpack.c.b16 %v3751, %v3747
    %v3832 = vpack.c.b16 %v3756, %v3752
    %v3833 = vpack.c.b16 %v3757, %v3753
    %v3834 = vpack.c.b16 %v3758, %v3754
    %v3835 = vpack.c.b16 %v3759, %v3755
    %v3836 = vpack.c.b16 %v3764, %v3760
    %v3837 = vpack.c.b16 %v3765, %v3761
    %v3838 = vpack.c.b16 %v3766, %v3762
    %v3839 = vpack.c.b16 %v3767, %v3763
    %v3840 = vpack.c.b16 %v3772, %v3768
    %v3841 = vpack.c.b16 %v3773, %v3769
    %v3842 = vpack.c.b16 %v3774, %v3770
    %v3843 = vpack.c.b16 %v3775, %v3771
    %v3844 = vpack.c.b16 %v3780, %v3776
    %v3845 = vpack.c.b16 %v3781, %v3777
    %v3846 = vpack.c.b16 %v3782, %v3778
    %v3847 = vpack.c.b16 %v3783, %v3779
    %3912 = vmatprep.subr.bf16.mxu0 %v3785
    %3913 = vmatpush1.bf16.msra.mxu0 %v3784
    %3914 = vmatprep.subr.bf16.mxu0 %v3789
    %3915 = vmatpush1.bf16.msra.mxu0 %v3788
    %3916 = vmatprep.subr.bf16.mxu0 %v3793
    %3917 = vmatpush1.bf16.msra.mxu0 %v3792
    %3918 = vmatprep.subr.bf16.mxu0 %v3797
    %3919 = vmatpush1.bf16.msra.mxu0 %v3796
    %3920 = vmatprep.subr.bf16.mxu0 %v3801
    %3921 = vmatpush1.bf16.msra.mxu0 %v3800
    %3922 = vmatprep.subr.bf16.mxu0 %v3805
    %3923 = vmatpush1.bf16.msra.mxu0 %v3804
    %3924 = vmatprep.subr.bf16.mxu0 %v3809
    %3925 = vmatpush1.bf16.msra.mxu0 %v3808
    %3926 = vmatprep.subr.bf16.mxu0 %v3813
    %3927 = vmatpush1.bf16.msra.mxu0 %v3812
    %3928 = vmatprep.subr.bf16.mxu0 %v3817
    %3929 = vmatpush1.bf16.msra.mxu0 %v3816
    %3930 = vmatprep.subr.bf16.mxu0 %v3821
    %3931 = vmatpush1.bf16.msra.mxu0 %v3820
    %3932 = vmatprep.subr.bf16.mxu0 %v3825
    %3933 = vmatpush1.bf16.msra.mxu0 %v3824
    %3934 = vmatprep.subr.bf16.mxu0 %v3829
    %3935 = vmatpush1.bf16.msra.mxu0 %v3828
    %3936 = vmatprep.subr.bf16.mxu0 %v3833
    %3937 = vmatpush1.bf16.msra.mxu0 %v3832
    %3938 = vmatprep.subr.bf16.mxu0 %v3837
    %3939 = vmatpush1.bf16.msra.mxu0 %v3836
    %3940 = vmatprep.subr.bf16.mxu0 %v3841
    %3941 = vmatpush1.bf16.msra.mxu0 %v3840
    %3942 = vmatprep.subr.bf16.mxu0 %v3845
    %3943 = vmatpush1.bf16.msra.mxu0 %v3844
    %3944 = vmatprep.mubr.bf16.mxu0 %v3505
    %3945 = vmatmul.mubr.bf16.gmra.mrb[0].mxu0 %v3504
    %v3946 = vpop.f32.mrb[0].mxu0
    %v3947 = vadd.f32 %v3575, %v3946
    %v3948 = vpop.f32.mrb[0].mxu0
    %v3949 = vadd.f32 %v3579, %v3948
    %v3950 = vpop.f32.mrb[0].mxu0
    %v3951 = vpop.f32.mrb[0].mxu0
    %3952 = vdwg.mxu0
    %3953 = vmatprep.subr.bf16.mxu0 %v3787
    %3954 = vmatpush1.bf16.msra.mxu0 %v3786
    %3955 = vmatprep.subr.bf16.mxu0 %v3791
    %3956 = vmatpush1.bf16.msra.mxu0 %v3790
    %3957 = vmatprep.subr.bf16.mxu0 %v3795
    %3958 = vmatpush1.bf16.msra.mxu0 %v3794
    %3959 = vmatprep.subr.bf16.mxu0 %v3799
    %3960 = vmatpush1.bf16.msra.mxu0 %v3798
    %3961 = vmatprep.subr.bf16.mxu0 %v3803
    %3962 = vmatpush1.bf16.msra.mxu0 %v3802
    %3963 = vmatprep.subr.bf16.mxu0 %v3807
    %3964 = vmatpush1.bf16.msra.mxu0 %v3806
    %3965 = vmatprep.subr.bf16.mxu0 %v3811
    %3966 = vmatpush1.bf16.msra.mxu0 %v3810
    %3967 = vmatprep.subr.bf16.mxu0 %v3815
    %3968 = vmatpush1.bf16.msra.mxu0 %v3814
    %3969 = vmatprep.subr.bf16.mxu0 %v3819
    %3970 = vmatpush1.bf16.msra.mxu0 %v3818
    %3971 = vmatprep.subr.bf16.mxu0 %v3823
    %3972 = vmatpush1.bf16.msra.mxu0 %v3822
    %3973 = vmatprep.subr.bf16.mxu0 %v3827
    %3974 = vmatpush1.bf16.msra.mxu0 %v3826
    %3975 = vmatprep.subr.bf16.mxu0 %v3831
    %3976 = vmatpush1.bf16.msra.mxu0 %v3830
    %3977 = vmatprep.subr.bf16.mxu0 %v3835
    %3978 = vmatpush1.bf16.msra.mxu0 %v3834
    %3979 = vmatprep.subr.bf16.mxu0 %v3839
    %3980 = vmatpush1.bf16.msra.mxu0 %v3838
    %3981 = vmatprep.subr.bf16.mxu0 %v3843
    %3982 = vmatpush1.bf16.msra.mxu0 %v3842
    %3983 = vmatprep.subr.bf16.mxu0 %v3847
    %3984 = vmatpush1.bf16.msra.mxu0 %v3846
    %3985 = vmatprep.mubr.bf16.mxu0 %v3505
    %3986 = vmatmul.mubr.bf16.gmra.mrb[0].mxu0 %v3504
    %v3987 = vpop.f32.mrb[0].mxu0
    %v3988 = vadd.f32 %v3583, %v3987
    %v3989 = vpop.f32.mrb[0].mxu0
    %v3990 = vadd.f32 %v3587, %v3989
    %v3991 = vpop.f32.mrb[0].mxu0
    %v3992 = vpop.f32.mrb[0].mxu0
    %3993 = vdwg.mxu0
    %v3994 = vmax.f32 %v3947, 0.0
    %v3995 = vmax.f32 %v3949, 0.0
    %v3996 = vmax.f32 %v3988, 0.0
    %v3997 = vmax.f32 %v3990, 0.0
    %v3998 = vpack.c.bf16 %v3994, %v3994
    %v3999 = vpack.c.bf16 %v3995, %v3995
    %v4000 = vpack.c.bf16 %v3996, %v3996
    %v4001 = vpack.c.bf16 %v3997, %v3997
    %v4002 = vld [vmem:[#allocation9] sm:$0xff]
    %v4003 = vld [vmem:[#allocation9 + $0x8] sm:$0xff]
    %v4004 = vld [vmem:[#allocation9 + $0x10] sm:$0xff]
    %v4005 = vld [vmem:[#allocation9 + $0x18] sm:$0xff]
    %v4006 = vld [vmem:[#allocation9 + $0x20] sm:$0xff]
    %v4007 = vld [vmem:[#allocation9 + $0x28] sm:$0xff]
    %v4008 = vld [vmem:[#allocation9 + $0x30] sm:$0xff]
    %v4009 = vld [vmem:[#allocation9 + $0x38] sm:$0xff]
    %v4010 = vld [vmem:[#allocation9 + $0x40] sm:$0xff]
    %v4011 = vld [vmem:[#allocation9 + $0x48] sm:$0xff]
    %v4012 = vld [vmem:[#allocation9 + $0x50] sm:$0xff]
    %v4013 = vld [vmem:[#allocation9 + $0x58] sm:$0xff]
    %v4014 = vld [vmem:[#allocation9 + $0x60] sm:$0xff]
    %v4015 = vld [vmem:[#allocation9 + $0x68] sm:$0xff]
    %v4016 = vld [vmem:[#allocation9 + $0x70] sm:$0xff]
    %v4017 = vld [vmem:[#allocation9 + $0x78] sm:$0xff]
    %v4018 = vld [vmem:[#allocation9 + $0x80] sm:$0xff]
    %v4019 = vld [vmem:[#allocation9 + $0x88] sm:$0xff]
    %v4020 = vld [vmem:[#allocation9 + $0x90] sm:$0xff]
    %v4021 = vld [vmem:[#allocation9 + $0x98] sm:$0xff]
    %v4022 = vld [vmem:[#allocation9 + $0xa0] sm:$0xff]
    %v4023 = vld [vmem:[#allocation9 + $0xa8] sm:$0xff]
    %v4024 = vld [vmem:[#allocation9 + $0xb0] sm:$0xff]
    %v4025 = vld [vmem:[#allocation9 + $0xb8] sm:$0xff]
    %v4026 = vld [vmem:[#allocation9 + $0xc0] sm:$0xff]
    %v4027 = vld [vmem:[#allocation9 + $0xc8] sm:$0xff]
    %v4028 = vld [vmem:[#allocation9 + $0xd0] sm:$0xff]
    %v4029 = vld [vmem:[#allocation9 + $0xd8] sm:$0xff]
    %v4030 = vld [vmem:[#allocation9 + $0xe0] sm:$0xff]
    %v4031 = vld [vmem:[#allocation9 + $0xe8] sm:$0xff]
    %v4032 = vld [vmem:[#allocation9 + $0xf0] sm:$0xff]
    %v4033 = vld [vmem:[#allocation9 + $0xf8] sm:$0xff]
    %v4034 = vld [vmem:[#allocation9 + $0x100] sm:$0xff]
    %v4035 = vld [vmem:[#allocation9 + $0x108] sm:$0xff]
    %v4036 = vld [vmem:[#allocation9 + $0x110] sm:$0xff]
    %v4037 = vld [vmem:[#allocation9 + $0x118] sm:$0xff]
    %v4038 = vld [vmem:[#allocation9 + $0x120] sm:$0xff]
    %v4039 = vld [vmem:[#allocation9 + $0x128] sm:$0xff]
    %v4040 = vld [vmem:[#allocation9 + $0x130] sm:$0xff]
    %v4041 = vld [vmem:[#allocation9 + $0x138] sm:$0xff]
    %v4042 = vld [vmem:[#allocation9 + $0x140] sm:$0xff]
    %v4043 = vld [vmem:[#allocation9 + $0x148] sm:$0xff]
    %v4044 = vld [vmem:[#allocation9 + $0x150] sm:$0xff]
    %v4045 = vld [vmem:[#allocation9 + $0x158] sm:$0xff]
    %v4046 = vld [vmem:[#allocation9 + $0x160] sm:$0xff]
    %v4047 = vld [vmem:[#allocation9 + $0x168] sm:$0xff]
    %v4048 = vld [vmem:[#allocation9 + $0x170] sm:$0xff]
    %v4049 = vld [vmem:[#allocation9 + $0x178] sm:$0xff]
    %v4050 = vld [vmem:[#allocation9 + $0x180] sm:$0xff]
    %v4051 = vld [vmem:[#allocation9 + $0x188] sm:$0xff]
    %v4052 = vld [vmem:[#allocation9 + $0x190] sm:$0xff]
    %v4053 = vld [vmem:[#allocation9 + $0x198] sm:$0xff]
    %v4054 = vld [vmem:[#allocation9 + $0x1a0] sm:$0xff]
    %v4055 = vld [vmem:[#allocation9 + $0x1a8] sm:$0xff]
    %v4056 = vld [vmem:[#allocation9 + $0x1b0] sm:$0xff]
    %v4057 = vld [vmem:[#allocation9 + $0x1b8] sm:$0xff]
    %v4058 = vld [vmem:[#allocation9 + $0x1c0] sm:$0xff]
    %v4059 = vld [vmem:[#allocation9 + $0x1c8] sm:$0xff]
    %v4060 = vld [vmem:[#allocation9 + $0x1d0] sm:$0xff]
    %v4061 = vld [vmem:[#allocation9 + $0x1d8] sm:$0xff]
    %v4062 = vld [vmem:[#allocation9 + $0x1e0] sm:$0xff]
    %v4063 = vld [vmem:[#allocation9 + $0x1e8] sm:$0xff]
    %v4064 = vld [vmem:[#allocation9 + $0x1f0] sm:$0xff]
    %v4065 = vld [vmem:[#allocation9 + $0x1f8] sm:$0xff]
    %v4066 = vld [vmem:[#allocation9 + $0x200] sm:$0xff]
    %v4067 = vld [vmem:[#allocation9 + $0x208] sm:$0xff]
    %v4068 = vld [vmem:[#allocation9 + $0x210] sm:$0xff]
    %v4069 = vld [vmem:[#allocation9 + $0x218] sm:$0xff]
    %v4070 = vld [vmem:[#allocation9 + $0x220] sm:$0xff]
    %v4071 = vld [vmem:[#allocation9 + $0x228] sm:$0xff]
    %v4072 = vld [vmem:[#allocation9 + $0x230] sm:$0xff]
    %v4073 = vld [vmem:[#allocation9 + $0x238] sm:$0xff]
    %v4074 = vld [vmem:[#allocation9 + $0x240] sm:$0xff]
    %v4075 = vld [vmem:[#allocation9 + $0x248] sm:$0xff]
    %v4076 = vld [vmem:[#allocation9 + $0x250] sm:$0xff]
    %v4077 = vld [vmem:[#allocation9 + $0x258] sm:$0xff]
    %v4078 = vld [vmem:[#allocation9 + $0x260] sm:$0xff]
    %v4079 = vld [vmem:[#allocation9 + $0x268] sm:$0xff]
    %v4080 = vld [vmem:[#allocation9 + $0x270] sm:$0xff]
    %v4081 = vld [vmem:[#allocation9 + $0x278] sm:$0xff]
    %v4082 = vld [vmem:[#allocation9 + $0x280] sm:$0xff]
    %v4083 = vld [vmem:[#allocation9 + $0x288] sm:$0xff]
    %v4084 = vld [vmem:[#allocation9 + $0x290] sm:$0xff]
    %v4085 = vld [vmem:[#allocation9 + $0x298] sm:$0xff]
    %v4086 = vld [vmem:[#allocation9 + $0x2a0] sm:$0xff]
    %v4087 = vld [vmem:[#allocation9 + $0x2a8] sm:$0xff]
    %v4088 = vld [vmem:[#allocation9 + $0x2b0] sm:$0xff]
    %v4089 = vld [vmem:[#allocation9 + $0x2b8] sm:$0xff]
    %v4090 = vld [vmem:[#allocation9 + $0x2c0] sm:$0xff]
    %v4091 = vld [vmem:[#allocation9 + $0x2c8] sm:$0xff]
    %v4092 = vld [vmem:[#allocation9 + $0x2d0] sm:$0xff]
    %v4093 = vld [vmem:[#allocation9 + $0x2d8] sm:$0xff]
    %v4094 = vld [vmem:[#allocation9 + $0x2e0] sm:$0xff]
    %v4095 = vld [vmem:[#allocation9 + $0x2e8] sm:$0xff]
    %v4096 = vld [vmem:[#allocation9 + $0x2f0] sm:$0xff]
    %v4097 = vld [vmem:[#allocation9 + $0x2f8] sm:$0xff]
    %v4098 = vld [vmem:[#allocation9 + $0x300] sm:$0xff]
    %v4099 = vld [vmem:[#allocation9 + $0x308] sm:$0xff]
    %v4100 = vld [vmem:[#allocation9 + $0x310] sm:$0xff]
    %v4101 = vld [vmem:[#allocation9 + $0x318] sm:$0xff]
    %v4102 = vld [vmem:[#allocation9 + $0x320] sm:$0xff]
    %v4103 = vld [vmem:[#allocation9 + $0x328] sm:$0xff]
    %v4104 = vld [vmem:[#allocation9 + $0x330] sm:$0xff]
    %v4105 = vld [vmem:[#allocation9 + $0x338] sm:$0xff]
    %v4106 = vld [vmem:[#allocation9 + $0x340] sm:$0xff]
    %v4107 = vld [vmem:[#allocation9 + $0x348] sm:$0xff]
    %v4108 = vld [vmem:[#allocation9 + $0x350] sm:$0xff]
    %v4109 = vld [vmem:[#allocation9 + $0x358] sm:$0xff]
    %v4110 = vld [vmem:[#allocation9 + $0x360] sm:$0xff]
    %v4111 = vld [vmem:[#allocation9 + $0x368] sm:$0xff]
    %v4112 = vld [vmem:[#allocation9 + $0x370] sm:$0xff]
    %v4113 = vld [vmem:[#allocation9 + $0x378] sm:$0xff]
    %v4114 = vld [vmem:[#allocation9 + $0x380] sm:$0xff]
    %v4115 = vld [vmem:[#allocation9 + $0x388] sm:$0xff]
    %v4116 = vld [vmem:[#allocation9 + $0x390] sm:$0xff]
    %v4117 = vld [vmem:[#allocation9 + $0x398] sm:$0xff]
    %v4118 = vld [vmem:[#allocation9 + $0x3a0] sm:$0xff]
    %v4119 = vld [vmem:[#allocation9 + $0x3a8] sm:$0xff]
    %v4120 = vld [vmem:[#allocation9 + $0x3b0] sm:$0xff]
    %v4121 = vld [vmem:[#allocation9 + $0x3b8] sm:$0xff]
    %v4122 = vld [vmem:[#allocation9 + $0x3c0] sm:$0xff]
    %v4123 = vld [vmem:[#allocation9 + $0x3c8] sm:$0xff]
    %v4124 = vld [vmem:[#allocation9 + $0x3d0] sm:$0xff]
    %v4125 = vld [vmem:[#allocation9 + $0x3d8] sm:$0xff]
    %v4126 = vld [vmem:[#allocation9 + $0x3e0] sm:$0xff]
    %v4127 = vld [vmem:[#allocation9 + $0x3e8] sm:$0xff]
    %v4128 = vld [vmem:[#allocation9 + $0x3f0] sm:$0xff]
    %v4129 = vld [vmem:[#allocation9 + $0x3f8] sm:$0xff]
    %v4130 = vld [vmem:[#allocation9 + $0x400] sm:$0xff]
    %v4131 = vld [vmem:[#allocation9 + $0x408] sm:$0xff]
    %v4132 = vld [vmem:[#allocation9 + $0x410] sm:$0xff]
    %v4133 = vld [vmem:[#allocation9 + $0x418] sm:$0xff]
    %v4134 = vld [vmem:[#allocation9 + $0x420] sm:$0xff]
    %v4135 = vld [vmem:[#allocation9 + $0x428] sm:$0xff]
    %v4136 = vld [vmem:[#allocation9 + $0x430] sm:$0xff]
    %v4137 = vld [vmem:[#allocation9 + $0x438] sm:$0xff]
    %v4138 = vld [vmem:[#allocation9 + $0x440] sm:$0xff]
    %v4139 = vld [vmem:[#allocation9 + $0x448] sm:$0xff]
    %v4140 = vld [vmem:[#allocation9 + $0x450] sm:$0xff]
    %v4141 = vld [vmem:[#allocation9 + $0x458] sm:$0xff]
    %v4142 = vld [vmem:[#allocation9 + $0x460] sm:$0xff]
    %v4143 = vld [vmem:[#allocation9 + $0x468] sm:$0xff]
    %v4144 = vld [vmem:[#allocation9 + $0x470] sm:$0xff]
    %v4145 = vld [vmem:[#allocation9 + $0x478] sm:$0xff]
    %v4146 = vld [vmem:[#allocation9 + $0x480] sm:$0xff]
    %v4147 = vld [vmem:[#allocation9 + $0x488] sm:$0xff]
    %v4148 = vld [vmem:[#allocation9 + $0x490] sm:$0xff]
    %v4149 = vld [vmem:[#allocation9 + $0x498] sm:$0xff]
    %v4150 = vld [vmem:[#allocation9 + $0x4a0] sm:$0xff]
    %v4151 = vld [vmem:[#allocation9 + $0x4a8] sm:$0xff]
    %v4152 = vld [vmem:[#allocation9 + $0x4b0] sm:$0xff]
    %v4153 = vld [vmem:[#allocation9 + $0x4b8] sm:$0xff]
    %v4154 = vld [vmem:[#allocation9 + $0x4c0] sm:$0xff]
    %v4155 = vld [vmem:[#allocation9 + $0x4c8] sm:$0xff]
    %v4156 = vld [vmem:[#allocation9 + $0x4d0] sm:$0xff]
    %v4157 = vld [vmem:[#allocation9 + $0x4d8] sm:$0xff]
    %v4158 = vld [vmem:[#allocation9 + $0x4e0] sm:$0xff]
    %v4159 = vld [vmem:[#allocation9 + $0x4e8] sm:$0xff]
    %v4160 = vld [vmem:[#allocation9 + $0x4f0] sm:$0xff]
    %v4161 = vld [vmem:[#allocation9 + $0x4f8] sm:$0xff]
    %v4162 = vld [vmem:[#allocation9 + $0x500] sm:$0xff]
    %v4163 = vld [vmem:[#allocation9 + $0x508] sm:$0xff]
    %v4164 = vld [vmem:[#allocation9 + $0x510] sm:$0xff]
    %v4165 = vld [vmem:[#allocation9 + $0x518] sm:$0xff]
    %v4166 = vld [vmem:[#allocation9 + $0x520] sm:$0xff]
    %v4167 = vld [vmem:[#allocation9 + $0x528] sm:$0xff]
    %v4168 = vld [vmem:[#allocation9 + $0x530] sm:$0xff]
    %v4169 = vld [vmem:[#allocation9 + $0x538] sm:$0xff]
    %v4170 = vld [vmem:[#allocation9 + $0x540] sm:$0xff]
    %v4171 = vld [vmem:[#allocation9 + $0x548] sm:$0xff]
    %v4172 = vld [vmem:[#allocation9 + $0x550] sm:$0xff]
    %v4173 = vld [vmem:[#allocation9 + $0x558] sm:$0xff]
    %v4174 = vld [vmem:[#allocation9 + $0x560] sm:$0xff]
    %v4175 = vld [vmem:[#allocation9 + $0x568] sm:$0xff]
    %v4176 = vld [vmem:[#allocation9 + $0x570] sm:$0xff]
    %v4177 = vld [vmem:[#allocation9 + $0x578] sm:$0xff]
    %v4178 = vld [vmem:[#allocation9 + $0x580] sm:$0xff]
    %v4179 = vld [vmem:[#allocation9 + $0x588] sm:$0xff]
    %v4180 = vld [vmem:[#allocation9 + $0x590] sm:$0xff]
    %v4181 = vld [vmem:[#allocation9 + $0x598] sm:$0xff]
    %v4182 = vld [vmem:[#allocation9 + $0x5a0] sm:$0xff]
    %v4183 = vld [vmem:[#allocation9 + $0x5a8] sm:$0xff]
    %v4184 = vld [vmem:[#allocation9 + $0x5b0] sm:$0xff]
    %v4185 = vld [vmem:[#allocation9 + $0x5b8] sm:$0xff]
    %v4186 = vld [vmem:[#allocation9 + $0x5c0] sm:$0xff]
    %v4187 = vld [vmem:[#allocation9 + $0x5c8] sm:$0xff]
    %v4188 = vld [vmem:[#allocation9 + $0x5d0] sm:$0xff]
    %v4189 = vld [vmem:[#allocation9 + $0x5d8] sm:$0xff]
    %v4190 = vld [vmem:[#allocation9 + $0x5e0] sm:$0xff]
    %v4191 = vld [vmem:[#allocation9 + $0x5e8] sm:$0xff]
    %v4192 = vld [vmem:[#allocation9 + $0x5f0] sm:$0xff]
    %v4193 = vld [vmem:[#allocation9 + $0x5f8] sm:$0xff]
    %v4194 = vld [vmem:[#allocation9 + $0x600] sm:$0xff]
    %v4195 = vld [vmem:[#allocation9 + $0x608] sm:$0xff]
    %v4196 = vld [vmem:[#allocation9 + $0x610] sm:$0xff]
    %v4197 = vld [vmem:[#allocation9 + $0x618] sm:$0xff]
    %v4198 = vld [vmem:[#allocation9 + $0x620] sm:$0xff]
    %v4199 = vld [vmem:[#allocation9 + $0x628] sm:$0xff]
    %v4200 = vld [vmem:[#allocation9 + $0x630] sm:$0xff]
    %v4201 = vld [vmem:[#allocation9 + $0x638] sm:$0xff]
    %v4202 = vld [vmem:[#allocation9 + $0x640] sm:$0xff]
    %v4203 = vld [vmem:[#allocation9 + $0x648] sm:$0xff]
    %v4204 = vld [vmem:[#allocation9 + $0x650] sm:$0xff]
    %v4205 = vld [vmem:[#allocation9 + $0x658] sm:$0xff]
    %v4206 = vld [vmem:[#allocation9 + $0x660] sm:$0xff]
    %v4207 = vld [vmem:[#allocation9 + $0x668] sm:$0xff]
    %v4208 = vld [vmem:[#allocation9 + $0x670] sm:$0xff]
    %v4209 = vld [vmem:[#allocation9 + $0x678] sm:$0xff]
    %v4210 = vld [vmem:[#allocation9 + $0x680] sm:$0xff]
    %v4211 = vld [vmem:[#allocation9 + $0x688] sm:$0xff]
    %v4212 = vld [vmem:[#allocation9 + $0x690] sm:$0xff]
    %v4213 = vld [vmem:[#allocation9 + $0x698] sm:$0xff]
    %v4214 = vld [vmem:[#allocation9 + $0x6a0] sm:$0xff]
    %v4215 = vld [vmem:[#allocation9 + $0x6a8] sm:$0xff]
    %v4216 = vld [vmem:[#allocation9 + $0x6b0] sm:$0xff]
    %v4217 = vld [vmem:[#allocation9 + $0x6b8] sm:$0xff]
    %v4218 = vld [vmem:[#allocation9 + $0x6c0] sm:$0xff]
    %v4219 = vld [vmem:[#allocation9 + $0x6c8] sm:$0xff]
    %v4220 = vld [vmem:[#allocation9 + $0x6d0] sm:$0xff]
    %v4221 = vld [vmem:[#allocation9 + $0x6d8] sm:$0xff]
    %v4222 = vld [vmem:[#allocation9 + $0x6e0] sm:$0xff]
    %v4223 = vld [vmem:[#allocation9 + $0x6e8] sm:$0xff]
    %v4224 = vld [vmem:[#allocation9 + $0x6f0] sm:$0xff]
    %v4225 = vld [vmem:[#allocation9 + $0x6f8] sm:$0xff]
    %v4226 = vld [vmem:[#allocation9 + $0x700] sm:$0xff]
    %v4227 = vld [vmem:[#allocation9 + $0x708] sm:$0xff]
    %v4228 = vld [vmem:[#allocation9 + $0x710] sm:$0xff]
    %v4229 = vld [vmem:[#allocation9 + $0x718] sm:$0xff]
    %v4230 = vld [vmem:[#allocation9 + $0x720] sm:$0xff]
    %v4231 = vld [vmem:[#allocation9 + $0x728] sm:$0xff]
    %v4232 = vld [vmem:[#allocation9 + $0x730] sm:$0xff]
    %v4233 = vld [vmem:[#allocation9 + $0x738] sm:$0xff]
    %v4234 = vld [vmem:[#allocation9 + $0x740] sm:$0xff]
    %v4235 = vld [vmem:[#allocation9 + $0x748] sm:$0xff]
    %v4236 = vld [vmem:[#allocation9 + $0x750] sm:$0xff]
    %v4237 = vld [vmem:[#allocation9 + $0x758] sm:$0xff]
    %v4238 = vld [vmem:[#allocation9 + $0x760] sm:$0xff]
    %v4239 = vld [vmem:[#allocation9 + $0x768] sm:$0xff]
    %v4240 = vld [vmem:[#allocation9 + $0x770] sm:$0xff]
    %v4241 = vld [vmem:[#allocation9 + $0x778] sm:$0xff]
    %v4242 = vld [vmem:[#allocation9 + $0x780] sm:$0xff]
    %v4243 = vld [vmem:[#allocation9 + $0x788] sm:$0xff]
    %v4244 = vld [vmem:[#allocation9 + $0x790] sm:$0xff]
    %v4245 = vld [vmem:[#allocation9 + $0x798] sm:$0xff]
    %v4246 = vld [vmem:[#allocation9 + $0x7a0] sm:$0xff]
    %v4247 = vld [vmem:[#allocation9 + $0x7a8] sm:$0xff]
    %v4248 = vld [vmem:[#allocation9 + $0x7b0] sm:$0xff]
    %v4249 = vld [vmem:[#allocation9 + $0x7b8] sm:$0xff]
    %v4250 = vld [vmem:[#allocation9 + $0x7c0] sm:$0xff]
    %v4251 = vld [vmem:[#allocation9 + $0x7c8] sm:$0xff]
    %v4252 = vld [vmem:[#allocation9 + $0x7d0] sm:$0xff]
    %v4253 = vld [vmem:[#allocation9 + $0x7d8] sm:$0xff]
    %v4254 = vld [vmem:[#allocation9 + $0x7e0] sm:$0xff]
    %v4255 = vld [vmem:[#allocation9 + $0x7e8] sm:$0xff]
    %v4256 = vld [vmem:[#allocation9 + $0x7f0] sm:$0xff]
    %v4257 = vld [vmem:[#allocation9 + $0x7f8] sm:$0xff]
    %v4258 = vld [vmem:[%s10] sm:$0xff]
    %v4260 = vlaneseq
    %v4261 = vshrl.u32 %v4260, 7
    %v4262 = vsub.s32 0, %v4261
    %v4263 = vrot.slane %v4258, %v4262
    %v4264 = vlaneseq
    %v4265 = vshrl.u32 %v4264, 7
    %v4266 = vsub.s32 1, %v4265
    %v4267 = vrot.slane %v4258, %v4266
    %v4268 = vlaneseq
    %v4269 = vshrl.u32 %v4268, 7
    %v4270 = vsub.s32 2, %v4269
    %v4271 = vrot.slane %v4258, %v4270
    %v4272 = vlaneseq
    %v4273 = vshrl.u32 %v4272, 7
    %v4274 = vsub.s32 3, %v4273
    %v4275 = vrot.slane %v4258, %v4274
    %v4276 = vlaneseq
    %v4277 = vshrl.u32 %v4276, 7
    %v4278 = vsub.s32 4, %v4277
    %v4279 = vrot.slane %v4258, %v4278
    %v4280 = vlaneseq
    %v4281 = vshrl.u32 %v4280, 7
    %v4282 = vsub.s32 5, %v4281
    %v4283 = vrot.slane %v4258, %v4282
    %v4284 = vlaneseq
    %v4285 = vshrl.u32 %v4284, 7
    %v4286 = vsub.s32 6, %v4285
    %v4287 = vrot.slane %v4258, %v4286
    %v4288 = vlaneseq
    %v4289 = vshrl.u32 %v4288, 7
    %v4290 = vsub.s32 7, %v4289
    %v4291 = vrot.slane %v4258, %v4290
    %v4556 = vunpack.c.l.b16 %v4002
    %v4557 = vunpack.c.h.b16 %v4002
    %v4558 = vunpack.c.l.b16 %v4003
    %v4559 = vunpack.c.h.b16 %v4003
    %v4560 = vunpack.c.l.b16 %v4004
    %v4561 = vunpack.c.h.b16 %v4004
    %v4562 = vunpack.c.l.b16 %v4005
    %v4563 = vunpack.c.h.b16 %v4005
    %v4564 = vunpack.c.l.b16 %v4006
    %v4565 = vunpack.c.h.b16 %v4006
    %v4566 = vunpack.c.l.b16 %v4007
    %v4567 = vunpack.c.h.b16 %v4007
    %v4568 = vunpack.c.l.b16 %v4008
    %v4569 = vunpack.c.h.b16 %v4008
    %v4570 = vunpack.c.l.b16 %v4009
    %v4571 = vunpack.c.h.b16 %v4009
    %v4572 = vunpack.c.l.b16 %v4010
    %v4573 = vunpack.c.h.b16 %v4010
    %v4574 = vunpack.c.l.b16 %v4011
    %v4575 = vunpack.c.h.b16 %v4011
    %v4576 = vunpack.c.l.b16 %v4012
    %v4577 = vunpack.c.h.b16 %v4012
    %v4578 = vunpack.c.l.b16 %v4013
    %v4579 = vunpack.c.h.b16 %v4013
    %v4580 = vunpack.c.l.b16 %v4014
    %v4581 = vunpack.c.h.b16 %v4014
    %v4582 = vunpack.c.l.b16 %v4015
    %v4583 = vunpack.c.h.b16 %v4015
    %v4584 = vunpack.c.l.b16 %v4016
    %v4585 = vunpack.c.h.b16 %v4016
    %v4586 = vunpack.c.l.b16 %v4017
    %v4587 = vunpack.c.h.b16 %v4017
    %v4588 = vunpack.c.l.b16 %v4018
    %v4589 = vunpack.c.h.b16 %v4018
    %v4590 = vunpack.c.l.b16 %v4019
    %v4591 = vunpack.c.h.b16 %v4019
    %v4592 = vunpack.c.l.b16 %v4020
    %v4593 = vunpack.c.h.b16 %v4020
    %v4594 = vunpack.c.l.b16 %v4021
    %v4595 = vunpack.c.h.b16 %v4021
    %v4596 = vunpack.c.l.b16 %v4022
    %v4597 = vunpack.c.h.b16 %v4022
    %v4598 = vunpack.c.l.b16 %v4023
    %v4599 = vunpack.c.h.b16 %v4023
    %v4600 = vunpack.c.l.b16 %v4024
    %v4601 = vunpack.c.h.b16 %v4024
    %v4602 = vunpack.c.l.b16 %v4025
    %v4603 = vunpack.c.h.b16 %v4025
    %v4604 = vunpack.c.l.b16 %v4026
    %v4605 = vunpack.c.h.b16 %v4026
    %v4606 = vunpack.c.l.b16 %v4027
    %v4607 = vunpack.c.h.b16 %v4027
    %v4608 = vunpack.c.l.b16 %v4028
    %v4609 = vunpack.c.h.b16 %v4028
    %v4610 = vunpack.c.l.b16 %v4029
    %v4611 = vunpack.c.h.b16 %v4029
    %v4612 = vunpack.c.l.b16 %v4030
    %v4613 = vunpack.c.h.b16 %v4030
    %v4614 = vunpack.c.l.b16 %v4031
    %v4615 = vunpack.c.h.b16 %v4031
    %v4616 = vunpack.c.l.b16 %v4032
    %v4617 = vunpack.c.h.b16 %v4032
    %v4618 = vunpack.c.l.b16 %v4033
    %v4619 = vunpack.c.h.b16 %v4033
    %v4620 = vunpack.c.l.b16 %v4034
    %v4621 = vunpack.c.h.b16 %v4034
    %v4622 = vunpack.c.l.b16 %v4035
    %v4623 = vunpack.c.h.b16 %v4035
    %v4624 = vunpack.c.l.b16 %v4036
    %v4625 = vunpack.c.h.b16 %v4036
    %v4626 = vunpack.c.l.b16 %v4037
    %v4627 = vunpack.c.h.b16 %v4037
    %v4628 = vunpack.c.l.b16 %v4038
    %v4629 = vunpack.c.h.b16 %v4038
    %v4630 = vunpack.c.l.b16 %v4039
    %v4631 = vunpack.c.h.b16 %v4039
    %v4632 = vunpack.c.l.b16 %v4040
    %v4633 = vunpack.c.h.b16 %v4040
    %v4634 = vunpack.c.l.b16 %v4041
    %v4635 = vunpack.c.h.b16 %v4041
    %v4636 = vunpack.c.l.b16 %v4042
    %v4637 = vunpack.c.h.b16 %v4042
    %v4638 = vunpack.c.l.b16 %v4043
    %v4639 = vunpack.c.h.b16 %v4043
    %v4640 = vunpack.c.l.b16 %v4044
    %v4641 = vunpack.c.h.b16 %v4044
    %v4642 = vunpack.c.l.b16 %v4045
    %v4643 = vunpack.c.h.b16 %v4045
    %v4644 = vunpack.c.l.b16 %v4046
    %v4645 = vunpack.c.h.b16 %v4046
    %v4646 = vunpack.c.l.b16 %v4047
    %v4647 = vunpack.c.h.b16 %v4047
    %v4648 = vunpack.c.l.b16 %v4048
    %v4649 = vunpack.c.h.b16 %v4048
    %v4650 = vunpack.c.l.b16 %v4049
    %v4651 = vunpack.c.h.b16 %v4049
    %v4652 = vunpack.c.l.b16 %v4050
    %v4653 = vunpack.c.h.b16 %v4050
    %v4654 = vunpack.c.l.b16 %v4051
    %v4655 = vunpack.c.h.b16 %v4051
    %v4656 = vunpack.c.l.b16 %v4052
    %v4657 = vunpack.c.h.b16 %v4052
    %v4658 = vunpack.c.l.b16 %v4053
    %v4659 = vunpack.c.h.b16 %v4053
    %v4660 = vunpack.c.l.b16 %v4054
    %v4661 = vunpack.c.h.b16 %v4054
    %v4662 = vunpack.c.l.b16 %v4055
    %v4663 = vunpack.c.h.b16 %v4055
    %v4664 = vunpack.c.l.b16 %v4056
    %v4665 = vunpack.c.h.b16 %v4056
    %v4666 = vunpack.c.l.b16 %v4057
    %v4667 = vunpack.c.h.b16 %v4057
    %v4668 = vunpack.c.l.b16 %v4058
    %v4669 = vunpack.c.h.b16 %v4058
    %v4670 = vunpack.c.l.b16 %v4059
    %v4671 = vunpack.c.h.b16 %v4059
    %v4672 = vunpack.c.l.b16 %v4060
    %v4673 = vunpack.c.h.b16 %v4060
    %v4674 = vunpack.c.l.b16 %v4061
    %v4675 = vunpack.c.h.b16 %v4061
    %v4676 = vunpack.c.l.b16 %v4062
    %v4677 = vunpack.c.h.b16 %v4062
    %v4678 = vunpack.c.l.b16 %v4063
    %v4679 = vunpack.c.h.b16 %v4063
    %v4680 = vunpack.c.l.b16 %v4064
    %v4681 = vunpack.c.h.b16 %v4064
    %v4682 = vunpack.c.l.b16 %v4065
    %v4683 = vunpack.c.h.b16 %v4065
    %v4684 = vunpack.c.l.b16 %v4066
    %v4685 = vunpack.c.h.b16 %v4066
    %v4686 = vunpack.c.l.b16 %v4067
    %v4687 = vunpack.c.h.b16 %v4067
    %v4688 = vunpack.c.l.b16 %v4068
    %v4689 = vunpack.c.h.b16 %v4068
    %v4690 = vunpack.c.l.b16 %v4069
    %v4691 = vunpack.c.h.b16 %v4069
    %v4692 = vunpack.c.l.b16 %v4070
    %v4693 = vunpack.c.h.b16 %v4070
    %v4694 = vunpack.c.l.b16 %v4071
    %v4695 = vunpack.c.h.b16 %v4071
    %v4696 = vunpack.c.l.b16 %v4072
    %v4697 = vunpack.c.h.b16 %v4072
    %v4698 = vunpack.c.l.b16 %v4073
    %v4699 = vunpack.c.h.b16 %v4073
    %v4700 = vunpack.c.l.b16 %v4074
    %v4701 = vunpack.c.h.b16 %v4074
    %v4702 = vunpack.c.l.b16 %v4075
    %v4703 = vunpack.c.h.b16 %v4075
    %v4704 = vunpack.c.l.b16 %v4076
    %v4705 = vunpack.c.h.b16 %v4076
    %v4706 = vunpack.c.l.b16 %v4077
    %v4707 = vunpack.c.h.b16 %v4077
    %v4708 = vunpack.c.l.b16 %v4078
    %v4709 = vunpack.c.h.b16 %v4078
    %v4710 = vunpack.c.l.b16 %v4079
    %v4711 = vunpack.c.h.b16 %v4079
    %v4712 = vunpack.c.l.b16 %v4080
    %v4713 = vunpack.c.h.b16 %v4080
    %v4714 = vunpack.c.l.b16 %v4081
    %v4715 = vunpack.c.h.b16 %v4081
    %v4716 = vunpack.c.l.b16 %v4082
    %v4717 = vunpack.c.h.b16 %v4082
    %v4718 = vunpack.c.l.b16 %v4083
    %v4719 = vunpack.c.h.b16 %v4083
    %v4720 = vunpack.c.l.b16 %v4084
    %v4721 = vunpack.c.h.b16 %v4084
    %v4722 = vunpack.c.l.b16 %v4085
    %v4723 = vunpack.c.h.b16 %v4085
    %v4724 = vunpack.c.l.b16 %v4086
    %v4725 = vunpack.c.h.b16 %v4086
    %v4726 = vunpack.c.l.b16 %v4087
    %v4727 = vunpack.c.h.b16 %v4087
    %v4728 = vunpack.c.l.b16 %v4088
    %v4729 = vunpack.c.h.b16 %v4088
    %v4730 = vunpack.c.l.b16 %v4089
    %v4731 = vunpack.c.h.b16 %v4089
    %v4732 = vunpack.c.l.b16 %v4090
    %v4733 = vunpack.c.h.b16 %v4090
    %v4734 = vunpack.c.l.b16 %v4091
    %v4735 = vunpack.c.h.b16 %v4091
    %v4736 = vunpack.c.l.b16 %v4092
    %v4737 = vunpack.c.h.b16 %v4092
    %v4738 = vunpack.c.l.b16 %v4093
    %v4739 = vunpack.c.h.b16 %v4093
    %v4740 = vunpack.c.l.b16 %v4094
    %v4741 = vunpack.c.h.b16 %v4094
    %v4742 = vunpack.c.l.b16 %v4095
    %v4743 = vunpack.c.h.b16 %v4095
    %v4744 = vunpack.c.l.b16 %v4096
    %v4745 = vunpack.c.h.b16 %v4096
    %v4746 = vunpack.c.l.b16 %v4097
    %v4747 = vunpack.c.h.b16 %v4097
    %v4748 = vunpack.c.l.b16 %v4098
    %v4749 = vunpack.c.h.b16 %v4098
    %v4750 = vunpack.c.l.b16 %v4099
    %v4751 = vunpack.c.h.b16 %v4099
    %v4752 = vunpack.c.l.b16 %v4100
    %v4753 = vunpack.c.h.b16 %v4100
    %v4754 = vunpack.c.l.b16 %v4101
    %v4755 = vunpack.c.h.b16 %v4101
    %v4756 = vunpack.c.l.b16 %v4102
    %v4757 = vunpack.c.h.b16 %v4102
    %v4758 = vunpack.c.l.b16 %v4103
    %v4759 = vunpack.c.h.b16 %v4103
    %v4760 = vunpack.c.l.b16 %v4104
    %v4761 = vunpack.c.h.b16 %v4104
    %v4762 = vunpack.c.l.b16 %v4105
    %v4763 = vunpack.c.h.b16 %v4105
    %v4764 = vunpack.c.l.b16 %v4106
    %v4765 = vunpack.c.h.b16 %v4106
    %v4766 = vunpack.c.l.b16 %v4107
    %v4767 = vunpack.c.h.b16 %v4107
    %v4768 = vunpack.c.l.b16 %v4108
    %v4769 = vunpack.c.h.b16 %v4108
    %v4770 = vunpack.c.l.b16 %v4109
    %v4771 = vunpack.c.h.b16 %v4109
    %v4772 = vunpack.c.l.b16 %v4110
    %v4773 = vunpack.c.h.b16 %v4110
    %v4774 = vunpack.c.l.b16 %v4111
    %v4775 = vunpack.c.h.b16 %v4111
    %v4776 = vunpack.c.l.b16 %v4112
    %v4777 = vunpack.c.h.b16 %v4112
    %v4778 = vunpack.c.l.b16 %v4113
    %v4779 = vunpack.c.h.b16 %v4113
    %v4780 = vunpack.c.l.b16 %v4114
    %v4781 = vunpack.c.h.b16 %v4114
    %v4782 = vunpack.c.l.b16 %v4115
    %v4783 = vunpack.c.h.b16 %v4115
    %v4784 = vunpack.c.l.b16 %v4116
    %v4785 = vunpack.c.h.b16 %v4116
    %v4786 = vunpack.c.l.b16 %v4117
    %v4787 = vunpack.c.h.b16 %v4117
    %v4788 = vunpack.c.l.b16 %v4118
    %v4789 = vunpack.c.h.b16 %v4118
    %v4790 = vunpack.c.l.b16 %v4119
    %v4791 = vunpack.c.h.b16 %v4119
    %v4792 = vunpack.c.l.b16 %v4120
    %v4793 = vunpack.c.h.b16 %v4120
    %v4794 = vunpack.c.l.b16 %v4121
    %v4795 = vunpack.c.h.b16 %v4121
    %v4796 = vunpack.c.l.b16 %v4122
    %v4797 = vunpack.c.h.b16 %v4122
    %v4798 = vunpack.c.l.b16 %v4123
    %v4799 = vunpack.c.h.b16 %v4123
    %v4800 = vunpack.c.l.b16 %v4124
    %v4801 = vunpack.c.h.b16 %v4124
    %v4802 = vunpack.c.l.b16 %v4125
    %v4803 = vunpack.c.h.b16 %v4125
    %v4804 = vunpack.c.l.b16 %v4126
    %v4805 = vunpack.c.h.b16 %v4126
    %v4806 = vunpack.c.l.b16 %v4127
    %v4807 = vunpack.c.h.b16 %v4127
    %v4808 = vunpack.c.l.b16 %v4128
    %v4809 = vunpack.c.h.b16 %v4128
    %v4810 = vunpack.c.l.b16 %v4129
    %v4811 = vunpack.c.h.b16 %v4129
    %v4812 = vunpack.c.l.b16 %v4130
    %v4813 = vunpack.c.h.b16 %v4130
    %v4814 = vunpack.c.l.b16 %v4131
    %v4815 = vunpack.c.h.b16 %v4131
    %v4816 = vunpack.c.l.b16 %v4132
    %v4817 = vunpack.c.h.b16 %v4132
    %v4818 = vunpack.c.l.b16 %v4133
    %v4819 = vunpack.c.h.b16 %v4133
    %v4820 = vunpack.c.l.b16 %v4134
    %v4821 = vunpack.c.h.b16 %v4134
    %v4822 = vunpack.c.l.b16 %v4135
    %v4823 = vunpack.c.h.b16 %v4135
    %v4824 = vunpack.c.l.b16 %v4136
    %v4825 = vunpack.c.h.b16 %v4136
    %v4826 = vunpack.c.l.b16 %v4137
    %v4827 = vunpack.c.h.b16 %v4137
    %v4828 = vunpack.c.l.b16 %v4138
    %v4829 = vunpack.c.h.b16 %v4138
    %v4830 = vunpack.c.l.b16 %v4139
    %v4831 = vunpack.c.h.b16 %v4139
    %v4832 = vunpack.c.l.b16 %v4140
    %v4833 = vunpack.c.h.b16 %v4140
    %v4834 = vunpack.c.l.b16 %v4141
    %v4835 = vunpack.c.h.b16 %v4141
    %v4836 = vunpack.c.l.b16 %v4142
    %v4837 = vunpack.c.h.b16 %v4142
    %v4838 = vunpack.c.l.b16 %v4143
    %v4839 = vunpack.c.h.b16 %v4143
    %v4840 = vunpack.c.l.b16 %v4144
    %v4841 = vunpack.c.h.b16 %v4144
    %v4842 = vunpack.c.l.b16 %v4145
    %v4843 = vunpack.c.h.b16 %v4145
    %v4844 = vunpack.c.l.b16 %v4146
    %v4845 = vunpack.c.h.b16 %v4146
    %v4846 = vunpack.c.l.b16 %v4147
    %v4847 = vunpack.c.h.b16 %v4147
    %v4848 = vunpack.c.l.b16 %v4148
    %v4849 = vunpack.c.h.b16 %v4148
    %v4850 = vunpack.c.l.b16 %v4149
    %v4851 = vunpack.c.h.b16 %v4149
    %v4852 = vunpack.c.l.b16 %v4150
    %v4853 = vunpack.c.h.b16 %v4150
    %v4854 = vunpack.c.l.b16 %v4151
    %v4855 = vunpack.c.h.b16 %v4151
    %v4856 = vunpack.c.l.b16 %v4152
    %v4857 = vunpack.c.h.b16 %v4152
    %v4858 = vunpack.c.l.b16 %v4153
    %v4859 = vunpack.c.h.b16 %v4153
    %v4860 = vunpack.c.l.b16 %v4154
    %v4861 = vunpack.c.h.b16 %v4154
    %v4862 = vunpack.c.l.b16 %v4155
    %v4863 = vunpack.c.h.b16 %v4155
    %v4864 = vunpack.c.l.b16 %v4156
    %v4865 = vunpack.c.h.b16 %v4156
    %v4866 = vunpack.c.l.b16 %v4157
    %v4867 = vunpack.c.h.b16 %v4157
    %v4868 = vunpack.c.l.b16 %v4158
    %v4869 = vunpack.c.h.b16 %v4158
    %v4870 = vunpack.c.l.b16 %v4159
    %v4871 = vunpack.c.h.b16 %v4159
    %v4872 = vunpack.c.l.b16 %v4160
    %v4873 = vunpack.c.h.b16 %v4160
    %v4874 = vunpack.c.l.b16 %v4161
    %v4875 = vunpack.c.h.b16 %v4161
    %v4876 = vunpack.c.l.b16 %v4162
    %v4877 = vunpack.c.h.b16 %v4162
    %v4878 = vunpack.c.l.b16 %v4163
    %v4879 = vunpack.c.h.b16 %v4163
    %v4880 = vunpack.c.l.b16 %v4164
    %v4881 = vunpack.c.h.b16 %v4164
    %v4882 = vunpack.c.l.b16 %v4165
    %v4883 = vunpack.c.h.b16 %v4165
    %v4884 = vunpack.c.l.b16 %v4166
    %v4885 = vunpack.c.h.b16 %v4166
    %v4886 = vunpack.c.l.b16 %v4167
    %v4887 = vunpack.c.h.b16 %v4167
    %v4888 = vunpack.c.l.b16 %v4168
    %v4889 = vunpack.c.h.b16 %v4168
    %v4890 = vunpack.c.l.b16 %v4169
    %v4891 = vunpack.c.h.b16 %v4169
    %v4892 = vunpack.c.l.b16 %v4170
    %v4893 = vunpack.c.h.b16 %v4170
    %v4894 = vunpack.c.l.b16 %v4171
    %v4895 = vunpack.c.h.b16 %v4171
    %v4896 = vunpack.c.l.b16 %v4172
    %v4897 = vunpack.c.h.b16 %v4172
    %v4898 = vunpack.c.l.b16 %v4173
    %v4899 = vunpack.c.h.b16 %v4173
    %v4900 = vunpack.c.l.b16 %v4174
    %v4901 = vunpack.c.h.b16 %v4174
    %v4902 = vunpack.c.l.b16 %v4175
    %v4903 = vunpack.c.h.b16 %v4175
    %v4904 = vunpack.c.l.b16 %v4176
    %v4905 = vunpack.c.h.b16 %v4176
    %v4906 = vunpack.c.l.b16 %v4177
    %v4907 = vunpack.c.h.b16 %v4177
    %v4908 = vunpack.c.l.b16 %v4178
    %v4909 = vunpack.c.h.b16 %v4178
    %v4910 = vunpack.c.l.b16 %v4179
    %v4911 = vunpack.c.h.b16 %v4179
    %v4912 = vunpack.c.l.b16 %v4180
    %v4913 = vunpack.c.h.b16 %v4180
    %v4914 = vunpack.c.l.b16 %v4181
    %v4915 = vunpack.c.h.b16 %v4181
    %v4916 = vunpack.c.l.b16 %v4182
    %v4917 = vunpack.c.h.b16 %v4182
    %v4918 = vunpack.c.l.b16 %v4183
    %v4919 = vunpack.c.h.b16 %v4183
    %v4920 = vunpack.c.l.b16 %v4184
    %v4921 = vunpack.c.h.b16 %v4184
    %v4922 = vunpack.c.l.b16 %v4185
    %v4923 = vunpack.c.h.b16 %v4185
    %v4924 = vunpack.c.l.b16 %v4186
    %v4925 = vunpack.c.h.b16 %v4186
    %v4926 = vunpack.c.l.b16 %v4187
    %v4927 = vunpack.c.h.b16 %v4187
    %v4928 = vunpack.c.l.b16 %v4188
    %v4929 = vunpack.c.h.b16 %v4188
    %v4930 = vunpack.c.l.b16 %v4189
    %v4931 = vunpack.c.h.b16 %v4189
    %v4932 = vunpack.c.l.b16 %v4190
    %v4933 = vunpack.c.h.b16 %v4190
    %v4934 = vunpack.c.l.b16 %v4191
    %v4935 = vunpack.c.h.b16 %v4191
    %v4936 = vunpack.c.l.b16 %v4192
    %v4937 = vunpack.c.h.b16 %v4192
    %v4938 = vunpack.c.l.b16 %v4193
    %v4939 = vunpack.c.h.b16 %v4193
    %v4940 = vunpack.c.l.b16 %v4194
    %v4941 = vunpack.c.h.b16 %v4194
    %v4942 = vunpack.c.l.b16 %v4195
    %v4943 = vunpack.c.h.b16 %v4195
    %v4944 = vunpack.c.l.b16 %v4196
    %v4945 = vunpack.c.h.b16 %v4196
    %v4946 = vunpack.c.l.b16 %v4197
    %v4947 = vunpack.c.h.b16 %v4197
    %v4948 = vunpack.c.l.b16 %v4198
    %v4949 = vunpack.c.h.b16 %v4198
    %v4950 = vunpack.c.l.b16 %v4199
    %v4951 = vunpack.c.h.b16 %v4199
    %v4952 = vunpack.c.l.b16 %v4200
    %v4953 = vunpack.c.h.b16 %v4200
    %v4954 = vunpack.c.l.b16 %v4201
    %v4955 = vunpack.c.h.b16 %v4201
    %v4956 = vunpack.c.l.b16 %v4202
    %v4957 = vunpack.c.h.b16 %v4202
    %v4958 = vunpack.c.l.b16 %v4203
    %v4959 = vunpack.c.h.b16 %v4203
    %v4960 = vunpack.c.l.b16 %v4204
    %v4961 = vunpack.c.h.b16 %v4204
    %v4962 = vunpack.c.l.b16 %v4205
    %v4963 = vunpack.c.h.b16 %v4205
    %v4964 = vunpack.c.l.b16 %v4206
    %v4965 = vunpack.c.h.b16 %v4206
    %v4966 = vunpack.c.l.b16 %v4207
    %v4967 = vunpack.c.h.b16 %v4207
    %v4968 = vunpack.c.l.b16 %v4208
    %v4969 = vunpack.c.h.b16 %v4208
    %v4970 = vunpack.c.l.b16 %v4209
    %v4971 = vunpack.c.h.b16 %v4209
    %v4972 = vunpack.c.l.b16 %v4210
    %v4973 = vunpack.c.h.b16 %v4210
    %v4974 = vunpack.c.l.b16 %v4211
    %v4975 = vunpack.c.h.b16 %v4211
    %v4976 = vunpack.c.l.b16 %v4212
    %v4977 = vunpack.c.h.b16 %v4212
    %v4978 = vunpack.c.l.b16 %v4213
    %v4979 = vunpack.c.h.b16 %v4213
    %v4980 = vunpack.c.l.b16 %v4214
    %v4981 = vunpack.c.h.b16 %v4214
    %v4982 = vunpack.c.l.b16 %v4215
    %v4983 = vunpack.c.h.b16 %v4215
    %v4984 = vunpack.c.l.b16 %v4216
    %v4985 = vunpack.c.h.b16 %v4216
    %v4986 = vunpack.c.l.b16 %v4217
    %v4987 = vunpack.c.h.b16 %v4217
    %v4988 = vunpack.c.l.b16 %v4218
    %v4989 = vunpack.c.h.b16 %v4218
    %v4990 = vunpack.c.l.b16 %v4219
    %v4991 = vunpack.c.h.b16 %v4219
    %v4992 = vunpack.c.l.b16 %v4220
    %v4993 = vunpack.c.h.b16 %v4220
    %v4994 = vunpack.c.l.b16 %v4221
    %v4995 = vunpack.c.h.b16 %v4221
    %v4996 = vunpack.c.l.b16 %v4222
    %v4997 = vunpack.c.h.b16 %v4222
    %v4998 = vunpack.c.l.b16 %v4223
    %v4999 = vunpack.c.h.b16 %v4223
    %v5000 = vunpack.c.l.b16 %v4224
    %v5001 = vunpack.c.h.b16 %v4224
    %v5002 = vunpack.c.l.b16 %v4225
    %v5003 = vunpack.c.h.b16 %v4225
    %v5004 = vunpack.c.l.b16 %v4226
    %v5005 = vunpack.c.h.b16 %v4226
    %v5006 = vunpack.c.l.b16 %v4227
    %v5007 = vunpack.c.h.b16 %v4227
    %v5008 = vunpack.c.l.b16 %v4228
    %v5009 = vunpack.c.h.b16 %v4228
    %v5010 = vunpack.c.l.b16 %v4229
    %v5011 = vunpack.c.h.b16 %v4229
    %v5012 = vunpack.c.l.b16 %v4230
    %v5013 = vunpack.c.h.b16 %v4230
    %v5014 = vunpack.c.l.b16 %v4231
    %v5015 = vunpack.c.h.b16 %v4231
    %v5016 = vunpack.c.l.b16 %v4232
    %v5017 = vunpack.c.h.b16 %v4232
    %v5018 = vunpack.c.l.b16 %v4233
    %v5019 = vunpack.c.h.b16 %v4233
    %v5020 = vunpack.c.l.b16 %v4234
    %v5021 = vunpack.c.h.b16 %v4234
    %v5022 = vunpack.c.l.b16 %v4235
    %v5023 = vunpack.c.h.b16 %v4235
    %v5024 = vunpack.c.l.b16 %v4236
    %v5025 = vunpack.c.h.b16 %v4236
    %v5026 = vunpack.c.l.b16 %v4237
    %v5027 = vunpack.c.h.b16 %v4237
    %v5028 = vunpack.c.l.b16 %v4238
    %v5029 = vunpack.c.h.b16 %v4238
    %v5030 = vunpack.c.l.b16 %v4239
    %v5031 = vunpack.c.h.b16 %v4239
    %v5032 = vunpack.c.l.b16 %v4240
    %v5033 = vunpack.c.h.b16 %v4240
    %v5034 = vunpack.c.l.b16 %v4241
    %v5035 = vunpack.c.h.b16 %v4241
    %v5036 = vunpack.c.l.b16 %v4242
    %v5037 = vunpack.c.h.b16 %v4242
    %v5038 = vunpack.c.l.b16 %v4243
    %v5039 = vunpack.c.h.b16 %v4243
    %v5040 = vunpack.c.l.b16 %v4244
    %v5041 = vunpack.c.h.b16 %v4244
    %v5042 = vunpack.c.l.b16 %v4245
    %v5043 = vunpack.c.h.b16 %v4245
    %v5044 = vunpack.c.l.b16 %v4246
    %v5045 = vunpack.c.h.b16 %v4246
    %v5046 = vunpack.c.l.b16 %v4247
    %v5047 = vunpack.c.h.b16 %v4247
    %v5048 = vunpack.c.l.b16 %v4248
    %v5049 = vunpack.c.h.b16 %v4248
    %v5050 = vunpack.c.l.b16 %v4249
    %v5051 = vunpack.c.h.b16 %v4249
    %v5052 = vunpack.c.l.b16 %v4250
    %v5053 = vunpack.c.h.b16 %v4250
    %v5054 = vunpack.c.l.b16 %v4251
    %v5055 = vunpack.c.h.b16 %v4251
    %v5056 = vunpack.c.l.b16 %v4252
    %v5057 = vunpack.c.h.b16 %v4252
    %v5058 = vunpack.c.l.b16 %v4253
    %v5059 = vunpack.c.h.b16 %v4253
    %v5060 = vunpack.c.l.b16 %v4254
    %v5061 = vunpack.c.h.b16 %v4254
    %v5062 = vunpack.c.l.b16 %v4255
    %v5063 = vunpack.c.h.b16 %v4255
    %v5064 = vunpack.c.l.b16 %v4256
    %v5065 = vunpack.c.h.b16 %v4256
    %v5066 = vunpack.c.l.b16 %v4257
    %v5067 = vunpack.c.h.b16 %v4257
    %v5068 = vpack.c.b16 %v4564, %v4556
    %v5069 = vpack.c.b16 %v4565, %v4557
    %v5070 = vpack.c.b16 %v4566, %v4558
    %v5071 = vpack.c.b16 %v4567, %v4559
    %v5072 = vpack.c.b16 %v4568, %v4560
    %v5073 = vpack.c.b16 %v4569, %v4561
    %v5074 = vpack.c.b16 %v4570, %v4562
    %v5075 = vpack.c.b16 %v4571, %v4563
    %v5076 = vpack.c.b16 %v4580, %v4572
    %v5077 = vpack.c.b16 %v4581, %v4573
    %v5078 = vpack.c.b16 %v4582, %v4574
    %v5079 = vpack.c.b16 %v4583, %v4575
    %v5080 = vpack.c.b16 %v4584, %v4576
    %v5081 = vpack.c.b16 %v4585, %v4577
    %v5082 = vpack.c.b16 %v4586, %v4578
    %v5083 = vpack.c.b16 %v4587, %v4579
    %v5084 = vpack.c.b16 %v4596, %v4588
    %v5085 = vpack.c.b16 %v4597, %v4589
    %v5086 = vpack.c.b16 %v4598, %v4590
    %v5087 = vpack.c.b16 %v4599, %v4591
    %v5088 = vpack.c.b16 %v4600, %v4592
    %v5089 = vpack.c.b16 %v4601, %v4593
    %v5090 = vpack.c.b16 %v4602, %v4594
    %v5091 = vpack.c.b16 %v4603, %v4595
    %v5092 = vpack.c.b16 %v4612, %v4604
    %v5093 = vpack.c.b16 %v4613, %v4605
    %v5094 = vpack.c.b16 %v4614, %v4606
    %v5095 = vpack.c.b16 %v4615, %v4607
    %v5096 = vpack.c.b16 %v4616, %v4608
    %v5097 = vpack.c.b16 %v4617, %v4609
    %v5098 = vpack.c.b16 %v4618, %v4610
    %v5099 = vpack.c.b16 %v4619, %v4611
    %v5100 = vpack.c.b16 %v4628, %v4620
    %v5101 = vpack.c.b16 %v4629, %v4621
    %v5102 = vpack.c.b16 %v4630, %v4622
    %v5103 = vpack.c.b16 %v4631, %v4623
    %v5104 = vpack.c.b16 %v4632, %v4624
    %v5105 = vpack.c.b16 %v4633, %v4625
    %v5106 = vpack.c.b16 %v4634, %v4626
    %v5107 = vpack.c.b16 %v4635, %v4627
    %v5108 = vpack.c.b16 %v4644, %v4636
    %v5109 = vpack.c.b16 %v4645, %v4637
    %v5110 = vpack.c.b16 %v4646, %v4638
    %v5111 = vpack.c.b16 %v4647, %v4639
    %v5112 = vpack.c.b16 %v4648, %v4640
    %v5113 = vpack.c.b16 %v4649, %v4641
    %v5114 = vpack.c.b16 %v4650, %v4642
    %v5115 = vpack.c.b16 %v4651, %v4643
    %v5116 = vpack.c.b16 %v4660, %v4652
    %v5117 = vpack.c.b16 %v4661, %v4653
    %v5118 = vpack.c.b16 %v4662, %v4654
    %v5119 = vpack.c.b16 %v4663, %v4655
    %v5120 = vpack.c.b16 %v4664, %v4656
    %v5121 = vpack.c.b16 %v4665, %v4657
    %v5122 = vpack.c.b16 %v4666, %v4658
    %v5123 = vpack.c.b16 %v4667, %v4659
    %v5124 = vpack.c.b16 %v4676, %v4668
    %v5125 = vpack.c.b16 %v4677, %v4669
    %v5126 = vpack.c.b16 %v4678, %v4670
    %v5127 = vpack.c.b16 %v4679, %v4671
    %v5128 = vpack.c.b16 %v4680, %v4672
    %v5129 = vpack.c.b16 %v4681, %v4673
    %v5130 = vpack.c.b16 %v4682, %v4674
    %v5131 = vpack.c.b16 %v4683, %v4675
    %v5132 = vpack.c.b16 %v4692, %v4684
    %v5133 = vpack.c.b16 %v4693, %v4685
    %v5134 = vpack.c.b16 %v4694, %v4686
    %v5135 = vpack.c.b16 %v4695, %v4687
    %v5136 = vpack.c.b16 %v4696, %v4688
    %v5137 = vpack.c.b16 %v4697, %v4689
    %v5138 = vpack.c.b16 %v4698, %v4690
    %v5139 = vpack.c.b16 %v4699, %v4691
    %v5140 = vpack.c.b16 %v4708, %v4700
    %v5141 = vpack.c.b16 %v4709, %v4701
    %v5142 = vpack.c.b16 %v4710, %v4702
    %v5143 = vpack.c.b16 %v4711, %v4703
    %v5144 = vpack.c.b16 %v4712, %v4704
    %v5145 = vpack.c.b16 %v4713, %v4705
    %v5146 = vpack.c.b16 %v4714, %v4706
    %v5147 = vpack.c.b16 %v4715, %v4707
    %v5148 = vpack.c.b16 %v4724, %v4716
    %v5149 = vpack.c.b16 %v4725, %v4717
    %v5150 = vpack.c.b16 %v4726, %v4718
    %v5151 = vpack.c.b16 %v4727, %v4719
    %v5152 = vpack.c.b16 %v4728, %v4720
    %v5153 = vpack.c.b16 %v4729, %v4721
    %v5154 = vpack.c.b16 %v4730, %v4722
    %v5155 = vpack.c.b16 %v4731, %v4723
    %v5156 = vpack.c.b16 %v4740, %v4732
    %v5157 = vpack.c.b16 %v4741, %v4733
    %v5158 = vpack.c.b16 %v4742, %v4734
    %v5159 = vpack.c.b16 %v4743, %v4735
    %v5160 = vpack.c.b16 %v4744, %v4736
    %v5161 = vpack.c.b16 %v4745, %v4737
    %v5162 = vpack.c.b16 %v4746, %v4738
    %v5163 = vpack.c.b16 %v4747, %v4739
    %v5164 = vpack.c.b16 %v4756, %v4748
    %v5165 = vpack.c.b16 %v4757, %v4749
    %v5166 = vpack.c.b16 %v4758, %v4750
    %v5167 = vpack.c.b16 %v4759, %v4751
    %v5168 = vpack.c.b16 %v4760, %v4752
    %v5169 = vpack.c.b16 %v4761, %v4753
    %v5170 = vpack.c.b16 %v4762, %v4754
    %v5171 = vpack.c.b16 %v4763, %v4755
    %v5172 = vpack.c.b16 %v4772, %v4764
    %v5173 = vpack.c.b16 %v4773, %v4765
    %v5174 = vpack.c.b16 %v4774, %v4766
    %v5175 = vpack.c.b16 %v4775, %v4767
    %v5176 = vpack.c.b16 %v4776, %v4768
    %v5177 = vpack.c.b16 %v4777, %v4769
    %v5178 = vpack.c.b16 %v4778, %v4770
    %v5179 = vpack.c.b16 %v4779, %v4771
    %v5180 = vpack.c.b16 %v4788, %v4780
    %v5181 = vpack.c.b16 %v4789, %v4781
    %v5182 = vpack.c.b16 %v4790, %v4782
    %v5183 = vpack.c.b16 %v4791, %v4783
    %v5184 = vpack.c.b16 %v4792, %v4784
    %v5185 = vpack.c.b16 %v4793, %v4785
    %v5186 = vpack.c.b16 %v4794, %v4786
    %v5187 = vpack.c.b16 %v4795, %v4787
    %v5188 = vpack.c.b16 %v4804, %v4796
    %v5189 = vpack.c.b16 %v4805, %v4797
    %v5190 = vpack.c.b16 %v4806, %v4798
    %v5191 = vpack.c.b16 %v4807, %v4799
    %v5192 = vpack.c.b16 %v4808, %v4800
    %v5193 = vpack.c.b16 %v4809, %v4801
    %v5194 = vpack.c.b16 %v4810, %v4802
    %v5195 = vpack.c.b16 %v4811, %v4803
    %v5196 = vpack.c.b16 %v4820, %v4812
    %v5197 = vpack.c.b16 %v4821, %v4813
    %v5198 = vpack.c.b16 %v4822, %v4814
    %v5199 = vpack.c.b16 %v4823, %v4815
    %v5200 = vpack.c.b16 %v4824, %v4816
    %v5201 = vpack.c.b16 %v4825, %v4817
    %v5202 = vpack.c.b16 %v4826, %v4818
    %v5203 = vpack.c.b16 %v4827, %v4819
    %v5204 = vpack.c.b16 %v4836, %v4828
    %v5205 = vpack.c.b16 %v4837, %v4829
    %v5206 = vpack.c.b16 %v4838, %v4830
    %v5207 = vpack.c.b16 %v4839, %v4831
    %v5208 = vpack.c.b16 %v4840, %v4832
    %v5209 = vpack.c.b16 %v4841, %v4833
    %v5210 = vpack.c.b16 %v4842, %v4834
    %v5211 = vpack.c.b16 %v4843, %v4835
    %v5212 = vpack.c.b16 %v4852, %v4844
    %v5213 = vpack.c.b16 %v4853, %v4845
    %v5214 = vpack.c.b16 %v4854, %v4846
    %v5215 = vpack.c.b16 %v4855, %v4847
    %v5216 = vpack.c.b16 %v4856, %v4848
    %v5217 = vpack.c.b16 %v4857, %v4849
    %v5218 = vpack.c.b16 %v4858, %v4850
    %v5219 = vpack.c.b16 %v4859, %v4851
    %v5220 = vpack.c.b16 %v4868, %v4860
    %v5221 = vpack.c.b16 %v4869, %v4861
    %v5222 = vpack.c.b16 %v4870, %v4862
    %v5223 = vpack.c.b16 %v4871, %v4863
    %v5224 = vpack.c.b16 %v4872, %v4864
    %v5225 = vpack.c.b16 %v4873, %v4865
    %v5226 = vpack.c.b16 %v4874, %v4866
    %v5227 = vpack.c.b16 %v4875, %v4867
    %v5228 = vpack.c.b16 %v4884, %v4876
    %v5229 = vpack.c.b16 %v4885, %v4877
    %v5230 = vpack.c.b16 %v4886, %v4878
    %v5231 = vpack.c.b16 %v4887, %v4879
    %v5232 = vpack.c.b16 %v4888, %v4880
    %v5233 = vpack.c.b16 %v4889, %v4881
    %v5234 = vpack.c.b16 %v4890, %v4882
    %v5235 = vpack.c.b16 %v4891, %v4883
    %v5236 = vpack.c.b16 %v4900, %v4892
    %v5237 = vpack.c.b16 %v4901, %v4893
    %v5238 = vpack.c.b16 %v4902, %v4894
    %v5239 = vpack.c.b16 %v4903, %v4895
    %v5240 = vpack.c.b16 %v4904, %v4896
    %v5241 = vpack.c.b16 %v4905, %v4897
    %v5242 = vpack.c.b16 %v4906, %v4898
    %v5243 = vpack.c.b16 %v4907, %v4899
    %v5244 = vpack.c.b16 %v4916, %v4908
    %v5245 = vpack.c.b16 %v4917, %v4909
    %v5246 = vpack.c.b16 %v4918, %v4910
    %v5247 = vpack.c.b16 %v4919, %v4911
    %v5248 = vpack.c.b16 %v4920, %v4912
    %v5249 = vpack.c.b16 %v4921, %v4913
    %v5250 = vpack.c.b16 %v4922, %v4914
    %v5251 = vpack.c.b16 %v4923, %v4915
    %v5252 = vpack.c.b16 %v4932, %v4924
    %v5253 = vpack.c.b16 %v4933, %v4925
    %v5254 = vpack.c.b16 %v4934, %v4926
    %v5255 = vpack.c.b16 %v4935, %v4927
    %v5256 = vpack.c.b16 %v4936, %v4928
    %v5257 = vpack.c.b16 %v4937, %v4929
    %v5258 = vpack.c.b16 %v4938, %v4930
    %v5259 = vpack.c.b16 %v4939, %v4931
    %v5260 = vpack.c.b16 %v4948, %v4940
    %v5261 = vpack.c.b16 %v4949, %v4941
    %v5262 = vpack.c.b16 %v4950, %v4942
    %v5263 = vpack.c.b16 %v4951, %v4943
    %v5264 = vpack.c.b16 %v4952, %v4944
    %v5265 = vpack.c.b16 %v4953, %v4945
    %v5266 = vpack.c.b16 %v4954, %v4946
    %v5267 = vpack.c.b16 %v4955, %v4947
    %v5268 = vpack.c.b16 %v4964, %v4956
    %v5269 = vpack.c.b16 %v4965, %v4957
    %v5270 = vpack.c.b16 %v4966, %v4958
    %v5271 = vpack.c.b16 %v4967, %v4959
    %v5272 = vpack.c.b16 %v4968, %v4960
    %v5273 = vpack.c.b16 %v4969, %v4961
    %v5274 = vpack.c.b16 %v4970, %v4962
    %v5275 = vpack.c.b16 %v4971, %v4963
    %v5276 = vpack.c.b16 %v4980, %v4972
    %v5277 = vpack.c.b16 %v4981, %v4973
    %v5278 = vpack.c.b16 %v4982, %v4974
    %v5279 = vpack.c.b16 %v4983, %v4975
    %v5280 = vpack.c.b16 %v4984, %v4976
    %v5281 = vpack.c.b16 %v4985, %v4977
    %v5282 = vpack.c.b16 %v4986, %v4978
    %v5283 = vpack.c.b16 %v4987, %v4979
    %v5284 = vpack.c.b16 %v4996, %v4988
    %v5285 = vpack.c.b16 %v4997, %v4989
    %v5286 = vpack.c.b16 %v4998, %v4990
    %v5287 = vpack.c.b16 %v4999, %v4991
    %v5288 = vpack.c.b16 %v5000, %v4992
    %v5289 = vpack.c.b16 %v5001, %v4993
    %v5290 = vpack.c.b16 %v5002, %v4994
    %v5291 = vpack.c.b16 %v5003, %v4995
    %v5292 = vpack.c.b16 %v5012, %v5004
    %v5293 = vpack.c.b16 %v5013, %v5005
    %v5294 = vpack.c.b16 %v5014, %v5006
    %v5295 = vpack.c.b16 %v5015, %v5007
    %v5296 = vpack.c.b16 %v5016, %v5008
    %v5297 = vpack.c.b16 %v5017, %v5009
    %v5298 = vpack.c.b16 %v5018, %v5010
    %v5299 = vpack.c.b16 %v5019, %v5011
    %v5300 = vpack.c.b16 %v5028, %v5020
    %v5301 = vpack.c.b16 %v5029, %v5021
    %v5302 = vpack.c.b16 %v5030, %v5022
    %v5303 = vpack.c.b16 %v5031, %v5023
    %v5304 = vpack.c.b16 %v5032, %v5024
    %v5305 = vpack.c.b16 %v5033, %v5025
    %v5306 = vpack.c.b16 %v5034, %v5026
    %v5307 = vpack.c.b16 %v5035, %v5027
    %v5308 = vpack.c.b16 %v5044, %v5036
    %v5309 = vpack.c.b16 %v5045, %v5037
    %v5310 = vpack.c.b16 %v5046, %v5038
    %v5311 = vpack.c.b16 %v5047, %v5039
    %v5312 = vpack.c.b16 %v5048, %v5040
    %v5313 = vpack.c.b16 %v5049, %v5041
    %v5314 = vpack.c.b16 %v5050, %v5042
    %v5315 = vpack.c.b16 %v5051, %v5043
    %v5316 = vpack.c.b16 %v5060, %v5052
    %v5317 = vpack.c.b16 %v5061, %v5053
    %v5318 = vpack.c.b16 %v5062, %v5054
    %v5319 = vpack.c.b16 %v5063, %v5055
    %v5320 = vpack.c.b16 %v5064, %v5056
    %v5321 = vpack.c.b16 %v5065, %v5057
    %v5322 = vpack.c.b16 %v5066, %v5058
    %v5323 = vpack.c.b16 %v5067, %v5059
    %5580 = vmatprep.subr.bf16.mxu0 %v5069
    %5581 = vmatpush1.bf16.msra.mxu0 %v5068
    %5582 = vmatprep.subr.bf16.mxu0 %v5077
    %5583 = vmatpush1.bf16.msra.mxu0 %v5076
    %5584 = vmatprep.subr.bf16.mxu0 %v5085
    %5585 = vmatpush1.bf16.msra.mxu0 %v5084
    %5586 = vmatprep.subr.bf16.mxu0 %v5093
    %5587 = vmatpush1.bf16.msra.mxu0 %v5092
    %5588 = vmatprep.subr.bf16.mxu0 %v5101
    %5589 = vmatpush1.bf16.msra.mxu0 %v5100
    %5590 = vmatprep.subr.bf16.mxu0 %v5109
    %5591 = vmatpush1.bf16.msra.mxu0 %v5108
    %5592 = vmatprep.subr.bf16.mxu0 %v5117
    %5593 = vmatpush1.bf16.msra.mxu0 %v5116
    %5594 = vmatprep.subr.bf16.mxu0 %v5125
    %5595 = vmatpush1.bf16.msra.mxu0 %v5124
    %5596 = vmatprep.subr.bf16.mxu0 %v5133
    %5597 = vmatpush1.bf16.msra.mxu0 %v5132
    %5598 = vmatprep.subr.bf16.mxu0 %v5141
    %5599 = vmatpush1.bf16.msra.mxu0 %v5140
    %5600 = vmatprep.subr.bf16.mxu0 %v5149
    %5601 = vmatpush1.bf16.msra.mxu0 %v5148
    %5602 = vmatprep.subr.bf16.mxu0 %v5157
    %5603 = vmatpush1.bf16.msra.mxu0 %v5156
    %5604 = vmatprep.subr.bf16.mxu0 %v5165
    %5605 = vmatpush1.bf16.msra.mxu0 %v5164
    %5606 = vmatprep.subr.bf16.mxu0 %v5173
    %5607 = vmatpush1.bf16.msra.mxu0 %v5172
    %5608 = vmatprep.subr.bf16.mxu0 %v5181
    %5609 = vmatpush1.bf16.msra.mxu0 %v5180
    %5610 = vmatprep.subr.bf16.mxu0 %v5189
    %5611 = vmatpush1.bf16.msra.mxu0 %v5188
    %5612 = vmatprep.mubr.bf16.mxu0 %v3999
    %5613 = vmatmul.mubr.bf16.gmra.mrb[0].mxu0 %v3998
    %v5614 = vpop.f32.mrb[0].mxu0
    %v5615 = vadd.f32 %v4263, %v5614
    %v5616 = vpop.f32.mrb[0].mxu0
    %v5617 = vadd.f32 %v4267, %v5616
    %v5618 = vpop.f32.mrb[0].mxu0
    %v5619 = vpop.f32.mrb[0].mxu0
    %5620 = vdwg.mxu0
    %5621 = vmatprep.subr.bf16.mxu0 %v5197
    %5622 = vmatpush1.bf16.msra.mxu0 %v5196
    %5623 = vmatprep.subr.bf16.mxu0 %v5205
    %5624 = vmatpush1.bf16.msra.mxu0 %v5204
    %5625 = vmatprep.subr.bf16.mxu0 %v5213
    %5626 = vmatpush1.bf16.msra.mxu0 %v5212
    %5627 = vmatprep.subr.bf16.mxu0 %v5221
    %5628 = vmatpush1.bf16.msra.mxu0 %v5220
    %5629 = vmatprep.subr.bf16.mxu0 %v5229
    %5630 = vmatpush1.bf16.msra.mxu0 %v5228
    %5631 = vmatprep.subr.bf16.mxu0 %v5237
    %5632 = vmatpush1.bf16.msra.mxu0 %v5236
    %5633 = vmatprep.subr.bf16.mxu0 %v5245
    %5634 = vmatpush1.bf16.msra.mxu0 %v5244
    %5635 = vmatprep.subr.bf16.mxu0 %v5253
    %5636 = vmatpush1.bf16.msra.mxu0 %v5252
    %5637 = vmatprep.subr.bf16.mxu0 %v5261
    %5638 = vmatpush1.bf16.msra.mxu0 %v5260
    %5639 = vmatprep.subr.bf16.mxu0 %v5269
    %5640 = vmatpush1.bf16.msra.mxu0 %v5268
    %5641 = vmatprep.subr.bf16.mxu0 %v5277
    %5642 = vmatpush1.bf16.msra.mxu0 %v5276
    %5643 = vmatprep.subr.bf16.mxu0 %v5285
    %5644 = vmatpush1.bf16.msra.mxu0 %v5284
    %5645 = vmatprep.subr.bf16.mxu0 %v5293
    %5646 = vmatpush1.bf16.msra.mxu0 %v5292
    %5647 = vmatprep.subr.bf16.mxu0 %v5301
    %5648 = vmatpush1.bf16.msra.mxu0 %v5300
    %5649 = vmatprep.subr.bf16.mxu0 %v5309
    %5650 = vmatpush1.bf16.msra.mxu0 %v5308
    %5651 = vmatprep.subr.bf16.mxu0 %v5317
    %5652 = vmatpush1.bf16.msra.mxu0 %v5316
    %5653 = vmatprep.mubr.bf16.mxu0 %v4001
    %5654 = vmatmul.mubr.bf16.gmra.mrb[0].mxu0 %v4000
    %v5655 = vpop.f32.mrb[0].mxu0
    %v5656 = vadd.f32 %v5615, %v5655
    %v5657 = vpop.f32.mrb[0].mxu0
    %v5658 = vadd.f32 %v5617, %v5657
    %v5659 = vpop.f32.mrb[0].mxu0
    %v5660 = vpop.f32.mrb[0].mxu0
    %5661 = vdwg.mxu0
    %5662 = vmatprep.subr.bf16.mxu0 %v5071
    %5663 = vmatpush1.bf16.msra.mxu0 %v5070
    %5664 = vmatprep.subr.bf16.mxu0 %v5079
    %5665 = vmatpush1.bf16.msra.mxu0 %v5078
    %5666 = vmatprep.subr.bf16.mxu0 %v5087
    %5667 = vmatpush1.bf16.msra.mxu0 %v5086
    %5668 = vmatprep.subr.bf16.mxu0 %v5095
    %5669 = vmatpush1.bf16.msra.mxu0 %v5094
    %5670 = vmatprep.subr.bf16.mxu0 %v5103
    %5671 = vmatpush1.bf16.msra.mxu0 %v5102
    %5672 = vmatprep.subr.bf16.mxu0 %v5111
    %5673 = vmatpush1.bf16.msra.mxu0 %v5110
    %5674 = vmatprep.subr.bf16.mxu0 %v5119
    %5675 = vmatpush1.bf16.msra.mxu0 %v5118
    %5676 = vmatprep.subr.bf16.mxu0 %v5127
    %5677 = vmatpush1.bf16.msra.mxu0 %v5126
    %5678 = vmatprep.subr.bf16.mxu0 %v5135
    %5679 = vmatpush1.bf16.msra.mxu0 %v5134
    %5680 = vmatprep.subr.bf16.mxu0 %v5143
    %5681 = vmatpush1.bf16.msra.mxu0 %v5142
    %5682 = vmatprep.subr.bf16.mxu0 %v5151
    %5683 = vmatpush1.bf16.msra.mxu0 %v5150
    %5684 = vmatprep.subr.bf16.mxu0 %v5159
    %5685 = vmatpush1.bf16.msra.mxu0 %v5158
    %5686 = vmatprep.subr.bf16.mxu0 %v5167
    %5687 = vmatpush1.bf16.msra.mxu0 %v5166
    %5688 = vmatprep.subr.bf16.mxu0 %v5175
    %5689 = vmatpush1.bf16.msra.mxu0 %v5174
    %5690 = vmatprep.subr.bf16.mxu0 %v5183
    %5691 = vmatpush1.bf16.msra.mxu0 %v5182
    %5692 = vmatprep.subr.bf16.mxu0 %v5191
    %5693 = vmatpush1.bf16.msra.mxu0 %v5190
    %5694 = vmatprep.mubr.bf16.mxu0 %v3999
    %5695 = vmatmul.mubr.bf16.gmra.mrb[0].mxu0 %v3998
    %v5696 = vpop.f32.mrb[0].mxu0
    %v5697 = vadd.f32 %v4271, %v5696
    %v5698 = vpop.f32.mrb[0].mxu0
    %v5699 = vadd.f32 %v4275, %v5698
    %v5700 = vpop.f32.mrb[0].mxu0
    %v5701 = vpop.f32.mrb[0].mxu0
    %5702 = vdwg.mxu0
    %5703 = vmatprep.subr.bf16.mxu0 %v5199
    %5704 = vmatpush1.bf16.msra.mxu0 %v5198
    %5705 = vmatprep.subr.bf16.mxu0 %v5207
    %5706 = vmatpush1.bf16.msra.mxu0 %v5206
    %5707 = vmatprep.subr.bf16.mxu0 %v5215
    %5708 = vmatpush1.bf16.msra.mxu0 %v5214
    %5709 = vmatprep.subr.bf16.mxu0 %v5223
    %5710 = vmatpush1.bf16.msra.mxu0 %v5222
    %5711 = vmatprep.subr.bf16.mxu0 %v5231
    %5712 = vmatpush1.bf16.msra.mxu0 %v5230
    %5713 = vmatprep.subr.bf16.mxu0 %v5239
    %5714 = vmatpush1.bf16.msra.mxu0 %v5238
    %5715 = vmatprep.subr.bf16.mxu0 %v5247
    %5716 = vmatpush1.bf16.msra.mxu0 %v5246
    %5717 = vmatprep.subr.bf16.mxu0 %v5255
    %5718 = vmatpush1.bf16.msra.mxu0 %v5254
    %5719 = vmatprep.subr.bf16.mxu0 %v5263
    %5720 = vmatpush1.bf16.msra.mxu0 %v5262
    %5721 = vmatprep.subr.bf16.mxu0 %v5271
    %5722 = vmatpush1.bf16.msra.mxu0 %v5270
    %5723 = vmatprep.subr.bf16.mxu0 %v5279
    %5724 = vmatpush1.bf16.msra.mxu0 %v5278
    %5725 = vmatprep.subr.bf16.mxu0 %v5287
    %5726 = vmatpush1.bf16.msra.mxu0 %v5286
    %5727 = vmatprep.subr.bf16.mxu0 %v5295
    %5728 = vmatpush1.bf16.msra.mxu0 %v5294
    %5729 = vmatprep.subr.bf16.mxu0 %v5303
    %5730 = vmatpush1.bf16.msra.mxu0 %v5302
    %5731 = vmatprep.subr.bf16.mxu0 %v5311
    %5732 = vmatpush1.bf16.msra.mxu0 %v5310
    %5733 = vmatprep.subr.bf16.mxu0 %v5319
    %5734 = vmatpush1.bf16.msra.mxu0 %v5318
    %5735 = vmatprep.mubr.bf16.mxu0 %v4001
    %5736 = vmatmul.mubr.bf16.gmra.mrb[0].mxu0 %v4000
    %v5737 = vpop.f32.mrb[0].mxu0
    %v5738 = vadd.f32 %v5697, %v5737
    %v5739 = vpop.f32.mrb[0].mxu0
    %v5740 = vadd.f32 %v5699, %v5739
    %v5741 = vpop.f32.mrb[0].mxu0
    %v5742 = vpop.f32.mrb[0].mxu0
    %5743 = vdwg.mxu0
    %5744 = vmatprep.subr.bf16.mxu0 %v5073
    %5745 = vmatpush1.bf16.msra.mxu0 %v5072
    %5746 = vmatprep.subr.bf16.mxu0 %v5081
    %5747 = vmatpush1.bf16.msra.mxu0 %v5080
    %5748 = vmatprep.subr.bf16.mxu0 %v5089
    %5749 = vmatpush1.bf16.msra.mxu0 %v5088
    %5750 = vmatprep.subr.bf16.mxu0 %v5097
    %5751 = vmatpush1.bf16.msra.mxu0 %v5096
    %5752 = vmatprep.subr.bf16.mxu0 %v5105
    %5753 = vmatpush1.bf16.msra.mxu0 %v5104
    %5754 = vmatprep.subr.bf16.mxu0 %v5113
    %5755 = vmatpush1.bf16.msra.mxu0 %v5112
    %5756 = vmatprep.subr.bf16.mxu0 %v5121
    %5757 = vmatpush1.bf16.msra.mxu0 %v5120
    %5758 = vmatprep.subr.bf16.mxu0 %v5129
    %5759 = vmatpush1.bf16.msra.mxu0 %v5128
    %5760 = vmatprep.subr.bf16.mxu0 %v5137
    %5761 = vmatpush1.bf16.msra.mxu0 %v5136
    %5762 = vmatprep.subr.bf16.mxu0 %v5145
    %5763 = vmatpush1.bf16.msra.mxu0 %v5144
    %5764 = vmatprep.subr.bf16.mxu0 %v5153
    %5765 = vmatpush1.bf16.msra.mxu0 %v5152
    %5766 = vmatprep.subr.bf16.mxu0 %v5161
    %5767 = vmatpush1.bf16.msra.mxu0 %v5160
    %5768 = vmatprep.subr.bf16.mxu0 %v5169
    %5769 = vmatpush1.bf16.msra.mxu0 %v5168
    %5770 = vmatprep.subr.bf16.mxu0 %v5177
    %5771 = vmatpush1.bf16.msra.mxu0 %v5176
    %5772 = vmatprep.subr.bf16.mxu0 %v5185
    %5773 = vmatpush1.bf16.msra.mxu0 %v5184
    %5774 = vmatprep.subr.bf16.mxu0 %v5193
    %5775 = vmatpush1.bf16.msra.mxu0 %v5192
    %5776 = vmatprep.mubr.bf16.mxu0 %v3999
    %5777 = vmatmul.mubr.bf16.gmra.mrb[0].mxu0 %v3998
    %v5778 = vpop.f32.mrb[0].mxu0
    %v5779 = vadd.f32 %v4279, %v5778
    %v5780 = vpop.f32.mrb[0].mxu0
    %v5781 = vadd.f32 %v4283, %v5780
    %v5782 = vpop.f32.mrb[0].mxu0
    %v5783 = vpop.f32.mrb[0].mxu0
    %5784 = vdwg.mxu0
    %5785 = vmatprep.subr.bf16.mxu0 %v5201
    %5786 = vmatpush1.bf16.msra.mxu0 %v5200
    %5787 = vmatprep.subr.bf16.mxu0 %v5209
    %5788 = vmatpush1.bf16.msra.mxu0 %v5208
    %5789 = vmatprep.subr.bf16.mxu0 %v5217
    %5790 = vmatpush1.bf16.msra.mxu0 %v5216
    %5791 = vmatprep.subr.bf16.mxu0 %v5225
    %5792 = vmatpush1.bf16.msra.mxu0 %v5224
    %5793 = vmatprep.subr.bf16.mxu0 %v5233
    %5794 = vmatpush1.bf16.msra.mxu0 %v5232
    %5795 = vmatprep.subr.bf16.mxu0 %v5241
    %5796 = vmatpush1.bf16.msra.mxu0 %v5240
    %5797 = vmatprep.subr.bf16.mxu0 %v5249
    %5798 = vmatpush1.bf16.msra.mxu0 %v5248
    %5799 = vmatprep.subr.bf16.mxu0 %v5257
    %5800 = vmatpush1.bf16.msra.mxu0 %v5256
    %5801 = vmatprep.subr.bf16.mxu0 %v5265
    %5802 = vmatpush1.bf16.msra.mxu0 %v5264
    %5803 = vmatprep.subr.bf16.mxu0 %v5273
    %5804 = vmatpush1.bf16.msra.mxu0 %v5272
    %5805 = vmatprep.subr.bf16.mxu0 %v5281
    %5806 = vmatpush1.bf16.msra.mxu0 %v5280
    %5807 = vmatprep.subr.bf16.mxu0 %v5289
    %5808 = vmatpush1.bf16.msra.mxu0 %v5288
    %5809 = vmatprep.subr.bf16.mxu0 %v5297
    %5810 = vmatpush1.bf16.msra.mxu0 %v5296
    %5811 = vmatprep.subr.bf16.mxu0 %v5305
    %5812 = vmatpush1.bf16.msra.mxu0 %v5304
    %5813 = vmatprep.subr.bf16.mxu0 %v5313
    %5814 = vmatpush1.bf16.msra.mxu0 %v5312
    %5815 = vmatprep.subr.bf16.mxu0 %v5321
    %5816 = vmatpush1.bf16.msra.mxu0 %v5320
    %5817 = vmatprep.mubr.bf16.mxu0 %v4001
    %5818 = vmatmul.mubr.bf16.gmra.mrb[0].mxu0 %v4000
    %v5819 = vpop.f32.mrb[0].mxu0
    %v5820 = vadd.f32 %v5779, %v5819
    %v5821 = vpop.f32.mrb[0].mxu0
    %v5822 = vadd.f32 %v5781, %v5821
    %v5823 = vpop.f32.mrb[0].mxu0
    %v5824 = vpop.f32.mrb[0].mxu0
    %5825 = vdwg.mxu0
    %5826 = vmatprep.subr.bf16.mxu0 %v5075
    %5827 = vmatpush1.bf16.msra.mxu0 %v5074
    %5828 = vmatprep.subr.bf16.mxu0 %v5083
    %5829 = vmatpush1.bf16.msra.mxu0 %v5082
    %5830 = vmatprep.subr.bf16.mxu0 %v5091
    %5831 = vmatpush1.bf16.msra.mxu0 %v5090
    %5832 = vmatprep.subr.bf16.mxu0 %v5099
    %5833 = vmatpush1.bf16.msra.mxu0 %v5098
    %5834 = vmatprep.subr.bf16.mxu0 %v5107
    %5835 = vmatpush1.bf16.msra.mxu0 %v5106
    %5836 = vmatprep.subr.bf16.mxu0 %v5115
    %5837 = vmatpush1.bf16.msra.mxu0 %v5114
    %5838 = vmatprep.subr.bf16.mxu0 %v5123
    %5839 = vmatpush1.bf16.msra.mxu0 %v5122
    %5840 = vmatprep.subr.bf16.mxu0 %v5131
    %5841 = vmatpush1.bf16.msra.mxu0 %v5130
    %5842 = vmatprep.subr.bf16.mxu0 %v5139
    %5843 = vmatpush1.bf16.msra.mxu0 %v5138
    %5844 = vmatprep.subr.bf16.mxu0 %v5147
    %5845 = vmatpush1.bf16.msra.mxu0 %v5146
    %5846 = vmatprep.subr.bf16.mxu0 %v5155
    %5847 = vmatpush1.bf16.msra.mxu0 %v5154
    %5848 = vmatprep.subr.bf16.mxu0 %v5163
    %5849 = vmatpush1.bf16.msra.mxu0 %v5162
    %5850 = vmatprep.subr.bf16.mxu0 %v5171
    %5851 = vmatpush1.bf16.msra.mxu0 %v5170
    %5852 = vmatprep.subr.bf16.mxu0 %v5179
    %5853 = vmatpush1.bf16.msra.mxu0 %v5178
    %5854 = vmatprep.subr.bf16.mxu0 %v5187
    %5855 = vmatpush1.bf16.msra.mxu0 %v5186
    %5856 = vmatprep.subr.bf16.mxu0 %v5195
    %5857 = vmatpush1.bf16.msra.mxu0 %v5194
    %5858 = vmatprep.mubr.bf16.mxu0 %v3999
    %5859 = vmatmul.mubr.bf16.gmra.mrb[0].mxu0 %v3998
    %v5860 = vpop.f32.mrb[0].mxu0
    %v5861 = vadd.f32 %v4287, %v5860
    %v5862 = vpop.f32.mrb[0].mxu0
    %v5863 = vadd.f32 %v4291, %v5862
    %v5864 = vpop.f32.mrb[0].mxu0
    %v5865 = vpop.f32.mrb[0].mxu0
    %5866 = vdwg.mxu0
    %5867 = vmatprep.subr.bf16.mxu0 %v5203
    %5868 = vmatpush1.bf16.msra.mxu0 %v5202
    %5869 = vmatprep.subr.bf16.mxu0 %v5211
    %5870 = vmatpush1.bf16.msra.mxu0 %v5210
    %5871 = vmatprep.subr.bf16.mxu0 %v5219
    %5872 = vmatpush1.bf16.msra.mxu0 %v5218
    %5873 = vmatprep.subr.bf16.mxu0 %v5227
    %5874 = vmatpush1.bf16.msra.mxu0 %v5226
    %5875 = vmatprep.subr.bf16.mxu0 %v5235
    %5876 = vmatpush1.bf16.msra.mxu0 %v5234
    %5877 = vmatprep.subr.bf16.mxu0 %v5243
    %5878 = vmatpush1.bf16.msra.mxu0 %v5242
    %5879 = vmatprep.subr.bf16.mxu0 %v5251
    %5880 = vmatpush1.bf16.msra.mxu0 %v5250
    %5881 = vmatprep.subr.bf16.mxu0 %v5259
    %5882 = vmatpush1.bf16.msra.mxu0 %v5258
    %5883 = vmatprep.subr.bf16.mxu0 %v5267
    %5884 = vmatpush1.bf16.msra.mxu0 %v5266
    %5885 = vmatprep.subr.bf16.mxu0 %v5275
    %5886 = vmatpush1.bf16.msra.mxu0 %v5274
    %5887 = vmatprep.subr.bf16.mxu0 %v5283
    %5888 = vmatpush1.bf16.msra.mxu0 %v5282
    %5889 = vmatprep.subr.bf16.mxu0 %v5291
    %5890 = vmatpush1.bf16.msra.mxu0 %v5290
    %5891 = vmatprep.subr.bf16.mxu0 %v5299
    %5892 = vmatpush1.bf16.msra.mxu0 %v5298
    %5893 = vmatprep.subr.bf16.mxu0 %v5307
    %5894 = vmatpush1.bf16.msra.mxu0 %v5306
    %5895 = vmatprep.subr.bf16.mxu0 %v5315
    %5896 = vmatpush1.bf16.msra.mxu0 %v5314
    %5897 = vmatprep.subr.bf16.mxu0 %v5323
    %5898 = vmatpush1.bf16.msra.mxu0 %v5322
    %5899 = vmatprep.mubr.bf16.mxu0 %v4001
    %5900 = vmatmul.mubr.bf16.gmra.mrb[0].mxu0 %v4000
    %v5901 = vpop.f32.mrb[0].mxu0
    %v5902 = vadd.f32 %v5861, %v5901
    %v5903 = vpop.f32.mrb[0].mxu0
    %v5904 = vadd.f32 %v5863, %v5903
    %v5905 = vpop.f32.mrb[0].mxu0
    %v5906 = vpop.f32.mrb[0].mxu0
    %5907 = vdwg.mxu0
    %v5908 = vmax.f32 %v5656, 0.0
    %v5909 = vmax.f32 %v5658, 0.0
    %v5910 = vmax.f32 %v5738, 0.0
    %v5911 = vmax.f32 %v5740, 0.0
    %v5912 = vmax.f32 %v5820, 0.0
    %v5913 = vmax.f32 %v5822, 0.0
    %v5914 = vmax.f32 %v5902, 0.0
    %v5915 = vmax.f32 %v5904, 0.0
    %v5916 = vpack.c.bf16 %v5908, %v5908
    %v5917 = vpack.c.bf16 %v5909, %v5909
    %v5918 = vpack.c.bf16 %v5910, %v5910
    %v5919 = vpack.c.bf16 %v5911, %v5911
    %v5920 = vpack.c.bf16 %v5912, %v5912
    %v5921 = vpack.c.bf16 %v5913, %v5913
    %v5922 = vpack.c.bf16 %v5914, %v5914
    %v5923 = vpack.c.bf16 %v5915, %v5915
    %v5924 = vld [vmem:[#allocation10] sm:$0xff]
    %v5925 = vld [vmem:[#allocation10 + $0x8] sm:$0xff]
    %v5926 = vld [vmem:[#allocation10 + $0x10] sm:$0xff]
    %v5927 = vld [vmem:[#allocation10 + $0x18] sm:$0xff]
    %v5928 = vld [vmem:[#allocation10 + $0x20] sm:$0xff]
    %v5929 = vld [vmem:[#allocation10 + $0x28] sm:$0xff]
    %v5930 = vld [vmem:[#allocation10 + $0x30] sm:$0xff]
    %v5931 = vld [vmem:[#allocation10 + $0x38] sm:$0xff]
    %v5932 = vld [vmem:[#allocation10 + $0x40] sm:$0xff]
    %v5933 = vld [vmem:[#allocation10 + $0x48] sm:$0xff]
    %v5934 = vld [vmem:[#allocation10 + $0x50] sm:$0xff]
    %v5935 = vld [vmem:[#allocation10 + $0x58] sm:$0xff]
    %v5936 = vld [vmem:[#allocation10 + $0x60] sm:$0xff]
    %v5937 = vld [vmem:[#allocation10 + $0x68] sm:$0xff]
    %v5938 = vld [vmem:[#allocation10 + $0x70] sm:$0xff]
    %v5939 = vld [vmem:[#allocation10 + $0x78] sm:$0xff]
    %v5940 = vld [vmem:[#allocation10 + $0x80] sm:$0xff]
    %v5941 = vld [vmem:[#allocation10 + $0x88] sm:$0xff]
    %v5942 = vld [vmem:[#allocation10 + $0x90] sm:$0xff]
    %v5943 = vld [vmem:[#allocation10 + $0x98] sm:$0xff]
    %v5944 = vld [vmem:[#allocation10 + $0xa0] sm:$0xff]
    %v5945 = vld [vmem:[#allocation10 + $0xa8] sm:$0xff]
    %v5946 = vld [vmem:[#allocation10 + $0xb0] sm:$0xff]
    %v5947 = vld [vmem:[#allocation10 + $0xb8] sm:$0xff]
    %v5948 = vld [vmem:[#allocation10 + $0xc0] sm:$0xff]
    %v5949 = vld [vmem:[#allocation10 + $0xc8] sm:$0xff]
    %v5950 = vld [vmem:[#allocation10 + $0xd0] sm:$0xff]
    %v5951 = vld [vmem:[#allocation10 + $0xd8] sm:$0xff]
    %v5952 = vld [vmem:[#allocation10 + $0xe0] sm:$0xff]
    %v5953 = vld [vmem:[#allocation10 + $0xe8] sm:$0xff]
    %v5954 = vld [vmem:[#allocation10 + $0xf0] sm:$0xff]
    %v5955 = vld [vmem:[#allocation10 + $0xf8] sm:$0xff]
    %v5956 = vld [vmem:[#allocation10 + $0x100] sm:$0xff]
    %v5957 = vld [vmem:[#allocation10 + $0x108] sm:$0xff]
    %v5958 = vld [vmem:[#allocation10 + $0x110] sm:$0xff]
    %v5959 = vld [vmem:[#allocation10 + $0x118] sm:$0xff]
    %v5960 = vld [vmem:[#allocation10 + $0x120] sm:$0xff]
    %v5961 = vld [vmem:[#allocation10 + $0x128] sm:$0xff]
    %v5962 = vld [vmem:[#allocation10 + $0x130] sm:$0xff]
    %v5963 = vld [vmem:[#allocation10 + $0x138] sm:$0xff]
    %v5964 = vld [vmem:[#allocation10 + $0x140] sm:$0xff]
    %v5965 = vld [vmem:[#allocation10 + $0x148] sm:$0xff]
    %v5966 = vld [vmem:[#allocation10 + $0x150] sm:$0xff]
    %v5967 = vld [vmem:[#allocation10 + $0x158] sm:$0xff]
    %v5968 = vld [vmem:[#allocation10 + $0x160] sm:$0xff]
    %v5969 = vld [vmem:[#allocation10 + $0x168] sm:$0xff]
    %v5970 = vld [vmem:[#allocation10 + $0x170] sm:$0xff]
    %v5971 = vld [vmem:[#allocation10 + $0x178] sm:$0xff]
    %v5972 = vld [vmem:[#allocation10 + $0x180] sm:$0xff]
    %v5973 = vld [vmem:[#allocation10 + $0x188] sm:$0xff]
    %v5974 = vld [vmem:[#allocation10 + $0x190] sm:$0xff]
    %v5975 = vld [vmem:[#allocation10 + $0x198] sm:$0xff]
    %v5976 = vld [vmem:[#allocation10 + $0x1a0] sm:$0xff]
    %v5977 = vld [vmem:[#allocation10 + $0x1a8] sm:$0xff]
    %v5978 = vld [vmem:[#allocation10 + $0x1b0] sm:$0xff]
    %v5979 = vld [vmem:[#allocation10 + $0x1b8] sm:$0xff]
    %v5980 = vld [vmem:[#allocation10 + $0x1c0] sm:$0xff]
    %v5981 = vld [vmem:[#allocation10 + $0x1c8] sm:$0xff]
    %v5982 = vld [vmem:[#allocation10 + $0x1d0] sm:$0xff]
    %v5983 = vld [vmem:[#allocation10 + $0x1d8] sm:$0xff]
    %v5984 = vld [vmem:[#allocation10 + $0x1e0] sm:$0xff]
    %v5985 = vld [vmem:[#allocation10 + $0x1e8] sm:$0xff]
    %v5986 = vld [vmem:[#allocation10 + $0x1f0] sm:$0xff]
    %v5987 = vld [vmem:[#allocation10 + $0x1f8] sm:$0xff]
    %v5988 = vld [vmem:[#allocation10 + $0x200] sm:$0xff]
    %v5989 = vld [vmem:[#allocation10 + $0x208] sm:$0xff]
    %v5990 = vld [vmem:[#allocation10 + $0x210] sm:$0xff]
    %v5991 = vld [vmem:[#allocation10 + $0x218] sm:$0xff]
    %v5992 = vld [vmem:[#allocation10 + $0x220] sm:$0xff]
    %v5993 = vld [vmem:[#allocation10 + $0x228] sm:$0xff]
    %v5994 = vld [vmem:[#allocation10 + $0x230] sm:$0xff]
    %v5995 = vld [vmem:[#allocation10 + $0x238] sm:$0xff]
    %v5996 = vld [vmem:[#allocation10 + $0x240] sm:$0xff]
    %v5997 = vld [vmem:[#allocation10 + $0x248] sm:$0xff]
    %v5998 = vld [vmem:[#allocation10 + $0x250] sm:$0xff]
    %v5999 = vld [vmem:[#allocation10 + $0x258] sm:$0xff]
    %v6000 = vld [vmem:[#allocation10 + $0x260] sm:$0xff]
    %v6001 = vld [vmem:[#allocation10 + $0x268] sm:$0xff]
    %v6002 = vld [vmem:[#allocation10 + $0x270] sm:$0xff]
    %v6003 = vld [vmem:[#allocation10 + $0x278] sm:$0xff]
    %v6004 = vld [vmem:[#allocation10 + $0x280] sm:$0xff]
    %v6005 = vld [vmem:[#allocation10 + $0x288] sm:$0xff]
    %v6006 = vld [vmem:[#allocation10 + $0x290] sm:$0xff]
    %v6007 = vld [vmem:[#allocation10 + $0x298] sm:$0xff]
    %v6008 = vld [vmem:[#allocation10 + $0x2a0] sm:$0xff]
    %v6009 = vld [vmem:[#allocation10 + $0x2a8] sm:$0xff]
    %v6010 = vld [vmem:[#allocation10 + $0x2b0] sm:$0xff]
    %v6011 = vld [vmem:[#allocation10 + $0x2b8] sm:$0xff]
    %v6012 = vld [vmem:[#allocation10 + $0x2c0] sm:$0xff]
    %v6013 = vld [vmem:[#allocation10 + $0x2c8] sm:$0xff]
    %v6014 = vld [vmem:[#allocation10 + $0x2d0] sm:$0xff]
    %v6015 = vld [vmem:[#allocation10 + $0x2d8] sm:$0xff]
    %v6016 = vld [vmem:[#allocation10 + $0x2e0] sm:$0xff]
    %v6017 = vld [vmem:[#allocation10 + $0x2e8] sm:$0xff]
    %v6018 = vld [vmem:[#allocation10 + $0x2f0] sm:$0xff]
    %v6019 = vld [vmem:[#allocation10 + $0x2f8] sm:$0xff]
    %v6020 = vld [vmem:[#allocation10 + $0x300] sm:$0xff]
    %v6021 = vld [vmem:[#allocation10 + $0x308] sm:$0xff]
    %v6022 = vld [vmem:[#allocation10 + $0x310] sm:$0xff]
    %v6023 = vld [vmem:[#allocation10 + $0x318] sm:$0xff]
    %v6024 = vld [vmem:[#allocation10 + $0x320] sm:$0xff]
    %v6025 = vld [vmem:[#allocation10 + $0x328] sm:$0xff]
    %v6026 = vld [vmem:[#allocation10 + $0x330] sm:$0xff]
    %v6027 = vld [vmem:[#allocation10 + $0x338] sm:$0xff]
    %v6028 = vld [vmem:[#allocation10 + $0x340] sm:$0xff]
    %v6029 = vld [vmem:[#allocation10 + $0x348] sm:$0xff]
    %v6030 = vld [vmem:[#allocation10 + $0x350] sm:$0xff]
    %v6031 = vld [vmem:[#allocation10 + $0x358] sm:$0xff]
    %v6032 = vld [vmem:[#allocation10 + $0x360] sm:$0xff]
    %v6033 = vld [vmem:[#allocation10 + $0x368] sm:$0xff]
    %v6034 = vld [vmem:[#allocation10 + $0x370] sm:$0xff]
    %v6035 = vld [vmem:[#allocation10 + $0x378] sm:$0xff]
    %v6036 = vld [vmem:[#allocation10 + $0x380] sm:$0xff]
    %v6037 = vld [vmem:[#allocation10 + $0x388] sm:$0xff]
    %v6038 = vld [vmem:[#allocation10 + $0x390] sm:$0xff]
    %v6039 = vld [vmem:[#allocation10 + $0x398] sm:$0xff]
    %v6040 = vld [vmem:[#allocation10 + $0x3a0] sm:$0xff]
    %v6041 = vld [vmem:[#allocation10 + $0x3a8] sm:$0xff]
    %v6042 = vld [vmem:[#allocation10 + $0x3b0] sm:$0xff]
    %v6043 = vld [vmem:[#allocation10 + $0x3b8] sm:$0xff]
    %v6044 = vld [vmem:[#allocation10 + $0x3c0] sm:$0xff]
    %v6045 = vld [vmem:[#allocation10 + $0x3c8] sm:$0xff]
    %v6046 = vld [vmem:[#allocation10 + $0x3d0] sm:$0xff]
    %v6047 = vld [vmem:[#allocation10 + $0x3d8] sm:$0xff]
    %v6048 = vld [vmem:[#allocation10 + $0x3e0] sm:$0xff]
    %v6049 = vld [vmem:[#allocation10 + $0x3e8] sm:$0xff]
    %v6050 = vld [vmem:[#allocation10 + $0x3f0] sm:$0xff]
    %v6051 = vld [vmem:[#allocation10 + $0x3f8] sm:$0xff]
    %v6052 = vld [vmem:[%s12] sm:$0x3]
    %v6054 = vlaneseq
    %v6055 = vshrl.u32 %v6054, 7
    %v6056 = vsub.s32 0, %v6055
    %v6057 = vrot.slane %v6052, %v6056
    %v6058 = vlaneseq
    %v6059 = vshrl.u32 %v6058, 7
    %v6060 = vsub.s32 1, %v6059
    %v6061 = vrot.slane %v6052, %v6060
    %v6192 = vunpack.c.l.b16 %v5924
    %v6193 = vunpack.c.h.b16 %v5924
    %v6194 = vunpack.c.l.b16 %v5925
    %v6195 = vunpack.c.h.b16 %v5925
    %v6196 = vunpack.c.l.b16 %v5926
    %v6197 = vunpack.c.h.b16 %v5926
    %v6198 = vunpack.c.l.b16 %v5927
    %v6199 = vunpack.c.h.b16 %v5927
    %v6200 = vunpack.c.l.b16 %v5928
    %v6201 = vunpack.c.h.b16 %v5928
    %v6202 = vunpack.c.l.b16 %v5929
    %v6203 = vunpack.c.h.b16 %v5929
    %v6204 = vunpack.c.l.b16 %v5930
    %v6205 = vunpack.c.h.b16 %v5930
    %v6206 = vunpack.c.l.b16 %v5931
    %v6207 = vunpack.c.h.b16 %v5931
    %v6208 = vunpack.c.l.b16 %v5932
    %v6209 = vunpack.c.h.b16 %v5932
    %v6210 = vunpack.c.l.b16 %v5933
    %v6211 = vunpack.c.h.b16 %v5933
    %v6212 = vunpack.c.l.b16 %v5934
    %v6213 = vunpack.c.h.b16 %v5934
    %v6214 = vunpack.c.l.b16 %v5935
    %v6215 = vunpack.c.h.b16 %v5935
    %v6216 = vunpack.c.l.b16 %v5936
    %v6217 = vunpack.c.h.b16 %v5936
    %v6218 = vunpack.c.l.b16 %v5937
    %v6219 = vunpack.c.h.b16 %v5937
    %v6220 = vunpack.c.l.b16 %v5938
    %v6221 = vunpack.c.h.b16 %v5938
    %v6222 = vunpack.c.l.b16 %v5939
    %v6223 = vunpack.c.h.b16 %v5939
    %v6224 = vunpack.c.l.b16 %v5940
    %v6225 = vunpack.c.h.b16 %v5940
    %v6226 = vunpack.c.l.b16 %v5941
    %v6227 = vunpack.c.h.b16 %v5941
    %v6228 = vunpack.c.l.b16 %v5942
    %v6229 = vunpack.c.h.b16 %v5942
    %v6230 = vunpack.c.l.b16 %v5943
    %v6231 = vunpack.c.h.b16 %v5943
    %v6232 = vunpack.c.l.b16 %v5944
    %v6233 = vunpack.c.h.b16 %v5944
    %v6234 = vunpack.c.l.b16 %v5945
    %v6235 = vunpack.c.h.b16 %v5945
    %v6236 = vunpack.c.l.b16 %v5946
    %v6237 = vunpack.c.h.b16 %v5946
    %v6238 = vunpack.c.l.b16 %v5947
    %v6239 = vunpack.c.h.b16 %v5947
    %v6240 = vunpack.c.l.b16 %v5948
    %v6241 = vunpack.c.h.b16 %v5948
    %v6242 = vunpack.c.l.b16 %v5949
    %v6243 = vunpack.c.h.b16 %v5949
    %v6244 = vunpack.c.l.b16 %v5950
    %v6245 = vunpack.c.h.b16 %v5950
    %v6246 = vunpack.c.l.b16 %v5951
    %v6247 = vunpack.c.h.b16 %v5951
    %v6248 = vunpack.c.l.b16 %v5952
    %v6249 = vunpack.c.h.b16 %v5952
    %v6250 = vunpack.c.l.b16 %v5953
    %v6251 = vunpack.c.h.b16 %v5953
    %v6252 = vunpack.c.l.b16 %v5954
    %v6253 = vunpack.c.h.b16 %v5954
    %v6254 = vunpack.c.l.b16 %v5955
    %v6255 = vunpack.c.h.b16 %v5955
    %v6256 = vunpack.c.l.b16 %v5956
    %v6257 = vunpack.c.h.b16 %v5956
    %v6258 = vunpack.c.l.b16 %v5957
    %v6259 = vunpack.c.h.b16 %v5957
    %v6260 = vunpack.c.l.b16 %v5958
    %v6261 = vunpack.c.h.b16 %v5958
    %v6262 = vunpack.c.l.b16 %v5959
    %v6263 = vunpack.c.h.b16 %v5959
    %v6264 = vunpack.c.l.b16 %v5960
    %v6265 = vunpack.c.h.b16 %v5960
    %v6266 = vunpack.c.l.b16 %v5961
    %v6267 = vunpack.c.h.b16 %v5961
    %v6268 = vunpack.c.l.b16 %v5962
    %v6269 = vunpack.c.h.b16 %v5962
    %v6270 = vunpack.c.l.b16 %v5963
    %v6271 = vunpack.c.h.b16 %v5963
    %v6272 = vunpack.c.l.b16 %v5964
    %v6273 = vunpack.c.h.b16 %v5964
    %v6274 = vunpack.c.l.b16 %v5965
    %v6275 = vunpack.c.h.b16 %v5965
    %v6276 = vunpack.c.l.b16 %v5966
    %v6277 = vunpack.c.h.b16 %v5966
    %v6278 = vunpack.c.l.b16 %v5967
    %v6279 = vunpack.c.h.b16 %v5967
    %v6280 = vunpack.c.l.b16 %v5968
    %v6281 = vunpack.c.h.b16 %v5968
    %v6282 = vunpack.c.l.b16 %v5969
    %v6283 = vunpack.c.h.b16 %v5969
    %v6284 = vunpack.c.l.b16 %v5970
    %v6285 = vunpack.c.h.b16 %v5970
    %v6286 = vunpack.c.l.b16 %v5971
    %v6287 = vunpack.c.h.b16 %v5971
    %v6288 = vunpack.c.l.b16 %v5972
    %v6289 = vunpack.c.h.b16 %v5972
    %v6290 = vunpack.c.l.b16 %v5973
    %v6291 = vunpack.c.h.b16 %v5973
    %v6292 = vunpack.c.l.b16 %v5974
    %v6293 = vunpack.c.h.b16 %v5974
    %v6294 = vunpack.c.l.b16 %v5975
    %v6295 = vunpack.c.h.b16 %v5975
    %v6296 = vunpack.c.l.b16 %v5976
    %v6297 = vunpack.c.h.b16 %v5976
    %v6298 = vunpack.c.l.b16 %v5977
    %v6299 = vunpack.c.h.b16 %v5977
    %v6300 = vunpack.c.l.b16 %v5978
    %v6301 = vunpack.c.h.b16 %v5978
    %v6302 = vunpack.c.l.b16 %v5979
    %v6303 = vunpack.c.h.b16 %v5979
    %v6304 = vunpack.c.l.b16 %v5980
    %v6305 = vunpack.c.h.b16 %v5980
    %v6306 = vunpack.c.l.b16 %v5981
    %v6307 = vunpack.c.h.b16 %v5981
    %v6308 = vunpack.c.l.b16 %v5982
    %v6309 = vunpack.c.h.b16 %v5982
    %v6310 = vunpack.c.l.b16 %v5983
    %v6311 = vunpack.c.h.b16 %v5983
    %v6312 = vunpack.c.l.b16 %v5984
    %v6313 = vunpack.c.h.b16 %v5984
    %v6314 = vunpack.c.l.b16 %v5985
    %v6315 = vunpack.c.h.b16 %v5985
    %v6316 = vunpack.c.l.b16 %v5986
    %v6317 = vunpack.c.h.b16 %v5986
    %v6318 = vunpack.c.l.b16 %v5987
    %v6319 = vunpack.c.h.b16 %v5987
    %v6320 = vunpack.c.l.b16 %v5988
    %v6321 = vunpack.c.h.b16 %v5988
    %v6322 = vunpack.c.l.b16 %v5989
    %v6323 = vunpack.c.h.b16 %v5989
    %v6324 = vunpack.c.l.b16 %v5990
    %v6325 = vunpack.c.h.b16 %v5990
    %v6326 = vunpack.c.l.b16 %v5991
    %v6327 = vunpack.c.h.b16 %v5991
    %v6328 = vunpack.c.l.b16 %v5992
    %v6329 = vunpack.c.h.b16 %v5992
    %v6330 = vunpack.c.l.b16 %v5993
    %v6331 = vunpack.c.h.b16 %v5993
    %v6332 = vunpack.c.l.b16 %v5994
    %v6333 = vunpack.c.h.b16 %v5994
    %v6334 = vunpack.c.l.b16 %v5995
    %v6335 = vunpack.c.h.b16 %v5995
    %v6336 = vunpack.c.l.b16 %v5996
    %v6337 = vunpack.c.h.b16 %v5996
    %v6338 = vunpack.c.l.b16 %v5997
    %v6339 = vunpack.c.h.b16 %v5997
    %v6340 = vunpack.c.l.b16 %v5998
    %v6341 = vunpack.c.h.b16 %v5998
    %v6342 = vunpack.c.l.b16 %v5999
    %v6343 = vunpack.c.h.b16 %v5999
    %v6344 = vunpack.c.l.b16 %v6000
    %v6345 = vunpack.c.h.b16 %v6000
    %v6346 = vunpack.c.l.b16 %v6001
    %v6347 = vunpack.c.h.b16 %v6001
    %v6348 = vunpack.c.l.b16 %v6002
    %v6349 = vunpack.c.h.b16 %v6002
    %v6350 = vunpack.c.l.b16 %v6003
    %v6351 = vunpack.c.h.b16 %v6003
    %v6352 = vunpack.c.l.b16 %v6004
    %v6353 = vunpack.c.h.b16 %v6004
    %v6354 = vunpack.c.l.b16 %v6005
    %v6355 = vunpack.c.h.b16 %v6005
    %v6356 = vunpack.c.l.b16 %v6006
    %v6357 = vunpack.c.h.b16 %v6006
    %v6358 = vunpack.c.l.b16 %v6007
    %v6359 = vunpack.c.h.b16 %v6007
    %v6360 = vunpack.c.l.b16 %v6008
    %v6361 = vunpack.c.h.b16 %v6008
    %v6362 = vunpack.c.l.b16 %v6009
    %v6363 = vunpack.c.h.b16 %v6009
    %v6364 = vunpack.c.l.b16 %v6010
    %v6365 = vunpack.c.h.b16 %v6010
    %v6366 = vunpack.c.l.b16 %v6011
    %v6367 = vunpack.c.h.b16 %v6011
    %v6368 = vunpack.c.l.b16 %v6012
    %v6369 = vunpack.c.h.b16 %v6012
    %v6370 = vunpack.c.l.b16 %v6013
    %v6371 = vunpack.c.h.b16 %v6013
    %v6372 = vunpack.c.l.b16 %v6014
    %v6373 = vunpack.c.h.b16 %v6014
    %v6374 = vunpack.c.l.b16 %v6015
    %v6375 = vunpack.c.h.b16 %v6015
    %v6376 = vunpack.c.l.b16 %v6016
    %v6377 = vunpack.c.h.b16 %v6016
    %v6378 = vunpack.c.l.b16 %v6017
    %v6379 = vunpack.c.h.b16 %v6017
    %v6380 = vunpack.c.l.b16 %v6018
    %v6381 = vunpack.c.h.b16 %v6018
    %v6382 = vunpack.c.l.b16 %v6019
    %v6383 = vunpack.c.h.b16 %v6019
    %v6384 = vunpack.c.l.b16 %v6020
    %v6385 = vunpack.c.h.b16 %v6020
    %v6386 = vunpack.c.l.b16 %v6021
    %v6387 = vunpack.c.h.b16 %v6021
    %v6388 = vunpack.c.l.b16 %v6022
    %v6389 = vunpack.c.h.b16 %v6022
    %v6390 = vunpack.c.l.b16 %v6023
    %v6391 = vunpack.c.h.b16 %v6023
    %v6392 = vunpack.c.l.b16 %v6024
    %v6393 = vunpack.c.h.b16 %v6024
    %v6394 = vunpack.c.l.b16 %v6025
    %v6395 = vunpack.c.h.b16 %v6025
    %v6396 = vunpack.c.l.b16 %v6026
    %v6397 = vunpack.c.h.b16 %v6026
    %v6398 = vunpack.c.l.b16 %v6027
    %v6399 = vunpack.c.h.b16 %v6027
    %v6400 = vunpack.c.l.b16 %v6028
    %v6401 = vunpack.c.h.b16 %v6028
    %v6402 = vunpack.c.l.b16 %v6029
    %v6403 = vunpack.c.h.b16 %v6029
    %v6404 = vunpack.c.l.b16 %v6030
    %v6405 = vunpack.c.h.b16 %v6030
    %v6406 = vunpack.c.l.b16 %v6031
    %v6407 = vunpack.c.h.b16 %v6031
    %v6408 = vunpack.c.l.b16 %v6032
    %v6409 = vunpack.c.h.b16 %v6032
    %v6410 = vunpack.c.l.b16 %v6033
    %v6411 = vunpack.c.h.b16 %v6033
    %v6412 = vunpack.c.l.b16 %v6034
    %v6413 = vunpack.c.h.b16 %v6034
    %v6414 = vunpack.c.l.b16 %v6035
    %v6415 = vunpack.c.h.b16 %v6035
    %v6416 = vunpack.c.l.b16 %v6036
    %v6417 = vunpack.c.h.b16 %v6036
    %v6418 = vunpack.c.l.b16 %v6037
    %v6419 = vunpack.c.h.b16 %v6037
    %v6420 = vunpack.c.l.b16 %v6038
    %v6421 = vunpack.c.h.b16 %v6038
    %v6422 = vunpack.c.l.b16 %v6039
    %v6423 = vunpack.c.h.b16 %v6039
    %v6424 = vunpack.c.l.b16 %v6040
    %v6425 = vunpack.c.h.b16 %v6040
    %v6426 = vunpack.c.l.b16 %v6041
    %v6427 = vunpack.c.h.b16 %v6041
    %v6428 = vunpack.c.l.b16 %v6042
    %v6429 = vunpack.c.h.b16 %v6042
    %v6430 = vunpack.c.l.b16 %v6043
    %v6431 = vunpack.c.h.b16 %v6043
    %v6432 = vunpack.c.l.b16 %v6044
    %v6433 = vunpack.c.h.b16 %v6044
    %v6434 = vunpack.c.l.b16 %v6045
    %v6435 = vunpack.c.h.b16 %v6045
    %v6436 = vunpack.c.l.b16 %v6046
    %v6437 = vunpack.c.h.b16 %v6046
    %v6438 = vunpack.c.l.b16 %v6047
    %v6439 = vunpack.c.h.b16 %v6047
    %v6440 = vunpack.c.l.b16 %v6048
    %v6441 = vunpack.c.h.b16 %v6048
    %v6442 = vunpack.c.l.b16 %v6049
    %v6443 = vunpack.c.h.b16 %v6049
    %v6444 = vunpack.c.l.b16 %v6050
    %v6445 = vunpack.c.h.b16 %v6050
    %v6446 = vunpack.c.l.b16 %v6051
    %v6447 = vunpack.c.h.b16 %v6051
    %v6448 = vpack.c.b16 %v6194, %v6192
    %v6449 = vpack.c.b16 %v6195, %v6193
    %v6450 = vpack.c.b16 %v6198, %v6196
    %v6451 = vpack.c.b16 %v6199, %v6197
    %v6452 = vpack.c.b16 %v6202, %v6200
    %v6453 = vpack.c.b16 %v6203, %v6201
    %v6454 = vpack.c.b16 %v6206, %v6204
    %v6455 = vpack.c.b16 %v6207, %v6205
    %v6456 = vpack.c.b16 %v6210, %v6208
    %v6457 = vpack.c.b16 %v6211, %v6209
    %v6458 = vpack.c.b16 %v6214, %v6212
    %v6459 = vpack.c.b16 %v6215, %v6213
    %v6460 = vpack.c.b16 %v6218, %v6216
    %v6461 = vpack.c.b16 %v6219, %v6217
    %v6462 = vpack.c.b16 %v6222, %v6220
    %v6463 = vpack.c.b16 %v6223, %v6221
    %v6464 = vpack.c.b16 %v6226, %v6224
    %v6465 = vpack.c.b16 %v6227, %v6225
    %v6466 = vpack.c.b16 %v6230, %v6228
    %v6467 = vpack.c.b16 %v6231, %v6229
    %v6468 = vpack.c.b16 %v6234, %v6232
    %v6469 = vpack.c.b16 %v6235, %v6233
    %v6470 = vpack.c.b16 %v6238, %v6236
    %v6471 = vpack.c.b16 %v6239, %v6237
    %v6472 = vpack.c.b16 %v6242, %v6240
    %v6473 = vpack.c.b16 %v6243, %v6241
    %v6474 = vpack.c.b16 %v6246, %v6244
    %v6475 = vpack.c.b16 %v6247, %v6245
    %v6476 = vpack.c.b16 %v6250, %v6248
    %v6477 = vpack.c.b16 %v6251, %v6249
    %v6478 = vpack.c.b16 %v6254, %v6252
    %v6479 = vpack.c.b16 %v6255, %v6253
    %v6480 = vpack.c.b16 %v6258, %v6256
    %v6481 = vpack.c.b16 %v6259, %v6257
    %v6482 = vpack.c.b16 %v6262, %v6260
    %v6483 = vpack.c.b16 %v6263, %v6261
    %v6484 = vpack.c.b16 %v6266, %v6264
    %v6485 = vpack.c.b16 %v6267, %v6265
    %v6486 = vpack.c.b16 %v6270, %v6268
    %v6487 = vpack.c.b16 %v6271, %v6269
    %v6488 = vpack.c.b16 %v6274, %v6272
    %v6489 = vpack.c.b16 %v6275, %v6273
    %v6490 = vpack.c.b16 %v6278, %v6276
    %v6491 = vpack.c.b16 %v6279, %v6277
    %v6492 = vpack.c.b16 %v6282, %v6280
    %v6493 = vpack.c.b16 %v6283, %v6281
    %v6494 = vpack.c.b16 %v6286, %v6284
    %v6495 = vpack.c.b16 %v6287, %v6285
    %v6496 = vpack.c.b16 %v6290, %v6288
    %v6497 = vpack.c.b16 %v6291, %v6289
    %v6498 = vpack.c.b16 %v6294, %v6292
    %v6499 = vpack.c.b16 %v6295, %v6293
    %v6500 = vpack.c.b16 %v6298, %v6296
    %v6501 = vpack.c.b16 %v6299, %v6297
    %v6502 = vpack.c.b16 %v6302, %v6300
    %v6503 = vpack.c.b16 %v6303, %v6301
    %v6504 = vpack.c.b16 %v6306, %v6304
    %v6505 = vpack.c.b16 %v6307, %v6305
    %v6506 = vpack.c.b16 %v6310, %v6308
    %v6507 = vpack.c.b16 %v6311, %v6309
    %v6508 = vpack.c.b16 %v6314, %v6312
    %v6509 = vpack.c.b16 %v6315, %v6313
    %v6510 = vpack.c.b16 %v6318, %v6316
    %v6511 = vpack.c.b16 %v6319, %v6317
    %v6512 = vpack.c.b16 %v6322, %v6320
    %v6513 = vpack.c.b16 %v6323, %v6321
    %v6514 = vpack.c.b16 %v6326, %v6324
    %v6515 = vpack.c.b16 %v6327, %v6325
    %v6516 = vpack.c.b16 %v6330, %v6328
    %v6517 = vpack.c.b16 %v6331, %v6329
    %v6518 = vpack.c.b16 %v6334, %v6332
    %v6519 = vpack.c.b16 %v6335, %v6333
    %v6520 = vpack.c.b16 %v6338, %v6336
    %v6521 = vpack.c.b16 %v6339, %v6337
    %v6522 = vpack.c.b16 %v6342, %v6340
    %v6523 = vpack.c.b16 %v6343, %v6341
    %v6524 = vpack.c.b16 %v6346, %v6344
    %v6525 = vpack.c.b16 %v6347, %v6345
    %v6526 = vpack.c.b16 %v6350, %v6348
    %v6527 = vpack.c.b16 %v6351, %v6349
    %v6528 = vpack.c.b16 %v6354, %v6352
    %v6529 = vpack.c.b16 %v6355, %v6353
    %v6530 = vpack.c.b16 %v6358, %v6356
    %v6531 = vpack.c.b16 %v6359, %v6357
    %v6532 = vpack.c.b16 %v6362, %v6360
    %v6533 = vpack.c.b16 %v6363, %v6361
    %v6534 = vpack.c.b16 %v6366, %v6364
    %v6535 = vpack.c.b16 %v6367, %v6365
    %v6536 = vpack.c.b16 %v6370, %v6368
    %v6537 = vpack.c.b16 %v6371, %v6369
    %v6538 = vpack.c.b16 %v6374, %v6372
    %v6539 = vpack.c.b16 %v6375, %v6373
    %v6540 = vpack.c.b16 %v6378, %v6376
    %v6541 = vpack.c.b16 %v6379, %v6377
    %v6542 = vpack.c.b16 %v6382, %v6380
    %v6543 = vpack.c.b16 %v6383, %v6381
    %v6544 = vpack.c.b16 %v6386, %v6384
    %v6545 = vpack.c.b16 %v6387, %v6385
    %v6546 = vpack.c.b16 %v6390, %v6388
    %v6547 = vpack.c.b16 %v6391, %v6389
    %v6548 = vpack.c.b16 %v6394, %v6392
    %v6549 = vpack.c.b16 %v6395, %v6393
    %v6550 = vpack.c.b16 %v6398, %v6396
    %v6551 = vpack.c.b16 %v6399, %v6397
    %v6552 = vpack.c.b16 %v6402, %v6400
    %v6553 = vpack.c.b16 %v6403, %v6401
    %v6554 = vpack.c.b16 %v6406, %v6404
    %v6555 = vpack.c.b16 %v6407, %v6405
    %v6556 = vpack.c.b16 %v6410, %v6408
    %v6557 = vpack.c.b16 %v6411, %v6409
    %v6558 = vpack.c.b16 %v6414, %v6412
    %v6559 = vpack.c.b16 %v6415, %v6413
    %v6560 = vpack.c.b16 %v6418, %v6416
    %v6561 = vpack.c.b16 %v6419, %v6417
    %v6562 = vpack.c.b16 %v6422, %v6420
    %v6563 = vpack.c.b16 %v6423, %v6421
    %v6564 = vpack.c.b16 %v6426, %v6424
    %v6565 = vpack.c.b16 %v6427, %v6425
    %v6566 = vpack.c.b16 %v6430, %v6428
    %v6567 = vpack.c.b16 %v6431, %v6429
    %v6568 = vpack.c.b16 %v6434, %v6432
    %v6569 = vpack.c.b16 %v6435, %v6433
    %v6570 = vpack.c.b16 %v6438, %v6436
    %v6571 = vpack.c.b16 %v6439, %v6437
    %v6572 = vpack.c.b16 %v6442, %v6440
    %v6573 = vpack.c.b16 %v6443, %v6441
    %v6574 = vpack.c.b16 %v6446, %v6444
    %v6575 = vpack.c.b16 %v6447, %v6445
    %6704 = vmatprep.subr.bf16.mxu0 %v6449
    %6705 = vmatpush1.bf16.msra.mxu0 %v6448
    %6706 = vmatprep.subr.bf16.mxu0 %v6451
    %6707 = vmatpush1.bf16.msra.mxu0 %v6450
    %6708 = vmatprep.subr.bf16.mxu0 %v6453
    %6709 = vmatpush1.bf16.msra.mxu0 %v6452
    %6710 = vmatprep.subr.bf16.mxu0 %v6455
    %6711 = vmatpush1.bf16.msra.mxu0 %v6454
    %6712 = vmatprep.subr.bf16.mxu0 %v6457
    %6713 = vmatpush1.bf16.msra.mxu0 %v6456
    %6714 = vmatprep.subr.bf16.mxu0 %v6459
    %6715 = vmatpush1.bf16.msra.mxu0 %v6458
    %6716 = vmatprep.subr.bf16.mxu0 %v6461
    %6717 = vmatpush1.bf16.msra.mxu0 %v6460
    %6718 = vmatprep.subr.bf16.mxu0 %v6463
    %6719 = vmatpush1.bf16.msra.mxu0 %v6462
    %6720 = vmatprep.subr.bf16.mxu0 %v6465
    %6721 = vmatpush1.bf16.msra.mxu0 %v6464
    %6722 = vmatprep.subr.bf16.mxu0 %v6467
    %6723 = vmatpush1.bf16.msra.mxu0 %v6466
    %6724 = vmatprep.subr.bf16.mxu0 %v6469
    %6725 = vmatpush1.bf16.msra.mxu0 %v6468
    %6726 = vmatprep.subr.bf16.mxu0 %v6471
    %6727 = vmatpush1.bf16.msra.mxu0 %v6470
    %6728 = vmatprep.subr.bf16.mxu0 %v6473
    %6729 = vmatpush1.bf16.msra.mxu0 %v6472
    %6730 = vmatprep.subr.bf16.mxu0 %v6475
    %6731 = vmatpush1.bf16.msra.mxu0 %v6474
    %6732 = vmatprep.subr.bf16.mxu0 %v6477
    %6733 = vmatpush1.bf16.msra.mxu0 %v6476
    %6734 = vmatprep.subr.bf16.mxu0 %v6479
    %6735 = vmatpush1.bf16.msra.mxu0 %v6478
    %6736 = vmatprep.mubr.bf16.mxu0 %v5917
    %6737 = vmatmul.mubr.bf16.gmra.mrb[0].mxu0 %v5916
    %v6738 = vpop.f32.mrb[0].mxu0
    %v6739 = vadd.f32 %v6057, %v6738
    %v6740 = vpop.f32.mrb[0].mxu0
    %v6741 = vadd.f32 %v6061, %v6740
    %v6742 = vpop.f32.mrb[0].mxu0
    %v6743 = vpop.f32.mrb[0].mxu0
    %6744 = vdwg.mxu0
    %6745 = vmatprep.subr.bf16.mxu0 %v6481
    %6746 = vmatpush1.bf16.msra.mxu0 %v6480
    %6747 = vmatprep.subr.bf16.mxu0 %v6483
    %6748 = vmatpush1.bf16.msra.mxu0 %v6482
    %6749 = vmatprep.subr.bf16.mxu0 %v6485
    %6750 = vmatpush1.bf16.msra.mxu0 %v6484
    %6751 = vmatprep.subr.bf16.mxu0 %v6487
    %6752 = vmatpush1.bf16.msra.mxu0 %v6486
    %6753 = vmatprep.subr.bf16.mxu0 %v6489
    %6754 = vmatpush1.bf16.msra.mxu0 %v6488
    %6755 = vmatprep.subr.bf16.mxu0 %v6491
    %6756 = vmatpush1.bf16.msra.mxu0 %v6490
    %6757 = vmatprep.subr.bf16.mxu0 %v6493
    %6758 = vmatpush1.bf16.msra.mxu0 %v6492
    %6759 = vmatprep.subr.bf16.mxu0 %v6495
    %6760 = vmatpush1.bf16.msra.mxu0 %v6494
    %6761 = vmatprep.subr.bf16.mxu0 %v6497
    %6762 = vmatpush1.bf16.msra.mxu0 %v6496
    %6763 = vmatprep.subr.bf16.mxu0 %v6499
    %6764 = vmatpush1.bf16.msra.mxu0 %v6498
    %6765 = vmatprep.subr.bf16.mxu0 %v6501
    %6766 = vmatpush1.bf16.msra.mxu0 %v6500
    %6767 = vmatprep.subr.bf16.mxu0 %v6503
    %6768 = vmatpush1.bf16.msra.mxu0 %v6502
    %6769 = vmatprep.subr.bf16.mxu0 %v6505
    %6770 = vmatpush1.bf16.msra.mxu0 %v6504
    %6771 = vmatprep.subr.bf16.mxu0 %v6507
    %6772 = vmatpush1.bf16.msra.mxu0 %v6506
    %6773 = vmatprep.subr.bf16.mxu0 %v6509
    %6774 = vmatpush1.bf16.msra.mxu0 %v6508
    %6775 = vmatprep.subr.bf16.mxu0 %v6511
    %6776 = vmatpush1.bf16.msra.mxu0 %v6510
    %6777 = vmatprep.mubr.bf16.mxu0 %v5919
    %6778 = vmatmul.mubr.bf16.gmra.mrb[0].mxu0 %v5918
    %v6779 = vpop.f32.mrb[0].mxu0
    %v6780 = vadd.f32 %v6739, %v6779
    %v6781 = vpop.f32.mrb[0].mxu0
    %v6782 = vadd.f32 %v6741, %v6781
    %v6783 = vpop.f32.mrb[0].mxu0
    %v6784 = vpop.f32.mrb[0].mxu0
    %6785 = vdwg.mxu0
    %6786 = vmatprep.subr.bf16.mxu0 %v6513
    %6787 = vmatpush1.bf16.msra.mxu0 %v6512
    %6788 = vmatprep.subr.bf16.mxu0 %v6515
    %6789 = vmatpush1.bf16.msra.mxu0 %v6514
    %6790 = vmatprep.subr.bf16.mxu0 %v6517
    %6791 = vmatpush1.bf16.msra.mxu0 %v6516
    %6792 = vmatprep.subr.bf16.mxu0 %v6519
    %6793 = vmatpush1.bf16.msra.mxu0 %v6518
    %6794 = vmatprep.subr.bf16.mxu0 %v6521
    %6795 = vmatpush1.bf16.msra.mxu0 %v6520
    %6796 = vmatprep.subr.bf16.mxu0 %v6523
    %6797 = vmatpush1.bf16.msra.mxu0 %v6522
    %6798 = vmatprep.subr.bf16.mxu0 %v6525
    %6799 = vmatpush1.bf16.msra.mxu0 %v6524
    %6800 = vmatprep.subr.bf16.mxu0 %v6527
    %6801 = vmatpush1.bf16.msra.mxu0 %v6526
    %6802 = vmatprep.subr.bf16.mxu0 %v6529
    %6803 = vmatpush1.bf16.msra.mxu0 %v6528
    %6804 = vmatprep.subr.bf16.mxu0 %v6531
    %6805 = vmatpush1.bf16.msra.mxu0 %v6530
    %6806 = vmatprep.subr.bf16.mxu0 %v6533
    %6807 = vmatpush1.bf16.msra.mxu0 %v6532
    %6808 = vmatprep.subr.bf16.mxu0 %v6535
    %6809 = vmatpush1.bf16.msra.mxu0 %v6534
    %6810 = vmatprep.subr.bf16.mxu0 %v6537
    %6811 = vmatpush1.bf16.msra.mxu0 %v6536
    %6812 = vmatprep.subr.bf16.mxu0 %v6539
    %6813 = vmatpush1.bf16.msra.mxu0 %v6538
    %6814 = vmatprep.subr.bf16.mxu0 %v6541
    %6815 = vmatpush1.bf16.msra.mxu0 %v6540
    %6816 = vmatprep.subr.bf16.mxu0 %v6543
    %6817 = vmatpush1.bf16.msra.mxu0 %v6542
    %6818 = vmatprep.mubr.bf16.mxu0 %v5921
    %6819 = vmatmul.mubr.bf16.gmra.mrb[0].mxu0 %v5920
    %v6820 = vpop.f32.mrb[0].mxu0
    %v6821 = vadd.f32 %v6780, %v6820
    %v6822 = vpop.f32.mrb[0].mxu0
    %v6823 = vadd.f32 %v6782, %v6822
    %v6824 = vpop.f32.mrb[0].mxu0
    %v6825 = vpop.f32.mrb[0].mxu0
    %6826 = vdwg.mxu0
    %6827 = vmatprep.subr.bf16.mxu0 %v6545
    %6828 = vmatpush1.bf16.msra.mxu0 %v6544
    %6829 = vmatprep.subr.bf16.mxu0 %v6547
    %6830 = vmatpush1.bf16.msra.mxu0 %v6546
    %6831 = vmatprep.subr.bf16.mxu0 %v6549
    %6832 = vmatpush1.bf16.msra.mxu0 %v6548
    %6833 = vmatprep.subr.bf16.mxu0 %v6551
    %6834 = vmatpush1.bf16.msra.mxu0 %v6550
    %6835 = vmatprep.subr.bf16.mxu0 %v6553
    %6836 = vmatpush1.bf16.msra.mxu0 %v6552
    %6837 = vmatprep.subr.bf16.mxu0 %v6555
    %6838 = vmatpush1.bf16.msra.mxu0 %v6554
    %6839 = vmatprep.subr.bf16.mxu0 %v6557
    %6840 = vmatpush1.bf16.msra.mxu0 %v6556
    %6841 = vmatprep.subr.bf16.mxu0 %v6559
    %6842 = vmatpush1.bf16.msra.mxu0 %v6558
    %6843 = vmatprep.subr.bf16.mxu0 %v6561
    %6844 = vmatpush1.bf16.msra.mxu0 %v6560
    %6845 = vmatprep.subr.bf16.mxu0 %v6563
    %6846 = vmatpush1.bf16.msra.mxu0 %v6562
    %6847 = vmatprep.subr.bf16.mxu0 %v6565
    %6848 = vmatpush1.bf16.msra.mxu0 %v6564
    %6849 = vmatprep.subr.bf16.mxu0 %v6567
    %6850 = vmatpush1.bf16.msra.mxu0 %v6566
    %6851 = vmatprep.subr.bf16.mxu0 %v6569
    %6852 = vmatpush1.bf16.msra.mxu0 %v6568
    %6853 = vmatprep.subr.bf16.mxu0 %v6571
    %6854 = vmatpush1.bf16.msra.mxu0 %v6570
    %6855 = vmatprep.subr.bf16.mxu0 %v6573
    %6856 = vmatpush1.bf16.msra.mxu0 %v6572
    %6857 = vmatprep.subr.bf16.mxu0 %v6575
    %6858 = vmatpush1.bf16.msra.mxu0 %v6574
    %6859 = vmatprep.mubr.bf16.mxu0 %v5923
    %6860 = vmatmul.mubr.bf16.gmra.mrb[0].mxu0 %v5922
    %v6861 = vpop.f32.mrb[0].mxu0
    %v6862 = vadd.f32 %v6821, %v6861
    %v6863 = vpop.f32.mrb[0].mxu0
    %v6864 = vadd.f32 %v6823, %v6863
    %v6865 = vpop.f32.mrb[0].mxu0
    %v6866 = vpop.f32.mrb[0].mxu0
    %6867 = vdwg.mxu0
    %v6868 = vxor.u32 %v6862, 2147483648
    %v6869 = vxor.u32 %v6864, 2147483648
    %v6870 = vmul.f32 %v6868, 1.442695
    %v6871 = vpow.pop %v6870
    %v6872 = vmul.f32 %v6869, 1.442695
    %v6873 = vpow.pop %v6872
    %v6874 = vadd.f32 %v6871, 1.0
    %v6875 = vadd.f32 %v6873, 1.0
    %v6876 = vrcp.pop %v6874
    %v6877 = vmul.f32 1.0, %v6876
    %v6878 = vrcp.pop %v6875
    %v6879 = vmul.f32 1.0, %v6878
    %v6882 = vcombine.low %v6877, %v6879
    %v6884 = vunpack.c.l.s4 1983009808
    %v6885 = vunpack.c.0.s8 %v6884
    %v6886 = vlaneseq
    %v6887 = vshrl.u32 %v6886, 7
    %v6888 = vsub.s32 %v6885, %v6887
    %v6889 = vrot.slane %v6882, %v6888
    %6891 = vst [vmem:[%s13] sm:$0xf] %v6889
    // Predicated region
    $region78: #{autoencoder_forward.1} parent=1 // pred_check
      _
    $region79: #{autoencoder_forward.1} parent=1 // pred_check_branch
      %6893 = sbr.rel (0) target = $region81
    $region80: #{autoencoder_forward.1} parent=1 // pred_region
      _
    $region81: #{autoencoder_forward.1} parent=1 // pred_fallthru
      _
    // Predicated region
    $region82: #{autoencoder_forward.1} parent=1 // pred_check
      _
    $region83: #{autoencoder_forward.1} parent=1 // pred_check_branch
      %6895 = sbr.rel (0) target = $region85
    $region84: #{autoencoder_forward.1} parent=1 // pred_region
      _
    $region85: #{autoencoder_forward.1} parent=1 // pred_fallthru
      _
    %6896 = vsyncpa [#allocation3], 1
    %6897 = vsyncpa [#allocation5], 1
    %6898 = vsyncpa [#allocation8], 1
    %6899 = vsyncpa [#allocation11], 1

</llo_original>
